<compile_context>
chip_gen: v6e
topology: v6e:2x2x1
jax: 0.10.0
libtpu: 0.0.40
codegen_flags: <defaults>
</compile_context>

<pallas_src>
import functools

import jax
import jax.numpy as jnp
from jax.experimental import pallas as pl
from jax.experimental.pallas import tpu as pltpu


# ----------------------------------------------------------------------------
# Fused decoder-layer kernel (one batch element per grid step)
# ----------------------------------------------------------------------------
def decoder_kernel(
    x_ref, enc_ref, tgt_bias_ref, src_bias_ref,
    sa_wq, sa_bq, sa_wk, sa_bk, sa_wv, sa_bv, sa_wo, sa_bo,
    ca_wq, ca_bq, ca_wk, ca_bk, ca_wv, ca_bv, ca_wo, ca_bo,
    w1_ref, b1_ref, w2_ref, b2_ref,
    gamma_ref, beta_ref,
    out_ref, *, n_head):
    x = x_ref[0]                     # (T, D)
    enc = enc_ref[0]                 # (S, D)
    tgt_bias = tgt_bias_ref[0]       # (T, T) additive mask bias (0 / -1e9)
    src_bias = src_bias_ref[0]       # (T, S)
    gamma = gamma_ref[...]           # (1, D)
    beta = beta_ref[...]             # (1, D)

    def attention(xq, xkv, bias, wq, bq, wk, bk, wv, bv, wo, bo):
        # wq/wk/wv: (H, D, dk) refs, wo: (H, dk, D), bq/bk/bv: (H, 1, dk), bo: (1, D).
        # Scale 1/sqrt(dk) is already folded into wq/bq.
        out = None
        for h in range(n_head):      # small static loop; full-tile 2D MXU work only
            qh = jnp.dot(xq, wq[h], preferred_element_type=jnp.float32) + bq[h]
            kh = jnp.dot(xkv, wk[h], preferred_element_type=jnp.float32) + bk[h]
            vh = jnp.dot(xkv, wv[h], preferred_element_type=jnp.float32) + bv[h]
            # scores = qh @ kh^T via dot_general 'nt' form (no explicit transpose)
            s = jax.lax.dot_general(qh, kh, (((1,), (1,)), ((), ())),
                                    preferred_element_type=jnp.float32) + bias
            p = jnp.exp(s - jnp.max(s, axis=-1, keepdims=True))
            p = p * pl.reciprocal(jnp.sum(p, axis=-1, keepdims=True), approx=True)
            ctx = jnp.dot(p, vh, preferred_element_type=jnp.float32)       # (T, dk)
            head_out = jnp.dot(ctx, wo[h], preferred_element_type=jnp.float32)
            out = head_out if out is None else out + head_out
        return out + bo[...]

    def add_norm(y, resid):          # LayerNorm(y + resid), eps = 1e-5 (PyTorch default)
        z = y + resid
        mean = jnp.mean(z, axis=-1, keepdims=True)
        c = z - mean
        var = jnp.mean(c * c, axis=-1, keepdims=True)
        return c * jax.lax.rsqrt(var + 1e-5) * gamma + beta

    # Self-attention + add&norm
    o1 = add_norm(attention(x, x, tgt_bias,
                            sa_wq, sa_bq, sa_wk, sa_bk, sa_wv, sa_bv, sa_wo, sa_bo), x)
    # Cross-attention + add&norm
    o2 = add_norm(attention(o1, enc, src_bias,
                            ca_wq, ca_bq, ca_wk, ca_bk, ca_wv, ca_bv, ca_wo, ca_bo), o1)
    # Position-wise FFN + add&norm
    hdn = jnp.maximum(
        jnp.dot(o2, w1_ref[...], preferred_element_type=jnp.float32) + b1_ref[...], 0.0)
    ff = jnp.dot(hdn, w2_ref[...], preferred_element_type=jnp.float32) + b2_ref[...]
    out_ref[0] = add_norm(ff, o2).astype(out_ref.dtype)


# ----------------------------------------------------------------------------
# Wrapper: parameter prep (head split, scale/mask folding) + one pallas_call
# ----------------------------------------------------------------------------
def _full_spec(shape):
    nd = len(shape)
    return pl.BlockSpec(shape, lambda b, _nd=nd: (0,) * _nd)


def _prep_attn(params, n_head, D):
    wq, bq, wk, bk, wv, bv, wo, bo = params
    dk = D // n_head
    scale = float(dk) ** -0.5
    # Column j of Wq/Wk/Wv belongs to head j//dk -> (H, D, dk) after reshape+transpose.
    wq_s = (wq * scale).reshape(D, n_head, dk).transpose(1, 0, 2)
    bq_s = (bq * scale).reshape(1, n_head, dk).transpose(1, 0, 2)
    wk_s = wk.reshape(D, n_head, dk).transpose(1, 0, 2)
    bk_s = bk.reshape(1, n_head, dk).transpose(1, 0, 2)
    wv_s = wv.reshape(D, n_head, dk).transpose(1, 0, 2)
    bv_s = bv.reshape(1, n_head, dk).transpose(1, 0, 2)
    # Row i of Wo is fed by head i//dk -> (H, dk, D).
    wo_s = wo.reshape(n_head, dk, D)
    return wq_s, bq_s, wk_s, bk_s, wv_s, bv_s, wo_s, bo


def decoder_forward(x, enc_out, src_mask, tgt_mask, params, n_head):
    """Mirrors Decoder.forward (dropout = identity at eval)."""
    B, T, D = x.shape
    S = enc_out.shape[1]

    sa = _prep_attn(params["self_attn"], n_head, D)
    ca = _prep_attn(params["cross_attn"], n_head, D)
    w1, b1, w2, b2 = params["ffn"]
    gamma, beta = params["ln_gamma"], params["ln_beta"]

    # Float {0,1} masks -> additive bias (0 keep / -1e9 masked), computed once.
    tgt_bias = (tgt_mask.astype(jnp.float32) - 1.0) * 1e9
    src_bias = (src_mask.astype(jnp.float32) - 1.0) * 1e9

    kernel = functools.partial(decoder_kernel, n_head=n_head)

    in_specs = [
        pl.BlockSpec((1, T, D), lambda b: (b, 0, 0)),   # x
        pl.BlockSpec((1, S, D), lambda b: (b, 0, 0)),   # enc_out
        pl.BlockSpec((1, T, T), lambda b: (b, 0, 0)),   # tgt additive bias
        pl.BlockSpec((1, T, S), lambda b: (b, 0, 0)),   # src additive bias
    ]
    in_specs += [_full_spec(a.shape) for a in sa]
    in_specs += [_full_spec(a.shape) for a in ca]
    in_specs += [_full_spec(w1.shape), _full_spec(b1.shape),
                 _full_spec(w2.shape), _full_spec(b2.shape),
                 _full_spec(gamma.shape), _full_spec(beta.shape)]

    return pl.pallas_call(
        kernel,
        out_shape=jax.ShapeDtypeStruct((B, T, D), x.dtype),
        grid=(B,),
        in_specs=in_specs,
        out_specs=pl.BlockSpec((1, T, D), lambda b: (b, 0, 0)),
        compiler_params=pltpu.CompilerParams(dimension_semantics=("parallel",)),
    )(x, enc_out, tgt_bias, src_bias, *sa, *ca, w1, b1, w2, b2, gamma, beta)


# ----------------------------------------------------------------------------
# Pure-JAX reference (correctness check)
# ----------------------------------------------------------------------------
def _ref_mha(xq, xkv, mask, params, n_head):
    wq, bq, wk, bk, wv, bv, wo, bo = params
    B, T, D = xq.shape
    S = xkv.shape[1]
    dk = D // n_head
    q = (xq @ wq + bq[0]).reshape(B, T, n_head, dk).transpose(0, 2, 1, 3)
    k = (xkv @ wk + bk[0]).reshape(B, S, n_head, dk).transpose(0, 2, 1, 3)
    v = (xkv @ wv + bv[0]).reshape(B, S, n_head, dk).transpose(0, 2, 1, 3)
    scores = jnp.einsum("bhtd,bhsd->bhts", q, k) / jnp.sqrt(jnp.float32(dk))
    scores = jnp.where(mask[:, None, :, :] == 0, -1e9, scores)
    p = jax.nn.softmax(scores, axis=-1)
    o = jnp.einsum("bhts,bhsd->bhtd", p, v).transpose(0, 2, 1, 3).reshape(B, T, D)
    return o @ wo + bo[0]


def _ref_norm(z, gamma, beta):
    mean = jnp.mean(z, axis=-1, keepdims=True)
    var = jnp.mean((z - mean) ** 2, axis=-1, keepdims=True)
    return (z - mean) * jax.lax.rsqrt(var + 1e-5) * gamma[0] + beta[0]


def _ref_decoder(x, enc_out, src_mask, tgt_mask, params, n_head):
    g, b = params["ln_gamma"], params["ln_beta"]
    o1 = _ref_norm(_ref_mha(x, x, tgt_mask, params["self_attn"], n_head) + x, g, b)
    o2 = _ref_norm(_ref_mha(o1, enc_out, src_mask, params["cross_attn"], n_head) + o1, g, b)
    w1, b1, w2, b2 = params["ffn"]
    f = jnp.maximum(o2 @ w1 + b1[0], 0.0) @ w2 + b2[0]
    return _ref_norm(f + o2, g, b)


# ----------------------------------------------------------------------------
# Main
# ----------------------------------------------------------------------------
if __name__ == "__main__":
    B, T, S, D, H, F = 2, 8, 8, 32, 4, 64   # d_embedding=32, n_head=4, d_ff=64

    key = jax.random.PRNGKey(0)
    ks = jax.random.split(key, 16)

    def lin(kw, shape, scale=0.05):
        return (scale * jax.random.normal(kw, shape)).astype(jnp.float32)

    params = {
        "self_attn": (lin(ks[0], (D, D)), lin(ks[1], (1, D)),
                      lin(ks[2], (D, D)), lin(ks[3], (1, D)),
                      lin(ks[4], (D, D)), lin(ks[5], (1, D)),
                      lin(ks[6], (D, D)), lin(ks[7], (1, D))),
        "cross_attn": (lin(ks[8], (D, D)), lin(ks[9], (1, D)),
                       lin(ks[10], (D, D)), lin(ks[11], (1, D)),
                       lin(ks[12], (D, D)), lin(ks[13], (1, D)),
                       lin(ks[14], (D, D)), lin(ks[15], (1, D))),
        "ffn": (lin(jax.random.fold_in(key, 100), (D, F)),
                jnp.zeros((1, F), jnp.float32),
                lin(jax.random.fold_in(key, 101), (F, D)),
                jnp.zeros((1, D), jnp.float32)),
        "ln_gamma": jnp.ones((1, D), jnp.float32),
        "ln_beta": jnp.zeros((1, D), jnp.float32),
    }

    x = jax.random.normal(jax.random.fold_in(key, 1), (B, T, D), jnp.float32)
    enc_out = jax.random.normal(jax.random.fold_in(key, 2), (B, S, D), jnp.float32)

    # tgt_mask: causal; src_mask: padding mask (second batch has last 2 enc
    # positions masked), as float [B, T, S] (1 = keep, 0 = mask).
    tgt_mask = jnp.broadcast_to(jnp.tril(jnp.ones((T, T), jnp.float32)), (B, T, T))
    src_valid = jnp.array([[1.0] * S, [1.0] * (S - 2) + [0.0] * 2], jnp.float32)
    src_mask = jnp.broadcast_to(src_valid[:, None, :], (B, T, S))

    out = decoder_forward(x, enc_out, src_mask, tgt_mask, params, n_head=H)
    out = jax.block_until_ready(out)

    ref = _ref_decoder(x, enc_out, src_mask, tgt_mask, params, n_head=H)
    assert out.shape == (B, T, D)
    # Tolerance slightly relaxed vs exact f32 because the softmax denominator
    # uses the hardware approximate reciprocal (EUP), per perf guidance.
    assert jnp.allclose(out, ref, atol=2e-3, rtol=2e-3), float(jnp.max(jnp.abs(out - ref)))

    print("KERNEL_OK")
</pallas_src>

<mosaic_0001>
module attributes {stable_mosaic.version = 11 : i64} {
  func.func @decoder_kernel(%arg0: i32, %arg1: memref<1x8x32xf32, #tpu.memory_space<vmem>>, %arg2: memref<1x8x32xf32, #tpu.memory_space<vmem>>, %arg3: memref<1x8x8xf32, #tpu.memory_space<vmem>>, %arg4: memref<1x8x8xf32, #tpu.memory_space<vmem>>, %arg5: memref<4x32x8xf32, #tpu.memory_space<vmem>>, %arg6: memref<4x1x8xf32, #tpu.memory_space<vmem>>, %arg7: memref<4x32x8xf32, #tpu.memory_space<vmem>>, %arg8: memref<4x1x8xf32, #tpu.memory_space<vmem>>, %arg9: memref<4x32x8xf32, #tpu.memory_space<vmem>>, %arg10: memref<4x1x8xf32, #tpu.memory_space<vmem>>, %arg11: memref<4x8x32xf32, #tpu.memory_space<vmem>>, %arg12: memref<1x32xf32, #tpu.memory_space<vmem>>, %arg13: memref<4x32x8xf32, #tpu.memory_space<vmem>>, %arg14: memref<4x1x8xf32, #tpu.memory_space<vmem>>, %arg15: memref<4x32x8xf32, #tpu.memory_space<vmem>>, %arg16: memref<4x1x8xf32, #tpu.memory_space<vmem>>, %arg17: memref<4x32x8xf32, #tpu.memory_space<vmem>>, %arg18: memref<4x1x8xf32, #tpu.memory_space<vmem>>, %arg19: memref<4x8x32xf32, #tpu.memory_space<vmem>>, %arg20: memref<1x32xf32, #tpu.memory_space<vmem>>, %arg21: memref<32x64xf32, #tpu.memory_space<vmem>>, %arg22: memref<1x64xf32, #tpu.memory_space<vmem>>, %arg23: memref<64x32xf32, #tpu.memory_space<vmem>>, %arg24: memref<1x32xf32, #tpu.memory_space<vmem>>, %arg25: memref<1x32xf32, #tpu.memory_space<vmem>>, %arg26: memref<1x32xf32, #tpu.memory_space<vmem>>, %arg27: memref<1x8x32xf32, #tpu.memory_space<vmem>>) attributes {dimension_semantics = [#tpu.dimension_semantics<parallel>], iteration_bounds = array<i64: 2>, scalar_prefetch = 0 : i64, scratch_operands = 0 : i64, tpu.core_type = #tpu.core_type<tc>, window_params = [{transform_indices = @transform_0, window_bounds = array<i64: 1, 8, 32>}, {transform_indices = @transform_1, window_bounds = array<i64: 1, 8, 32>}, {transform_indices = @transform_2, window_bounds = array<i64: 1, 8, 8>}, {transform_indices = @transform_3, window_bounds = array<i64: 1, 8, 8>}, {pipeline_mode = #tpu.pipeline_mode<synchronous>, transform_indices = @transform_4, window_bounds = array<i64: 4, 32, 8>}, {pipeline_mode = #tpu.pipeline_mode<synchronous>, transform_indices = @transform_5, window_bounds = array<i64: 4, 1, 8>}, {pipeline_mode = #tpu.pipeline_mode<synchronous>, transform_indices = @transform_6, window_bounds = array<i64: 4, 32, 8>}, {pipeline_mode = #tpu.pipeline_mode<synchronous>, transform_indices = @transform_7, window_bounds = array<i64: 4, 1, 8>}, {pipeline_mode = #tpu.pipeline_mode<synchronous>, transform_indices = @transform_8, window_bounds = array<i64: 4, 32, 8>}, {pipeline_mode = #tpu.pipeline_mode<synchronous>, transform_indices = @transform_9, window_bounds = array<i64: 4, 1, 8>}, {pipeline_mode = #tpu.pipeline_mode<synchronous>, transform_indices = @transform_10, window_bounds = array<i64: 4, 8, 32>}, {pipeline_mode = #tpu.pipeline_mode<synchronous>, transform_indices = @transform_11, window_bounds = array<i64: 1, 32>}, {pipeline_mode = #tpu.pipeline_mode<synchronous>, transform_indices = @transform_12, window_bounds = array<i64: 4, 32, 8>}, {pipeline_mode = #tpu.pipeline_mode<synchronous>, transform_indices = @transform_13, window_bounds = array<i64: 4, 1, 8>}, {pipeline_mode = #tpu.pipeline_mode<synchronous>, transform_indices = @transform_14, window_bounds = array<i64: 4, 32, 8>}, {pipeline_mode = #tpu.pipeline_mode<synchronous>, transform_indices = @transform_15, window_bounds = array<i64: 4, 1, 8>}, {pipeline_mode = #tpu.pipeline_mode<synchronous>, transform_indices = @transform_16, window_bounds = array<i64: 4, 32, 8>}, {pipeline_mode = #tpu.pipeline_mode<synchronous>, transform_indices = @transform_17, window_bounds = array<i64: 4, 1, 8>}, {pipeline_mode = #tpu.pipeline_mode<synchronous>, transform_indices = @transform_18, window_bounds = array<i64: 4, 8, 32>}, {pipeline_mode = #tpu.pipeline_mode<synchronous>, transform_indices = @transform_19, window_bounds = array<i64: 1, 32>}, {pipeline_mode = #tpu.pipeline_mode<synchronous>, transform_indices = @transform_20, window_bounds = array<i64: 32, 64>}, {pipeline_mode = #tpu.pipeline_mode<synchronous>, transform_indices = @transform_21, window_bounds = array<i64: 1, 64>}, {pipeline_mode = #tpu.pipeline_mode<synchronous>, transform_indices = @transform_22, window_bounds = array<i64: 64, 32>}, {pipeline_mode = #tpu.pipeline_mode<synchronous>, transform_indices = @transform_23, window_bounds = array<i64: 1, 32>}, {pipeline_mode = #tpu.pipeline_mode<synchronous>, transform_indices = @transform_24, window_bounds = array<i64: 1, 32>}, {pipeline_mode = #tpu.pipeline_mode<synchronous>, transform_indices = @transform_25, window_bounds = array<i64: 1, 32>}, {transform_indices = @transform_26, window_bounds = array<i64: 1, 8, 32>}]} {
    %c0 = arith.constant 0 : index
    %c0_0 = arith.constant 0 : index
    %c0_1 = arith.constant 0 : index
    %0 = vector.load %arg1[%c0, %c0_0, %c0_1] : memref<1x8x32xf32, #tpu.memory_space<vmem>>, vector<1x8x32xf32>
    %1 = vector.shape_cast %0 : vector<1x8x32xf32> to vector<8x32xf32>
    %c0_2 = arith.constant 0 : index
    %c0_3 = arith.constant 0 : index
    %c0_4 = arith.constant 0 : index
    %2 = vector.load %arg2[%c0_2, %c0_3, %c0_4] : memref<1x8x32xf32, #tpu.memory_space<vmem>>, vector<1x8x32xf32>
    %3 = vector.shape_cast %2 : vector<1x8x32xf32> to vector<8x32xf32>
    %c0_5 = arith.constant 0 : index
    %c0_6 = arith.constant 0 : index
    %c0_7 = arith.constant 0 : index
    %4 = vector.load %arg3[%c0_5, %c0_6, %c0_7] : memref<1x8x8xf32, #tpu.memory_space<vmem>>, vector<1x8x8xf32>
    %5 = vector.shape_cast %4 : vector<1x8x8xf32> to vector<8x8xf32>
    %c0_8 = arith.constant 0 : index
    %c0_9 = arith.constant 0 : index
    %c0_10 = arith.constant 0 : index
    %6 = vector.load %arg4[%c0_8, %c0_9, %c0_10] : memref<1x8x8xf32, #tpu.memory_space<vmem>>, vector<1x8x8xf32>
    %7 = vector.shape_cast %6 : vector<1x8x8xf32> to vector<8x8xf32>
    %c0_11 = arith.constant 0 : index
    %c0_12 = arith.constant 0 : index
    %8 = vector.load %arg25[%c0_11, %c0_12] : memref<1x32xf32, #tpu.memory_space<vmem>>, vector<1x32xf32>
    %c0_13 = arith.constant 0 : index
    %c0_14 = arith.constant 0 : index
    %9 = vector.load %arg26[%c0_13, %c0_14] : memref<1x32xf32, #tpu.memory_space<vmem>>, vector<1x32xf32>
    %c0_15 = arith.constant 0 : index
    %c0_16 = arith.constant 0 : index
    %c0_17 = arith.constant 0 : index
    %10 = vector.load %arg5[%c0_15, %c0_16, %c0_17] : memref<4x32x8xf32, #tpu.memory_space<vmem>>, vector<1x32x8xf32>
    %11 = vector.shape_cast %10 : vector<1x32x8xf32> to vector<32x8xf32>
    %cst = arith.constant dense<0.000000e+00> : vector<8x8xf32>
    %12 = tpu.matmul %1, %11, %cst {dimension_numbers = #tpu.dot_dimension_numbers<[1], [0], [0], [1], [0, 0, 1, 1], [], []>} : vector<8x32xf32>, vector<32x8xf32>, vector<8x8xf32> -> vector<8x8xf32>
    %c0_18 = arith.constant 0 : index
    %c0_19 = arith.constant 0 : index
    %c0_20 = arith.constant 0 : index
    %13 = vector.load %arg6[%c0_18, %c0_19, %c0_20] : memref<4x1x8xf32, #tpu.memory_space<vmem>>, vector<1x1x8xf32>
    %14 = vector.shape_cast %13 : vector<1x1x8xf32> to vector<1x8xf32>
    %15 = vector.broadcast %14 : vector<1x8xf32> to vector<8x8xf32>
    %16 = arith.addf %12, %15 : vector<8x8xf32>
    %c0_21 = arith.constant 0 : index
    %c0_22 = arith.constant 0 : index
    %c0_23 = arith.constant 0 : index
    %17 = vector.load %arg7[%c0_21, %c0_22, %c0_23] : memref<4x32x8xf32, #tpu.memory_space<vmem>>, vector<1x32x8xf32>
    %18 = vector.shape_cast %17 : vector<1x32x8xf32> to vector<32x8xf32>
    %cst_24 = arith.constant dense<0.000000e+00> : vector<8x8xf32>
    %19 = tpu.matmul %1, %18, %cst_24 {dimension_numbers = #tpu.dot_dimension_numbers<[1], [0], [0], [1], [0, 0, 1, 1], [], []>} : vector<8x32xf32>, vector<32x8xf32>, vector<8x8xf32> -> vector<8x8xf32>
    %c0_25 = arith.constant 0 : index
    %c0_26 = arith.constant 0 : index
    %c0_27 = arith.constant 0 : index
    %20 = vector.load %arg8[%c0_25, %c0_26, %c0_27] : memref<4x1x8xf32, #tpu.memory_space<vmem>>, vector<1x1x8xf32>
    %21 = vector.shape_cast %20 : vector<1x1x8xf32> to vector<1x8xf32>
    %22 = vector.broadcast %21 : vector<1x8xf32> to vector<8x8xf32>
    %23 = arith.addf %19, %22 : vector<8x8xf32>
    %c0_28 = arith.constant 0 : index
    %c0_29 = arith.constant 0 : index
    %c0_30 = arith.constant 0 : index
    %24 = vector.load %arg9[%c0_28, %c0_29, %c0_30] : memref<4x32x8xf32, #tpu.memory_space<vmem>>, vector<1x32x8xf32>
    %25 = vector.shape_cast %24 : vector<1x32x8xf32> to vector<32x8xf32>
    %cst_31 = arith.constant dense<0.000000e+00> : vector<8x8xf32>
    %26 = tpu.matmul %1, %25, %cst_31 {dimension_numbers = #tpu.dot_dimension_numbers<[1], [0], [0], [1], [0, 0, 1, 1], [], []>} : vector<8x32xf32>, vector<32x8xf32>, vector<8x8xf32> -> vector<8x8xf32>
    %c0_32 = arith.constant 0 : index
    %c0_33 = arith.constant 0 : index
    %c0_34 = arith.constant 0 : index
    %27 = vector.load %arg10[%c0_32, %c0_33, %c0_34] : memref<4x1x8xf32, #tpu.memory_space<vmem>>, vector<1x1x8xf32>
    %28 = vector.shape_cast %27 : vector<1x1x8xf32> to vector<1x8xf32>
    %29 = vector.broadcast %28 : vector<1x8xf32> to vector<8x8xf32>
    %30 = arith.addf %26, %29 : vector<8x8xf32>
    %cst_35 = arith.constant dense<0.000000e+00> : vector<8x8xf32>
    %31 = tpu.matmul %16, %23, %cst_35 {dimension_numbers = #tpu.dot_dimension_numbers<[1], [1], [0], [0], [0, 0, 1, 0], [], []>} : vector<8x8xf32>, vector<8x8xf32>, vector<8x8xf32> -> vector<8x8xf32>
    %32 = arith.addf %31, %5 : vector<8x8xf32>
    %cst_36 = arith.constant dense<0xFF800000> : vector<8xf32>
    %33 = vector.multi_reduction <maximumf>, %32, %cst_36 [1] : vector<8x8xf32> to vector<8xf32>
    %34 = vector.shape_cast %33 : vector<8xf32> to vector<8x1xf32>
    %35 = vector.broadcast %34 : vector<8x1xf32> to vector<8x8xf32>
    %36 = arith.subf %32, %35 : vector<8x8xf32>
    %37 = math.exp %36 : vector<8x8xf32>
    %cst_37 = arith.constant dense<0.000000e+00> : vector<8xf32>
    %38 = vector.multi_reduction <add>, %37, %cst_37 [1] : vector<8x8xf32> to vector<8xf32>
    %39 = vector.shape_cast %38 : vector<8xf32> to vector<8x1xf32>
    %40 = tpu.reciprocal %39 {approx = true} : vector<8x1xf32> -> vector<8x1xf32>
    %41 = vector.broadcast %40 : vector<8x1xf32> to vector<8x8xf32>
    %42 = arith.mulf %37, %41 : vector<8x8xf32>
    %cst_38 = arith.constant dense<0.000000e+00> : vector<8x8xf32>
    %43 = tpu.matmul %42, %30, %cst_38 {dimension_numbers = #tpu.dot_dimension_numbers<[1], [0], [0], [1], [0, 0, 1, 1], [], []>} : vector<8x8xf32>, vector<8x8xf32>, vector<8x8xf32> -> vector<8x8xf32>
    %c0_39 = arith.constant 0 : index
    %c0_40 = arith.constant 0 : index
    %c0_41 = arith.constant 0 : index
    %44 = vector.load %arg11[%c0_39, %c0_40, %c0_41] : memref<4x8x32xf32, #tpu.memory_space<vmem>>, vector<1x8x32xf32>
    %45 = vector.shape_cast %44 : vector<1x8x32xf32> to vector<8x32xf32>
    %cst_42 = arith.constant dense<0.000000e+00> : vector<8x32xf32>
    %46 = tpu.matmul %43, %45, %cst_42 {dimension_numbers = #tpu.dot_dimension_numbers<[1], [0], [0], [1], [0, 0, 1, 1], [], []>} : vector<8x8xf32>, vector<8x32xf32>, vector<8x32xf32> -> vector<8x32xf32>
    %c1 = arith.constant 1 : index
    %c0_43 = arith.constant 0 : index
    %c0_44 = arith.constant 0 : index
    %47 = vector.load %arg5[%c1, %c0_43, %c0_44] : memref<4x32x8xf32, #tpu.memory_space<vmem>>, vector<1x32x8xf32>
    %48 = vector.shape_cast %47 : vector<1x32x8xf32> to vector<32x8xf32>
    %cst_45 = arith.constant dense<0.000000e+00> : vector<8x8xf32>
    %49 = tpu.matmul %1, %48, %cst_45 {dimension_numbers = #tpu.dot_dimension_numbers<[1], [0], [0], [1], [0, 0, 1, 1], [], []>} : vector<8x32xf32>, vector<32x8xf32>, vector<8x8xf32> -> vector<8x8xf32>
    %c1_46 = arith.constant 1 : index
    %c0_47 = arith.constant 0 : index
    %c0_48 = arith.constant 0 : index
    %50 = vector.load %arg6[%c1_46, %c0_47, %c0_48] : memref<4x1x8xf32, #tpu.memory_space<vmem>>, vector<1x1x8xf32>
    %51 = vector.shape_cast %50 : vector<1x1x8xf32> to vector<1x8xf32>
    %52 = vector.broadcast %51 : vector<1x8xf32> to vector<8x8xf32>
    %53 = arith.addf %49, %52 : vector<8x8xf32>
    %c1_49 = arith.constant 1 : index
    %c0_50 = arith.constant 0 : index
    %c0_51 = arith.constant 0 : index
    %54 = vector.load %arg7[%c1_49, %c0_50, %c0_51] : memref<4x32x8xf32, #tpu.memory_space<vmem>>, vector<1x32x8xf32>
    %55 = vector.shape_cast %54 : vector<1x32x8xf32> to vector<32x8xf32>
    %cst_52 = arith.constant dense<0.000000e+00> : vector<8x8xf32>
    %56 = tpu.matmul %1, %55, %cst_52 {dimension_numbers = #tpu.dot_dimension_numbers<[1], [0], [0], [1], [0, 0, 1, 1], [], []>} : vector<8x32xf32>, vector<32x8xf32>, vector<8x8xf32> -> vector<8x8xf32>
    %c1_53 = arith.constant 1 : index
    %c0_54 = arith.constant 0 : index
    %c0_55 = arith.constant 0 : index
    %57 = vector.load %arg8[%c1_53, %c0_54, %c0_55] : memref<4x1x8xf32, #tpu.memory_space<vmem>>, vector<1x1x8xf32>
    %58 = vector.shape_cast %57 : vector<1x1x8xf32> to vector<1x8xf32>
    %59 = vector.broadcast %58 : vector<1x8xf32> to vector<8x8xf32>
    %60 = arith.addf %56, %59 : vector<8x8xf32>
    %c1_56 = arith.constant 1 : index
    %c0_57 = arith.constant 0 : index
    %c0_58 = arith.constant 0 : index
    %61 = vector.load %arg9[%c1_56, %c0_57, %c0_58] : memref<4x32x8xf32, #tpu.memory_space<vmem>>, vector<1x32x8xf32>
    %62 = vector.shape_cast %61 : vector<1x32x8xf32> to vector<32x8xf32>
    %cst_59 = arith.constant dense<0.000000e+00> : vector<8x8xf32>
    %63 = tpu.matmul %1, %62, %cst_59 {dimension_numbers = #tpu.dot_dimension_numbers<[1], [0], [0], [1], [0, 0, 1, 1], [], []>} : vector<8x32xf32>, vector<32x8xf32>, vector<8x8xf32> -> vector<8x8xf32>
    %c1_60 = arith.constant 1 : index
    %c0_61 = arith.constant 0 : index
    %c0_62 = arith.constant 0 : index
    %64 = vector.load %arg10[%c1_60, %c0_61, %c0_62] : memref<4x1x8xf32, #tpu.memory_space<vmem>>, vector<1x1x8xf32>
    %65 = vector.shape_cast %64 : vector<1x1x8xf32> to vector<1x8xf32>
    %66 = vector.broadcast %65 : vector<1x8xf32> to vector<8x8xf32>
    %67 = arith.addf %63, %66 : vector<8x8xf32>
    %cst_63 = arith.constant dense<0.000000e+00> : vector<8x8xf32>
    %68 = tpu.matmul %53, %60, %cst_63 {dimension_numbers = #tpu.dot_dimension_numbers<[1], [1], [0], [0], [0, 0, 1, 0], [], []>} : vector<8x8xf32>, vector<8x8xf32>, vector<8x8xf32> -> vector<8x8xf32>
    %69 = arith.addf %68, %5 : vector<8x8xf32>
    %cst_64 = arith.constant dense<0xFF800000> : vector<8xf32>
    %70 = vector.multi_reduction <maximumf>, %69, %cst_64 [1] : vector<8x8xf32> to vector<8xf32>
    %71 = vector.shape_cast %70 : vector<8xf32> to vector<8x1xf32>
    %72 = vector.broadcast %71 : vector<8x1xf32> to vector<8x8xf32>
    %73 = arith.subf %69, %72 : vector<8x8xf32>
    %74 = math.exp %73 : vector<8x8xf32>
    %cst_65 = arith.constant dense<0.000000e+00> : vector<8xf32>
    %75 = vector.multi_reduction <add>, %74, %cst_65 [1] : vector<8x8xf32> to vector<8xf32>
    %76 = vector.shape_cast %75 : vector<8xf32> to vector<8x1xf32>
    %77 = tpu.reciprocal %76 {approx = true} : vector<8x1xf32> -> vector<8x1xf32>
    %78 = vector.broadcast %77 : vector<8x1xf32> to vector<8x8xf32>
    %79 = arith.mulf %74, %78 : vector<8x8xf32>
    %cst_66 = arith.constant dense<0.000000e+00> : vector<8x8xf32>
    %80 = tpu.matmul %79, %67, %cst_66 {dimension_numbers = #tpu.dot_dimension_numbers<[1], [0], [0], [1], [0, 0, 1, 1], [], []>} : vector<8x8xf32>, vector<8x8xf32>, vector<8x8xf32> -> vector<8x8xf32>
    %c1_67 = arith.constant 1 : index
    %c0_68 = arith.constant 0 : index
    %c0_69 = arith.constant 0 : index
    %81 = vector.load %arg11[%c1_67, %c0_68, %c0_69] : memref<4x8x32xf32, #tpu.memory_space<vmem>>, vector<1x8x32xf32>
    %82 = vector.shape_cast %81 : vector<1x8x32xf32> to vector<8x32xf32>
    %cst_70 = arith.constant dense<0.000000e+00> : vector<8x32xf32>
    %83 = tpu.matmul %80, %82, %cst_70 {dimension_numbers = #tpu.dot_dimension_numbers<[1], [0], [0], [1], [0, 0, 1, 1], [], []>} : vector<8x8xf32>, vector<8x32xf32>, vector<8x32xf32> -> vector<8x32xf32>
    %84 = arith.addf %46, %83 : vector<8x32xf32>
    %c2 = arith.constant 2 : index
    %c0_71 = arith.constant 0 : index
    %c0_72 = arith.constant 0 : index
    %85 = vector.load %arg5[%c2, %c0_71, %c0_72] : memref<4x32x8xf32, #tpu.memory_space<vmem>>, vector<1x32x8xf32>
    %86 = vector.shape_cast %85 : vector<1x32x8xf32> to vector<32x8xf32>
    %cst_73 = arith.constant dense<0.000000e+00> : vector<8x8xf32>
    %87 = tpu.matmul %1, %86, %cst_73 {dimension_numbers = #tpu.dot_dimension_numbers<[1], [0], [0], [1], [0, 0, 1, 1], [], []>} : vector<8x32xf32>, vector<32x8xf32>, vector<8x8xf32> -> vector<8x8xf32>
    %c2_74 = arith.constant 2 : index
    %c0_75 = arith.constant 0 : index
    %c0_76 = arith.constant 0 : index
    %88 = vector.load %arg6[%c2_74, %c0_75, %c0_76] : memref<4x1x8xf32, #tpu.memory_space<vmem>>, vector<1x1x8xf32>
    %89 = vector.shape_cast %88 : vector<1x1x8xf32> to vector<1x8xf32>
    %90 = vector.broadcast %89 : vector<1x8xf32> to vector<8x8xf32>
    %91 = arith.addf %87, %90 : vector<8x8xf32>
    %c2_77 = arith.constant 2 : index
    %c0_78 = arith.constant 0 : index
    %c0_79 = arith.constant 0 : index
    %92 = vector.load %arg7[%c2_77, %c0_78, %c0_79] : memref<4x32x8xf32, #tpu.memory_space<vmem>>, vector<1x32x8xf32>
    %93 = vector.shape_cast %92 : vector<1x32x8xf32> to vector<32x8xf32>
    %cst_80 = arith.constant dense<0.000000e+00> : vector<8x8xf32>
    %94 = tpu.matmul %1, %93, %cst_80 {dimension_numbers = #tpu.dot_dimension_numbers<[1], [0], [0], [1], [0, 0, 1, 1], [], []>} : vector<8x32xf32>, vector<32x8xf32>, vector<8x8xf32> -> vector<8x8xf32>
    %c2_81 = arith.constant 2 : index
    %c0_82 = arith.constant 0 : index
    %c0_83 = arith.constant 0 : index
    %95 = vector.load %arg8[%c2_81, %c0_82, %c0_83] : memref<4x1x8xf32, #tpu.memory_space<vmem>>, vector<1x1x8xf32>
    %96 = vector.shape_cast %95 : vector<1x1x8xf32> to vector<1x8xf32>
    %97 = vector.broadcast %96 : vector<1x8xf32> to vector<8x8xf32>
    %98 = arith.addf %94, %97 : vector<8x8xf32>
    %c2_84 = arith.constant 2 : index
    %c0_85 = arith.constant 0 : index
    %c0_86 = arith.constant 0 : index
    %99 = vector.load %arg9[%c2_84, %c0_85, %c0_86] : memref<4x32x8xf32, #tpu.memory_space<vmem>>, vector<1x32x8xf32>
    %100 = vector.shape_cast %99 : vector<1x32x8xf32> to vector<32x8xf32>
    %cst_87 = arith.constant dense<0.000000e+00> : vector<8x8xf32>
    %101 = tpu.matmul %1, %100, %cst_87 {dimension_numbers = #tpu.dot_dimension_numbers<[1], [0], [0], [1], [0, 0, 1, 1], [], []>} : vector<8x32xf32>, vector<32x8xf32>, vector<8x8xf32> -> vector<8x8xf32>
    %c2_88 = arith.constant 2 : index
    %c0_89 = arith.constant 0 : index
    %c0_90 = arith.constant 0 : index
    %102 = vector.load %arg10[%c2_88, %c0_89, %c0_90] : memref<4x1x8xf32, #tpu.memory_space<vmem>>, vector<1x1x8xf32>
    %103 = vector.shape_cast %102 : vector<1x1x8xf32> to vector<1x8xf32>
    %104 = vector.broadcast %103 : vector<1x8xf32> to vector<8x8xf32>
    %105 = arith.addf %101, %104 : vector<8x8xf32>
    %cst_91 = arith.constant dense<0.000000e+00> : vector<8x8xf32>
    %106 = tpu.matmul %91, %98, %cst_91 {dimension_numbers = #tpu.dot_dimension_numbers<[1], [1], [0], [0], [0, 0, 1, 0], [], []>} : vector<8x8xf32>, vector<8x8xf32>, vector<8x8xf32> -> vector<8x8xf32>
    %107 = arith.addf %106, %5 : vector<8x8xf32>
    %cst_92 = arith.constant dense<0xFF800000> : vector<8xf32>
    %108 = vector.multi_reduction <maximumf>, %107, %cst_92 [1] : vector<8x8xf32> to vector<8xf32>
    %109 = vector.shape_cast %108 : vector<8xf32> to vector<8x1xf32>
    %110 = vector.broadcast %109 : vector<8x1xf32> to vector<8x8xf32>
    %111 = arith.subf %107, %110 : vector<8x8xf32>
    %112 = math.exp %111 : vector<8x8xf32>
    %cst_93 = arith.constant dense<0.000000e+00> : vector<8xf32>
    %113 = vector.multi_reduction <add>, %112, %cst_93 [1] : vector<8x8xf32> to vector<8xf32>
    %114 = vector.shape_cast %113 : vector<8xf32> to vector<8x1xf32>
    %115 = tpu.reciprocal %114 {approx = true} : vector<8x1xf32> -> vector<8x1xf32>
    %116 = vector.broadcast %115 : vector<8x1xf32> to vector<8x8xf32>
    %117 = arith.mulf %112, %116 : vector<8x8xf32>
    %cst_94 = arith.constant dense<0.000000e+00> : vector<8x8xf32>
    %118 = tpu.matmul %117, %105, %cst_94 {dimension_numbers = #tpu.dot_dimension_numbers<[1], [0], [0], [1], [0, 0, 1, 1], [], []>} : vector<8x8xf32>, vector<8x8xf32>, vector<8x8xf32> -> vector<8x8xf32>
    %c2_95 = arith.constant 2 : index
    %c0_96 = arith.constant 0 : index
    %c0_97 = arith.constant 0 : index
    %119 = vector.load %arg11[%c2_95, %c0_96, %c0_97] : memref<4x8x32xf32, #tpu.memory_space<vmem>>, vector<1x8x32xf32>
    %120 = vector.shape_cast %119 : vector<1x8x32xf32> to vector<8x32xf32>
    %cst_98 = arith.constant dense<0.000000e+00> : vector<8x32xf32>
    %121 = tpu.matmul %118, %120, %cst_98 {dimension_numbers = #tpu.dot_dimension_numbers<[1], [0], [0], [1], [0, 0, 1, 1], [], []>} : vector<8x8xf32>, vector<8x32xf32>, vector<8x32xf32> -> vector<8x32xf32>
    %122 = arith.addf %84, %121 : vector<8x32xf32>
    %c3 = arith.constant 3 : index
    %c0_99 = arith.constant 0 : index
    %c0_100 = arith.constant 0 : index
    %123 = vector.load %arg5[%c3, %c0_99, %c0_100] : memref<4x32x8xf32, #tpu.memory_space<vmem>>, vector<1x32x8xf32>
    %124 = vector.shape_cast %123 : vector<1x32x8xf32> to vector<32x8xf32>
    %cst_101 = arith.constant dense<0.000000e+00> : vector<8x8xf32>
    %125 = tpu.matmul %1, %124, %cst_101 {dimension_numbers = #tpu.dot_dimension_numbers<[1], [0], [0], [1], [0, 0, 1, 1], [], []>} : vector<8x32xf32>, vector<32x8xf32>, vector<8x8xf32> -> vector<8x8xf32>
    %c3_102 = arith.constant 3 : index
    %c0_103 = arith.constant 0 : index
    %c0_104 = arith.constant 0 : index
    %126 = vector.load %arg6[%c3_102, %c0_103, %c0_104] : memref<4x1x8xf32, #tpu.memory_space<vmem>>, vector<1x1x8xf32>
    %127 = vector.shape_cast %126 : vector<1x1x8xf32> to vector<1x8xf32>
    %128 = vector.broadcast %127 : vector<1x8xf32> to vector<8x8xf32>
    %129 = arith.addf %125, %128 : vector<8x8xf32>
    %c3_105 = arith.constant 3 : index
    %c0_106 = arith.constant 0 : index
    %c0_107 = arith.constant 0 : index
    %130 = vector.load %arg7[%c3_105, %c0_106, %c0_107] : memref<4x32x8xf32, #tpu.memory_space<vmem>>, vector<1x32x8xf32>
    %131 = vector.shape_cast %130 : vector<1x32x8xf32> to vector<32x8xf32>
    %cst_108 = arith.constant dense<0.000000e+00> : vector<8x8xf32>
    %132 = tpu.matmul %1, %131, %cst_108 {dimension_numbers = #tpu.dot_dimension_numbers<[1], [0], [0], [1], [0, 0, 1, 1], [], []>} : vector<8x32xf32>, vector<32x8xf32>, vector<8x8xf32> -> vector<8x8xf32>
    %c3_109 = arith.constant 3 : index
    %c0_110 = arith.constant 0 : index
    %c0_111 = arith.constant 0 : index
    %133 = vector.load %arg8[%c3_109, %c0_110, %c0_111] : memref<4x1x8xf32, #tpu.memory_space<vmem>>, vector<1x1x8xf32>
    %134 = vector.shape_cast %133 : vector<1x1x8xf32> to vector<1x8xf32>
    %135 = vector.broadcast %134 : vector<1x8xf32> to vector<8x8xf32>
    %136 = arith.addf %132, %135 : vector<8x8xf32>
    %c3_112 = arith.constant 3 : index
    %c0_113 = arith.constant 0 : index
    %c0_114 = arith.constant 0 : index
    %137 = vector.load %arg9[%c3_112, %c0_113, %c0_114] : memref<4x32x8xf32, #tpu.memory_space<vmem>>, vector<1x32x8xf32>
    %138 = vector.shape_cast %137 : vector<1x32x8xf32> to vector<32x8xf32>
    %cst_115 = arith.constant dense<0.000000e+00> : vector<8x8xf32>
    %139 = tpu.matmul %1, %138, %cst_115 {dimension_numbers = #tpu.dot_dimension_numbers<[1], [0], [0], [1], [0, 0, 1, 1], [], []>} : vector<8x32xf32>, vector<32x8xf32>, vector<8x8xf32> -> vector<8x8xf32>
    %c3_116 = arith.constant 3 : index
    %c0_117 = arith.constant 0 : index
    %c0_118 = arith.constant 0 : index
    %140 = vector.load %arg10[%c3_116, %c0_117, %c0_118] : memref<4x1x8xf32, #tpu.memory_space<vmem>>, vector<1x1x8xf32>
    %141 = vector.shape_cast %140 : vector<1x1x8xf32> to vector<1x8xf32>
    %142 = vector.broadcast %141 : vector<1x8xf32> to vector<8x8xf32>
    %143 = arith.addf %139, %142 : vector<8x8xf32>
    %cst_119 = arith.constant dense<0.000000e+00> : vector<8x8xf32>
    %144 = tpu.matmul %129, %136, %cst_119 {dimension_numbers = #tpu.dot_dimension_numbers<[1], [1], [0], [0], [0, 0, 1, 0], [], []>} : vector<8x8xf32>, vector<8x8xf32>, vector<8x8xf32> -> vector<8x8xf32>
    %145 = arith.addf %144, %5 : vector<8x8xf32>
    %cst_120 = arith.constant dense<0xFF800000> : vector<8xf32>
    %146 = vector.multi_reduction <maximumf>, %145, %cst_120 [1] : vector<8x8xf32> to vector<8xf32>
    %147 = vector.shape_cast %146 : vector<8xf32> to vector<8x1xf32>
    %148 = vector.broadcast %147 : vector<8x1xf32> to vector<8x8xf32>
    %149 = arith.subf %145, %148 : vector<8x8xf32>
    %150 = math.exp %149 : vector<8x8xf32>
    %cst_121 = arith.constant dense<0.000000e+00> : vector<8xf32>
    %151 = vector.multi_reduction <add>, %150, %cst_121 [1] : vector<8x8xf32> to vector<8xf32>
    %152 = vector.shape_cast %151 : vector<8xf32> to vector<8x1xf32>
    %153 = tpu.reciprocal %152 {approx = true} : vector<8x1xf32> -> vector<8x1xf32>
    %154 = vector.broadcast %153 : vector<8x1xf32> to vector<8x8xf32>
    %155 = arith.mulf %150, %154 : vector<8x8xf32>
    %cst_122 = arith.constant dense<0.000000e+00> : vector<8x8xf32>
    %156 = tpu.matmul %155, %143, %cst_122 {dimension_numbers = #tpu.dot_dimension_numbers<[1], [0], [0], [1], [0, 0, 1, 1], [], []>} : vector<8x8xf32>, vector<8x8xf32>, vector<8x8xf32> -> vector<8x8xf32>
    %c3_123 = arith.constant 3 : index
    %c0_124 = arith.constant 0 : index
    %c0_125 = arith.constant 0 : index
    %157 = vector.load %arg11[%c3_123, %c0_124, %c0_125] : memref<4x8x32xf32, #tpu.memory_space<vmem>>, vector<1x8x32xf32>
    %158 = vector.shape_cast %157 : vector<1x8x32xf32> to vector<8x32xf32>
    %cst_126 = arith.constant dense<0.000000e+00> : vector<8x32xf32>
    %159 = tpu.matmul %156, %158, %cst_126 {dimension_numbers = #tpu.dot_dimension_numbers<[1], [0], [0], [1], [0, 0, 1, 1], [], []>} : vector<8x8xf32>, vector<8x32xf32>, vector<8x32xf32> -> vector<8x32xf32>
    %160 = arith.addf %122, %159 : vector<8x32xf32>
    %c0_127 = arith.constant 0 : index
    %c0_128 = arith.constant 0 : index
    %161 = vector.load %arg12[%c0_127, %c0_128] : memref<1x32xf32, #tpu.memory_space<vmem>>, vector<1x32xf32>
    %162 = vector.broadcast %161 : vector<1x32xf32> to vector<8x32xf32>
    %163 = arith.addf %160, %162 : vector<8x32xf32>
    %164 = arith.addf %163, %1 : vector<8x32xf32>
    %cst_129 = arith.constant dense<0.000000e+00> : vector<8xf32>
    %165 = vector.multi_reduction <add>, %164, %cst_129 [1] : vector<8x32xf32> to vector<8xf32>
    %166 = vector.shape_cast %165 : vector<8xf32> to vector<8x1xf32>
    %cst_130 = arith.constant 3.200000e+01 : f32
    %167 = vector.broadcast %cst_130 : f32 to vector<8x1xf32>
    %168 = arith.divf %166, %167 : vector<8x1xf32>
    %169 = vector.broadcast %168 : vector<8x1xf32> to vector<8x32xf32>
    %170 = arith.subf %164, %169 : vector<8x32xf32>
    %171 = arith.mulf %170, %170 : vector<8x32xf32>
    %cst_131 = arith.constant dense<0.000000e+00> : vector<8xf32>
    %172 = vector.multi_reduction <add>, %171, %cst_131 [1] : vector<8x32xf32> to vector<8xf32>
    %173 = vector.shape_cast %172 : vector<8xf32> to vector<8x1xf32>
    %cst_132 = arith.constant 3.200000e+01 : f32
    %174 = vector.broadcast %cst_132 : f32 to vector<8x1xf32>
    %175 = arith.divf %173, %174 : vector<8x1xf32>
    %cst_133 = arith.constant 9.99999974E-6 : f32
    %176 = vector.broadcast %cst_133 : f32 to vector<8x1xf32>
    %177 = arith.addf %175, %176 : vector<8x1xf32>
    %178 = math.rsqrt %177 : vector<8x1xf32>
    %179 = vector.broadcast %178 : vector<8x1xf32> to vector<8x32xf32>
    %180 = arith.mulf %170, %179 : vector<8x32xf32>
    %181 = vector.broadcast %8 : vector<1x32xf32> to vector<8x32xf32>
    %182 = arith.mulf %180, %181 : vector<8x32xf32>
    %183 = vector.broadcast %9 : vector<1x32xf32> to vector<8x32xf32>
    %184 = arith.addf %182, %183 : vector<8x32xf32>
    %c0_134 = arith.constant 0 : index
    %c0_135 = arith.constant 0 : index
    %c0_136 = arith.constant 0 : index
    %185 = vector.load %arg13[%c0_134, %c0_135, %c0_136] : memref<4x32x8xf32, #tpu.memory_space<vmem>>, vector<1x32x8xf32>
    %186 = vector.shape_cast %185 : vector<1x32x8xf32> to vector<32x8xf32>
    %cst_137 = arith.constant dense<0.000000e+00> : vector<8x8xf32>
    %187 = tpu.matmul %184, %186, %cst_137 {dimension_numbers = #tpu.dot_dimension_numbers<[1], [0], [0], [1], [0, 0, 1, 1], [], []>} : vector<8x32xf32>, vector<32x8xf32>, vector<8x8xf32> -> vector<8x8xf32>
    %c0_138 = arith.constant 0 : index
    %c0_139 = arith.constant 0 : index
    %c0_140 = arith.constant 0 : index
    %188 = vector.load %arg14[%c0_138, %c0_139, %c0_140] : memref<4x1x8xf32, #tpu.memory_space<vmem>>, vector<1x1x8xf32>
    %189 = vector.shape_cast %188 : vector<1x1x8xf32> to vector<1x8xf32>
    %190 = vector.broadcast %189 : vector<1x8xf32> to vector<8x8xf32>
    %191 = arith.addf %187, %190 : vector<8x8xf32>
    %c0_141 = arith.constant 0 : index
    %c0_142 = arith.constant 0 : index
    %c0_143 = arith.constant 0 : index
    %192 = vector.load %arg15[%c0_141, %c0_142, %c0_143] : memref<4x32x8xf32, #tpu.memory_space<vmem>>, vector<1x32x8xf32>
    %193 = vector.shape_cast %192 : vector<1x32x8xf32> to vector<32x8xf32>
    %cst_144 = arith.constant dense<0.000000e+00> : vector<8x8xf32>
    %194 = tpu.matmul %3, %193, %cst_144 {dimension_numbers = #tpu.dot_dimension_numbers<[1], [0], [0], [1], [0, 0, 1, 1], [], []>} : vector<8x32xf32>, vector<32x8xf32>, vector<8x8xf32> -> vector<8x8xf32>
    %c0_145 = arith.constant 0 : index
    %c0_146 = arith.constant 0 : index
    %c0_147 = arith.constant 0 : index
    %195 = vector.load %arg16[%c0_145, %c0_146, %c0_147] : memref<4x1x8xf32, #tpu.memory_space<vmem>>, vector<1x1x8xf32>
    %196 = vector.shape_cast %195 : vector<1x1x8xf32> to vector<1x8xf32>
    %197 = vector.broadcast %196 : vector<1x8xf32> to vector<8x8xf32>
    %198 = arith.addf %194, %197 : vector<8x8xf32>
    %c0_148 = arith.constant 0 : index
    %c0_149 = arith.constant 0 : index
    %c0_150 = arith.constant 0 : index
    %199 = vector.load %arg17[%c0_148, %c0_149, %c0_150] : memref<4x32x8xf32, #tpu.memory_space<vmem>>, vector<1x32x8xf32>
    %200 = vector.shape_cast %199 : vector<1x32x8xf32> to vector<32x8xf32>
    %cst_151 = arith.constant dense<0.000000e+00> : vector<8x8xf32>
    %201 = tpu.matmul %3, %200, %cst_151 {dimension_numbers = #tpu.dot_dimension_numbers<[1], [0], [0], [1], [0, 0, 1, 1], [], []>} : vector<8x32xf32>, vector<32x8xf32>, vector<8x8xf32> -> vector<8x8xf32>
    %c0_152 = arith.constant 0 : index
    %c0_153 = arith.constant 0 : index
    %c0_154 = arith.constant 0 : index
    %202 = vector.load %arg18[%c0_152, %c0_153, %c0_154] : memref<4x1x8xf32, #tpu.memory_space<vmem>>, vector<1x1x8xf32>
    %203 = vector.shape_cast %202 : vector<1x1x8xf32> to vector<1x8xf32>
    %204 = vector.broadcast %203 : vector<1x8xf32> to vector<8x8xf32>
    %205 = arith.addf %201, %204 : vector<8x8xf32>
    %cst_155 = arith.constant dense<0.000000e+00> : vector<8x8xf32>
    %206 = tpu.matmul %191, %198, %cst_155 {dimension_numbers = #tpu.dot_dimension_numbers<[1], [1], [0], [0], [0, 0, 1, 0], [], []>} : vector<8x8xf32>, vector<8x8xf32>, vector<8x8xf32> -> vector<8x8xf32>
    %207 = arith.addf %206, %7 : vector<8x8xf32>
    %cst_156 = arith.constant dense<0xFF800000> : vector<8xf32>
    %208 = vector.multi_reduction <maximumf>, %207, %cst_156 [1] : vector<8x8xf32> to vector<8xf32>
    %209 = vector.shape_cast %208 : vector<8xf32> to vector<8x1xf32>
    %210 = vector.broadcast %209 : vector<8x1xf32> to vector<8x8xf32>
    %211 = arith.subf %207, %210 : vector<8x8xf32>
    %212 = math.exp %211 : vector<8x8xf32>
    %cst_157 = arith.constant dense<0.000000e+00> : vector<8xf32>
    %213 = vector.multi_reduction <add>, %212, %cst_157 [1] : vector<8x8xf32> to vector<8xf32>
    %214 = vector.shape_cast %213 : vector<8xf32> to vector<8x1xf32>
    %215 = tpu.reciprocal %214 {approx = true} : vector<8x1xf32> -> vector<8x1xf32>
    %216 = vector.broadcast %215 : vector<8x1xf32> to vector<8x8xf32>
    %217 = arith.mulf %212, %216 : vector<8x8xf32>
    %cst_158 = arith.constant dense<0.000000e+00> : vector<8x8xf32>
    %218 = tpu.matmul %217, %205, %cst_158 {dimension_numbers = #tpu.dot_dimension_numbers<[1], [0], [0], [1], [0, 0, 1, 1], [], []>} : vector<8x8xf32>, vector<8x8xf32>, vector<8x8xf32> -> vector<8x8xf32>
    %c0_159 = arith.constant 0 : index
    %c0_160 = arith.constant 0 : index
    %c0_161 = arith.constant 0 : index
    %219 = vector.load %arg19[%c0_159, %c0_160, %c0_161] : memref<4x8x32xf32, #tpu.memory_space<vmem>>, vector<1x8x32xf32>
    %220 = vector.shape_cast %219 : vector<1x8x32xf32> to vector<8x32xf32>
    %cst_162 = arith.constant dense<0.000000e+00> : vector<8x32xf32>
    %221 = tpu.matmul %218, %220, %cst_162 {dimension_numbers = #tpu.dot_dimension_numbers<[1], [0], [0], [1], [0, 0, 1, 1], [], []>} : vector<8x8xf32>, vector<8x32xf32>, vector<8x32xf32> -> vector<8x32xf32>
    %c1_163 = arith.constant 1 : index
    %c0_164 = arith.constant 0 : index
    %c0_165 = arith.constant 0 : index
    %222 = vector.load %arg13[%c1_163, %c0_164, %c0_165] : memref<4x32x8xf32, #tpu.memory_space<vmem>>, vector<1x32x8xf32>
    %223 = vector.shape_cast %222 : vector<1x32x8xf32> to vector<32x8xf32>
    %cst_166 = arith.constant dense<0.000000e+00> : vector<8x8xf32>
    %224 = tpu.matmul %184, %223, %cst_166 {dimension_numbers = #tpu.dot_dimension_numbers<[1], [0], [0], [1], [0, 0, 1, 1], [], []>} : vector<8x32xf32>, vector<32x8xf32>, vector<8x8xf32> -> vector<8x8xf32>
    %c1_167 = arith.constant 1 : index
    %c0_168 = arith.constant 0 : index
    %c0_169 = arith.constant 0 : index
    %225 = vector.load %arg14[%c1_167, %c0_168, %c0_169] : memref<4x1x8xf32, #tpu.memory_space<vmem>>, vector<1x1x8xf32>
    %226 = vector.shape_cast %225 : vector<1x1x8xf32> to vector<1x8xf32>
    %227 = vector.broadcast %226 : vector<1x8xf32> to vector<8x8xf32>
    %228 = arith.addf %224, %227 : vector<8x8xf32>
    %c1_170 = arith.constant 1 : index
    %c0_171 = arith.constant 0 : index
    %c0_172 = arith.constant 0 : index
    %229 = vector.load %arg15[%c1_170, %c0_171, %c0_172] : memref<4x32x8xf32, #tpu.memory_space<vmem>>, vector<1x32x8xf32>
    %230 = vector.shape_cast %229 : vector<1x32x8xf32> to vector<32x8xf32>
    %cst_173 = arith.constant dense<0.000000e+00> : vector<8x8xf32>
    %231 = tpu.matmul %3, %230, %cst_173 {dimension_numbers = #tpu.dot_dimension_numbers<[1], [0], [0], [1], [0, 0, 1, 1], [], []>} : vector<8x32xf32>, vector<32x8xf32>, vector<8x8xf32> -> vector<8x8xf32>
    %c1_174 = arith.constant 1 : index
    %c0_175 = arith.constant 0 : index
    %c0_176 = arith.constant 0 : index
    %232 = vector.load %arg16[%c1_174, %c0_175, %c0_176] : memref<4x1x8xf32, #tpu.memory_space<vmem>>, vector<1x1x8xf32>
    %233 = vector.shape_cast %232 : vector<1x1x8xf32> to vector<1x8xf32>
    %234 = vector.broadcast %233 : vector<1x8xf32> to vector<8x8xf32>
    %235 = arith.addf %231, %234 : vector<8x8xf32>
    %c1_177 = arith.constant 1 : index
    %c0_178 = arith.constant 0 : index
    %c0_179 = arith.constant 0 : index
    %236 = vector.load %arg17[%c1_177, %c0_178, %c0_179] : memref<4x32x8xf32, #tpu.memory_space<vmem>>, vector<1x32x8xf32>
    %237 = vector.shape_cast %236 : vector<1x32x8xf32> to vector<32x8xf32>
    %cst_180 = arith.constant dense<0.000000e+00> : vector<8x8xf32>
    %238 = tpu.matmul %3, %237, %cst_180 {dimension_numbers = #tpu.dot_dimension_numbers<[1], [0], [0], [1], [0, 0, 1, 1], [], []>} : vector<8x32xf32>, vector<32x8xf32>, vector<8x8xf32> -> vector<8x8xf32>
    %c1_181 = arith.constant 1 : index
    %c0_182 = arith.constant 0 : index
    %c0_183 = arith.constant 0 : index
    %239 = vector.load %arg18[%c1_181, %c0_182, %c0_183] : memref<4x1x8xf32, #tpu.memory_space<vmem>>, vector<1x1x8xf32>
    %240 = vector.shape_cast %239 : vector<1x1x8xf32> to vector<1x8xf32>
    %241 = vector.broadcast %240 : vector<1x8xf32> to vector<8x8xf32>
    %242 = arith.addf %238, %241 : vector<8x8xf32>
    %cst_184 = arith.constant dense<0.000000e+00> : vector<8x8xf32>
    %243 = tpu.matmul %228, %235, %cst_184 {dimension_numbers = #tpu.dot_dimension_numbers<[1], [1], [0], [0], [0, 0, 1, 0], [], []>} : vector<8x8xf32>, vector<8x8xf32>, vector<8x8xf32> -> vector<8x8xf32>
    %244 = arith.addf %243, %7 : vector<8x8xf32>
    %cst_185 = arith.constant dense<0xFF800000> : vector<8xf32>
    %245 = vector.multi_reduction <maximumf>, %244, %cst_185 [1] : vector<8x8xf32> to vector<8xf32>
    %246 = vector.shape_cast %245 : vector<8xf32> to vector<8x1xf32>
    %247 = vector.broadcast %246 : vector<8x1xf32> to vector<8x8xf32>
    %248 = arith.subf %244, %247 : vector<8x8xf32>
    %249 = math.exp %248 : vector<8x8xf32>
    %cst_186 = arith.constant dense<0.000000e+00> : vector<8xf32>
    %250 = vector.multi_reduction <add>, %249, %cst_186 [1] : vector<8x8xf32> to vector<8xf32>
    %251 = vector.shape_cast %250 : vector<8xf32> to vector<8x1xf32>
    %252 = tpu.reciprocal %251 {approx = true} : vector<8x1xf32> -> vector<8x1xf32>
    %253 = vector.broadcast %252 : vector<8x1xf32> to vector<8x8xf32>
    %254 = arith.mulf %249, %253 : vector<8x8xf32>
    %cst_187 = arith.constant dense<0.000000e+00> : vector<8x8xf32>
    %255 = tpu.matmul %254, %242, %cst_187 {dimension_numbers = #tpu.dot_dimension_numbers<[1], [0], [0], [1], [0, 0, 1, 1], [], []>} : vector<8x8xf32>, vector<8x8xf32>, vector<8x8xf32> -> vector<8x8xf32>
    %c1_188 = arith.constant 1 : index
    %c0_189 = arith.constant 0 : index
    %c0_190 = arith.constant 0 : index
    %256 = vector.load %arg19[%c1_188, %c0_189, %c0_190] : memref<4x8x32xf32, #tpu.memory_space<vmem>>, vector<1x8x32xf32>
    %257 = vector.shape_cast %256 : vector<1x8x32xf32> to vector<8x32xf32>
    %cst_191 = arith.constant dense<0.000000e+00> : vector<8x32xf32>
    %258 = tpu.matmul %255, %257, %cst_191 {dimension_numbers = #tpu.dot_dimension_numbers<[1], [0], [0], [1], [0, 0, 1, 1], [], []>} : vector<8x8xf32>, vector<8x32xf32>, vector<8x32xf32> -> vector<8x32xf32>
    %259 = arith.addf %221, %258 : vector<8x32xf32>
    %c2_192 = arith.constant 2 : index
    %c0_193 = arith.constant 0 : index
    %c0_194 = arith.constant 0 : index
    %260 = vector.load %arg13[%c2_192, %c0_193, %c0_194] : memref<4x32x8xf32, #tpu.memory_space<vmem>>, vector<1x32x8xf32>
    %261 = vector.shape_cast %260 : vector<1x32x8xf32> to vector<32x8xf32>
    %cst_195 = arith.constant dense<0.000000e+00> : vector<8x8xf32>
    %262 = tpu.matmul %184, %261, %cst_195 {dimension_numbers = #tpu.dot_dimension_numbers<[1], [0], [0], [1], [0, 0, 1, 1], [], []>} : vector<8x32xf32>, vector<32x8xf32>, vector<8x8xf32> -> vector<8x8xf32>
    %c2_196 = arith.constant 2 : index
    %c0_197 = arith.constant 0 : index
    %c0_198 = arith.constant 0 : index
    %263 = vector.load %arg14[%c2_196, %c0_197, %c0_198] : memref<4x1x8xf32, #tpu.memory_space<vmem>>, vector<1x1x8xf32>
    %264 = vector.shape_cast %263 : vector<1x1x8xf32> to vector<1x8xf32>
    %265 = vector.broadcast %264 : vector<1x8xf32> to vector<8x8xf32>
    %266 = arith.addf %262, %265 : vector<8x8xf32>
    %c2_199 = arith.constant 2 : index
    %c0_200 = arith.constant 0 : index
    %c0_201 = arith.constant 0 : index
    %267 = vector.load %arg15[%c2_199, %c0_200, %c0_201] : memref<4x32x8xf32, #tpu.memory_space<vmem>>, vector<1x32x8xf32>
    %268 = vector.shape_cast %267 : vector<1x32x8xf32> to vector<32x8xf32>
    %cst_202 = arith.constant dense<0.000000e+00> : vector<8x8xf32>
    %269 = tpu.matmul %3, %268, %cst_202 {dimension_numbers = #tpu.dot_dimension_numbers<[1], [0], [0], [1], [0, 0, 1, 1], [], []>} : vector<8x32xf32>, vector<32x8xf32>, vector<8x8xf32> -> vector<8x8xf32>
    %c2_203 = arith.constant 2 : index
    %c0_204 = arith.constant 0 : index
    %c0_205 = arith.constant 0 : index
    %270 = vector.load %arg16[%c2_203, %c0_204, %c0_205] : memref<4x1x8xf32, #tpu.memory_space<vmem>>, vector<1x1x8xf32>
    %271 = vector.shape_cast %270 : vector<1x1x8xf32> to vector<1x8xf32>
    %272 = vector.broadcast %271 : vector<1x8xf32> to vector<8x8xf32>
    %273 = arith.addf %269, %272 : vector<8x8xf32>
    %c2_206 = arith.constant 2 : index
    %c0_207 = arith.constant 0 : index
    %c0_208 = arith.constant 0 : index
    %274 = vector.load %arg17[%c2_206, %c0_207, %c0_208] : memref<4x32x8xf32, #tpu.memory_space<vmem>>, vector<1x32x8xf32>
    %275 = vector.shape_cast %274 : vector<1x32x8xf32> to vector<32x8xf32>
    %cst_209 = arith.constant dense<0.000000e+00> : vector<8x8xf32>
    %276 = tpu.matmul %3, %275, %cst_209 {dimension_numbers = #tpu.dot_dimension_numbers<[1], [0], [0], [1], [0, 0, 1, 1], [], []>} : vector<8x32xf32>, vector<32x8xf32>, vector<8x8xf32> -> vector<8x8xf32>
    %c2_210 = arith.constant 2 : index
    %c0_211 = arith.constant 0 : index
    %c0_212 = arith.constant 0 : index
    %277 = vector.load %arg18[%c2_210, %c0_211, %c0_212] : memref<4x1x8xf32, #tpu.memory_space<vmem>>, vector<1x1x8xf32>
    %278 = vector.shape_cast %277 : vector<1x1x8xf32> to vector<1x8xf32>
    %279 = vector.broadcast %278 : vector<1x8xf32> to vector<8x8xf32>
    %280 = arith.addf %276, %279 : vector<8x8xf32>
    %cst_213 = arith.constant dense<0.000000e+00> : vector<8x8xf32>
    %281 = tpu.matmul %266, %273, %cst_213 {dimension_numbers = #tpu.dot_dimension_numbers<[1], [1], [0], [0], [0, 0, 1, 0], [], []>} : vector<8x8xf32>, vector<8x8xf32>, vector<8x8xf32> -> vector<8x8xf32>
    %282 = arith.addf %281, %7 : vector<8x8xf32>
    %cst_214 = arith.constant dense<0xFF800000> : vector<8xf32>
    %283 = vector.multi_reduction <maximumf>, %282, %cst_214 [1] : vector<8x8xf32> to vector<8xf32>
    %284 = vector.shape_cast %283 : vector<8xf32> to vector<8x1xf32>
    %285 = vector.broadcast %284 : vector<8x1xf32> to vector<8x8xf32>
    %286 = arith.subf %282, %285 : vector<8x8xf32>
    %287 = math.exp %286 : vector<8x8xf32>
    %cst_215 = arith.constant dense<0.000000e+00> : vector<8xf32>
    %288 = vector.multi_reduction <add>, %287, %cst_215 [1] : vector<8x8xf32> to vector<8xf32>
    %289 = vector.shape_cast %288 : vector<8xf32> to vector<8x1xf32>
    %290 = tpu.reciprocal %289 {approx = true} : vector<8x1xf32> -> vector<8x1xf32>
    %291 = vector.broadcast %290 : vector<8x1xf32> to vector<8x8xf32>
    %292 = arith.mulf %287, %291 : vector<8x8xf32>
    %cst_216 = arith.constant dense<0.000000e+00> : vector<8x8xf32>
    %293 = tpu.matmul %292, %280, %cst_216 {dimension_numbers = #tpu.dot_dimension_numbers<[1], [0], [0], [1], [0, 0, 1, 1], [], []>} : vector<8x8xf32>, vector<8x8xf32>, vector<8x8xf32> -> vector<8x8xf32>
    %c2_217 = arith.constant 2 : index
    %c0_218 = arith.constant 0 : index
    %c0_219 = arith.constant 0 : index
    %294 = vector.load %arg19[%c2_217, %c0_218, %c0_219] : memref<4x8x32xf32, #tpu.memory_space<vmem>>, vector<1x8x32xf32>
    %295 = vector.shape_cast %294 : vector<1x8x32xf32> to vector<8x32xf32>
    %cst_220 = arith.constant dense<0.000000e+00> : vector<8x32xf32>
    %296 = tpu.matmul %293, %295, %cst_220 {dimension_numbers = #tpu.dot_dimension_numbers<[1], [0], [0], [1], [0, 0, 1, 1], [], []>} : vector<8x8xf32>, vector<8x32xf32>, vector<8x32xf32> -> vector<8x32xf32>
    %297 = arith.addf %259, %296 : vector<8x32xf32>
    %c3_221 = arith.constant 3 : index
    %c0_222 = arith.constant 0 : index
    %c0_223 = arith.constant 0 : index
    %298 = vector.load %arg13[%c3_221, %c0_222, %c0_223] : memref<4x32x8xf32, #tpu.memory_space<vmem>>, vector<1x32x8xf32>
    %299 = vector.shape_cast %298 : vector<1x32x8xf32> to vector<32x8xf32>
    %cst_224 = arith.constant dense<0.000000e+00> : vector<8x8xf32>
    %300 = tpu.matmul %184, %299, %cst_224 {dimension_numbers = #tpu.dot_dimension_numbers<[1], [0], [0], [1], [0, 0, 1, 1], [], []>} : vector<8x32xf32>, vector<32x8xf32>, vector<8x8xf32> -> vector<8x8xf32>
    %c3_225 = arith.constant 3 : index
    %c0_226 = arith.constant 0 : index
    %c0_227 = arith.constant 0 : index
    %301 = vector.load %arg14[%c3_225, %c0_226, %c0_227] : memref<4x1x8xf32, #tpu.memory_space<vmem>>, vector<1x1x8xf32>
    %302 = vector.shape_cast %301 : vector<1x1x8xf32> to vector<1x8xf32>
    %303 = vector.broadcast %302 : vector<1x8xf32> to vector<8x8xf32>
    %304 = arith.addf %300, %303 : vector<8x8xf32>
    %c3_228 = arith.constant 3 : index
    %c0_229 = arith.constant 0 : index
    %c0_230 = arith.constant 0 : index
    %305 = vector.load %arg15[%c3_228, %c0_229, %c0_230] : memref<4x32x8xf32, #tpu.memory_space<vmem>>, vector<1x32x8xf32>
    %306 = vector.shape_cast %305 : vector<1x32x8xf32> to vector<32x8xf32>
    %cst_231 = arith.constant dense<0.000000e+00> : vector<8x8xf32>
    %307 = tpu.matmul %3, %306, %cst_231 {dimension_numbers = #tpu.dot_dimension_numbers<[1], [0], [0], [1], [0, 0, 1, 1], [], []>} : vector<8x32xf32>, vector<32x8xf32>, vector<8x8xf32> -> vector<8x8xf32>
    %c3_232 = arith.constant 3 : index
    %c0_233 = arith.constant 0 : index
    %c0_234 = arith.constant 0 : index
    %308 = vector.load %arg16[%c3_232, %c0_233, %c0_234] : memref<4x1x8xf32, #tpu.memory_space<vmem>>, vector<1x1x8xf32>
    %309 = vector.shape_cast %308 : vector<1x1x8xf32> to vector<1x8xf32>
    %310 = vector.broadcast %309 : vector<1x8xf32> to vector<8x8xf32>
    %311 = arith.addf %307, %310 : vector<8x8xf32>
    %c3_235 = arith.constant 3 : index
    %c0_236 = arith.constant 0 : index
    %c0_237 = arith.constant 0 : index
    %312 = vector.load %arg17[%c3_235, %c0_236, %c0_237] : memref<4x32x8xf32, #tpu.memory_space<vmem>>, vector<1x32x8xf32>
    %313 = vector.shape_cast %312 : vector<1x32x8xf32> to vector<32x8xf32>
    %cst_238 = arith.constant dense<0.000000e+00> : vector<8x8xf32>
    %314 = tpu.matmul %3, %313, %cst_238 {dimension_numbers = #tpu.dot_dimension_numbers<[1], [0], [0], [1], [0, 0, 1, 1], [], []>} : vector<8x32xf32>, vector<32x8xf32>, vector<8x8xf32> -> vector<8x8xf32>
    %c3_239 = arith.constant 3 : index
    %c0_240 = arith.constant 0 : index
    %c0_241 = arith.constant 0 : index
    %315 = vector.load %arg18[%c3_239, %c0_240, %c0_241] : memref<4x1x8xf32, #tpu.memory_space<vmem>>, vector<1x1x8xf32>
    %316 = vector.shape_cast %315 : vector<1x1x8xf32> to vector<1x8xf32>
    %317 = vector.broadcast %316 : vector<1x8xf32> to vector<8x8xf32>
    %318 = arith.addf %314, %317 : vector<8x8xf32>
    %cst_242 = arith.constant dense<0.000000e+00> : vector<8x8xf32>
    %319 = tpu.matmul %304, %311, %cst_242 {dimension_numbers = #tpu.dot_dimension_numbers<[1], [1], [0], [0], [0, 0, 1, 0], [], []>} : vector<8x8xf32>, vector<8x8xf32>, vector<8x8xf32> -> vector<8x8xf32>
    %320 = arith.addf %319, %7 : vector<8x8xf32>
    %cst_243 = arith.constant dense<0xFF800000> : vector<8xf32>
    %321 = vector.multi_reduction <maximumf>, %320, %cst_243 [1] : vector<8x8xf32> to vector<8xf32>
    %322 = vector.shape_cast %321 : vector<8xf32> to vector<8x1xf32>
    %323 = vector.broadcast %322 : vector<8x1xf32> to vector<8x8xf32>
    %324 = arith.subf %320, %323 : vector<8x8xf32>
    %325 = math.exp %324 : vector<8x8xf32>
    %cst_244 = arith.constant dense<0.000000e+00> : vector<8xf32>
    %326 = vector.multi_reduction <add>, %325, %cst_244 [1] : vector<8x8xf32> to vector<8xf32>
    %327 = vector.shape_cast %326 : vector<8xf32> to vector<8x1xf32>
    %328 = tpu.reciprocal %327 {approx = true} : vector<8x1xf32> -> vector<8x1xf32>
    %329 = vector.broadcast %328 : vector<8x1xf32> to vector<8x8xf32>
    %330 = arith.mulf %325, %329 : vector<8x8xf32>
    %cst_245 = arith.constant dense<0.000000e+00> : vector<8x8xf32>
    %331 = tpu.matmul %330, %318, %cst_245 {dimension_numbers = #tpu.dot_dimension_numbers<[1], [0], [0], [1], [0, 0, 1, 1], [], []>} : vector<8x8xf32>, vector<8x8xf32>, vector<8x8xf32> -> vector<8x8xf32>
    %c3_246 = arith.constant 3 : index
    %c0_247 = arith.constant 0 : index
    %c0_248 = arith.constant 0 : index
    %332 = vector.load %arg19[%c3_246, %c0_247, %c0_248] : memref<4x8x32xf32, #tpu.memory_space<vmem>>, vector<1x8x32xf32>
    %333 = vector.shape_cast %332 : vector<1x8x32xf32> to vector<8x32xf32>
    %cst_249 = arith.constant dense<0.000000e+00> : vector<8x32xf32>
    %334 = tpu.matmul %331, %333, %cst_249 {dimension_numbers = #tpu.dot_dimension_numbers<[1], [0], [0], [1], [0, 0, 1, 1], [], []>} : vector<8x8xf32>, vector<8x32xf32>, vector<8x32xf32> -> vector<8x32xf32>
    %335 = arith.addf %297, %334 : vector<8x32xf32>
    %c0_250 = arith.constant 0 : index
    %c0_251 = arith.constant 0 : index
    %336 = vector.load %arg20[%c0_250, %c0_251] : memref<1x32xf32, #tpu.memory_space<vmem>>, vector<1x32xf32>
    %337 = vector.broadcast %336 : vector<1x32xf32> to vector<8x32xf32>
    %338 = arith.addf %335, %337 : vector<8x32xf32>
    %339 = arith.addf %338, %184 : vector<8x32xf32>
    %cst_252 = arith.constant dense<0.000000e+00> : vector<8xf32>
    %340 = vector.multi_reduction <add>, %339, %cst_252 [1] : vector<8x32xf32> to vector<8xf32>
    %341 = vector.shape_cast %340 : vector<8xf32> to vector<8x1xf32>
    %cst_253 = arith.constant 3.200000e+01 : f32
    %342 = vector.broadcast %cst_253 : f32 to vector<8x1xf32>
    %343 = arith.divf %341, %342 : vector<8x1xf32>
    %344 = vector.broadcast %343 : vector<8x1xf32> to vector<8x32xf32>
    %345 = arith.subf %339, %344 : vector<8x32xf32>
    %346 = arith.mulf %345, %345 : vector<8x32xf32>
    %cst_254 = arith.constant dense<0.000000e+00> : vector<8xf32>
    %347 = vector.multi_reduction <add>, %346, %cst_254 [1] : vector<8x32xf32> to vector<8xf32>
    %348 = vector.shape_cast %347 : vector<8xf32> to vector<8x1xf32>
    %cst_255 = arith.constant 3.200000e+01 : f32
    %349 = vector.broadcast %cst_255 : f32 to vector<8x1xf32>
    %350 = arith.divf %348, %349 : vector<8x1xf32>
    %cst_256 = arith.constant 9.99999974E-6 : f32
    %351 = vector.broadcast %cst_256 : f32 to vector<8x1xf32>
    %352 = arith.addf %350, %351 : vector<8x1xf32>
    %353 = math.rsqrt %352 : vector<8x1xf32>
    %354 = vector.broadcast %353 : vector<8x1xf32> to vector<8x32xf32>
    %355 = arith.mulf %345, %354 : vector<8x32xf32>
    %356 = vector.broadcast %8 : vector<1x32xf32> to vector<8x32xf32>
    %357 = arith.mulf %355, %356 : vector<8x32xf32>
    %358 = vector.broadcast %9 : vector<1x32xf32> to vector<8x32xf32>
    %359 = arith.addf %357, %358 : vector<8x32xf32>
    %c0_257 = arith.constant 0 : index
    %c0_258 = arith.constant 0 : index
    %360 = vector.load %arg21[%c0_257, %c0_258] : memref<32x64xf32, #tpu.memory_space<vmem>>, vector<32x64xf32>
    %cst_259 = arith.constant dense<0.000000e+00> : vector<8x64xf32>
    %361 = tpu.matmul %359, %360, %cst_259 {dimension_numbers = #tpu.dot_dimension_numbers<[1], [0], [0], [1], [0, 0, 1, 1], [], []>} : vector<8x32xf32>, vector<32x64xf32>, vector<8x64xf32> -> vector<8x64xf32>
    %c0_260 = arith.constant 0 : index
    %c0_261 = arith.constant 0 : index
    %362 = vector.load %arg22[%c0_260, %c0_261] : memref<1x64xf32, #tpu.memory_space<vmem>>, vector<1x64xf32>
    %363 = vector.broadcast %362 : vector<1x64xf32> to vector<8x64xf32>
    %364 = arith.addf %361, %363 : vector<8x64xf32>
    %cst_262 = arith.constant 0.000000e+00 : f32
    %365 = vector.broadcast %cst_262 : f32 to vector<8x64xf32>
    %366 = arith.maximumf %364, %365 : vector<8x64xf32>
    %c0_263 = arith.constant 0 : index
    %c0_264 = arith.constant 0 : index
    %367 = vector.load %arg23[%c0_263, %c0_264] : memref<64x32xf32, #tpu.memory_space<vmem>>, vector<64x32xf32>
    %cst_265 = arith.constant dense<0.000000e+00> : vector<8x32xf32>
    %368 = tpu.matmul %366, %367, %cst_265 {dimension_numbers = #tpu.dot_dimension_numbers<[1], [0], [0], [1], [0, 0, 1, 1], [], []>} : vector<8x64xf32>, vector<64x32xf32>, vector<8x32xf32> -> vector<8x32xf32>
    %c0_266 = arith.constant 0 : index
    %c0_267 = arith.constant 0 : index
    %369 = vector.load %arg24[%c0_266, %c0_267] : memref<1x32xf32, #tpu.memory_space<vmem>>, vector<1x32xf32>
    %370 = vector.broadcast %369 : vector<1x32xf32> to vector<8x32xf32>
    %371 = arith.addf %368, %370 : vector<8x32xf32>
    %372 = arith.addf %371, %359 : vector<8x32xf32>
    %cst_268 = arith.constant dense<0.000000e+00> : vector<8xf32>
    %373 = vector.multi_reduction <add>, %372, %cst_268 [1] : vector<8x32xf32> to vector<8xf32>
    %374 = vector.shape_cast %373 : vector<8xf32> to vector<8x1xf32>
    %cst_269 = arith.constant 3.200000e+01 : f32
    %375 = vector.broadcast %cst_269 : f32 to vector<8x1xf32>
    %376 = arith.divf %374, %375 : vector<8x1xf32>
    %377 = vector.broadcast %376 : vector<8x1xf32> to vector<8x32xf32>
    %378 = arith.subf %372, %377 : vector<8x32xf32>
    %379 = arith.mulf %378, %378 : vector<8x32xf32>
    %cst_270 = arith.constant dense<0.000000e+00> : vector<8xf32>
    %380 = vector.multi_reduction <add>, %379, %cst_270 [1] : vector<8x32xf32> to vector<8xf32>
    %381 = vector.shape_cast %380 : vector<8xf32> to vector<8x1xf32>
    %cst_271 = arith.constant 3.200000e+01 : f32
    %382 = vector.broadcast %cst_271 : f32 to vector<8x1xf32>
    %383 = arith.divf %381, %382 : vector<8x1xf32>
    %cst_272 = arith.constant 9.99999974E-6 : f32
    %384 = vector.broadcast %cst_272 : f32 to vector<8x1xf32>
    %385 = arith.addf %383, %384 : vector<8x1xf32>
    %386 = math.rsqrt %385 : vector<8x1xf32>
    %387 = vector.broadcast %386 : vector<8x1xf32> to vector<8x32xf32>
    %388 = arith.mulf %378, %387 : vector<8x32xf32>
    %389 = vector.broadcast %8 : vector<1x32xf32> to vector<8x32xf32>
    %390 = arith.mulf %388, %389 : vector<8x32xf32>
    %391 = vector.broadcast %9 : vector<1x32xf32> to vector<8x32xf32>
    %392 = arith.addf %390, %391 : vector<8x32xf32>
    %c0_273 = arith.constant 0 : index
    %c0_274 = arith.constant 0 : index
    %c0_275 = arith.constant 0 : index
    %393 = vector.load %arg27[%c0_273, %c0_274, %c0_275] : memref<1x8x32xf32, #tpu.memory_space<vmem>>, vector<1x8x32xf32>
    %394 = vector.shape_cast %393 : vector<1x8x32xf32> to vector<8x32xf32>
    %395 = vector.shape_cast %392 : vector<8x32xf32> to vector<1x8x32xf32>
    tpu.vector_store %arg27[%c0_273, %c0_274, %c0_275], %395 {strides = array<i32>} : memref<1x8x32xf32, #tpu.memory_space<vmem>>, vector<1x8x32xf32>,
    return
  }
  func.func @transform_0(%arg0: i32) -> (i32, i32, i32) {
    %c0_i32 = arith.constant 0 : i32
    %c0_i32_0 = arith.constant 0 : i32
    %c0_i32_1 = arith.constant 0 : i32
    return %arg0, %c0_i32, %c0_i32_0 : i32, i32, i32
  }
  func.func @transform_1(%arg0: i32) -> (i32, i32, i32) {
    %c0_i32 = arith.constant 0 : i32
    %c0_i32_0 = arith.constant 0 : i32
    %c0_i32_1 = arith.constant 0 : i32
    return %arg0, %c0_i32, %c0_i32_0 : i32, i32, i32
  }
  func.func @transform_2(%arg0: i32) -> (i32, i32, i32) {
    %c0_i32 = arith.constant 0 : i32
    %c0_i32_0 = arith.constant 0 : i32
    %c0_i32_1 = arith.constant 0 : i32
    return %arg0, %c0_i32, %c0_i32_0 : i32, i32, i32
  }
  func.func @transform_3(%arg0: i32) -> (i32, i32, i32) {
    %c0_i32 = arith.constant 0 : i32
    %c0_i32_0 = arith.constant 0 : i32
    %c0_i32_1 = arith.constant 0 : i32
    return %arg0, %c0_i32, %c0_i32_0 : i32, i32, i32
  }
  func.func @transform_4(%arg0: i32) -> (i32, i32, i32) {
    %c0_i32 = arith.constant 0 : i32
    %c0_i32_0 = arith.constant 0 : i32
    %c0_i32_1 = arith.constant 0 : i32
    %c0_i32_2 = arith.constant 0 : i32
    return %c0_i32, %c0_i32_0, %c0_i32_1 : i32, i32, i32
  }
  func.func @transform_5(%arg0: i32) -> (i32, i32, i32) {
    %c0_i32 = arith.constant 0 : i32
    %c0_i32_0 = arith.constant 0 : i32
    %c0_i32_1 = arith.constant 0 : i32
    %c0_i32_2 = arith.constant 0 : i32
    return %c0_i32, %c0_i32_0, %c0_i32_1 : i32, i32, i32
  }
  func.func @transform_6(%arg0: i32) -> (i32, i32, i32) {
    %c0_i32 = arith.constant 0 : i32
    %c0_i32_0 = arith.constant 0 : i32
    %c0_i32_1 = arith.constant 0 : i32
    %c0_i32_2 = arith.constant 0 : i32
    return %c0_i32, %c0_i32_0, %c0_i32_1 : i32, i32, i32
  }
  func.func @transform_7(%arg0: i32) -> (i32, i32, i32) {
    %c0_i32 = arith.constant 0 : i32
    %c0_i32_0 = arith.constant 0 : i32
    %c0_i32_1 = arith.constant 0 : i32
    %c0_i32_2 = arith.constant 0 : i32
    return %c0_i32, %c0_i32_0, %c0_i32_1 : i32, i32, i32
  }
  func.func @transform_8(%arg0: i32) -> (i32, i32, i32) {
    %c0_i32 = arith.constant 0 : i32
    %c0_i32_0 = arith.constant 0 : i32
    %c0_i32_1 = arith.constant 0 : i32
    %c0_i32_2 = arith.constant 0 : i32
    return %c0_i32, %c0_i32_0, %c0_i32_1 : i32, i32, i32
  }
  func.func @transform_9(%arg0: i32) -> (i32, i32, i32) {
    %c0_i32 = arith.constant 0 : i32
    %c0_i32_0 = arith.constant 0 : i32
    %c0_i32_1 = arith.constant 0 : i32
    %c0_i32_2 = arith.constant 0 : i32
    return %c0_i32, %c0_i32_0, %c0_i32_1 : i32, i32, i32
  }
  func.func @transform_10(%arg0: i32) -> (i32, i32, i32) {
    %c0_i32 = arith.constant 0 : i32
    %c0_i32_0 = arith.constant 0 : i32
    %c0_i32_1 = arith.constant 0 : i32
    %c0_i32_2 = arith.constant 0 : i32
    return %c0_i32, %c0_i32_0, %c0_i32_1 : i32, i32, i32
  }
  func.func @transform_11(%arg0: i32) -> (i32, i32) {
    %c0_i32 = arith.constant 0 : i32
    %c0_i32_0 = arith.constant 0 : i32
    %c0_i32_1 = arith.constant 0 : i32
    return %c0_i32, %c0_i32_0 : i32, i32
  }
  func.func @transform_12(%arg0: i32) -> (i32, i32, i32) {
    %c0_i32 = arith.constant 0 : i32
    %c0_i32_0 = arith.constant 0 : i32
    %c0_i32_1 = arith.constant 0 : i32
    %c0_i32_2 = arith.constant 0 : i32
    return %c0_i32, %c0_i32_0, %c0_i32_1 : i32, i32, i32
  }
  func.func @transform_13(%arg0: i32) -> (i32, i32, i32) {
    %c0_i32 = arith.constant 0 : i32
    %c0_i32_0 = arith.constant 0 : i32
    %c0_i32_1 = arith.constant 0 : i32
    %c0_i32_2 = arith.constant 0 : i32
    return %c0_i32, %c0_i32_0, %c0_i32_1 : i32, i32, i32
  }
  func.func @transform_14(%arg0: i32) -> (i32, i32, i32) {
    %c0_i32 = arith.constant 0 : i32
    %c0_i32_0 = arith.constant 0 : i32
    %c0_i32_1 = arith.constant 0 : i32
    %c0_i32_2 = arith.constant 0 : i32
    return %c0_i32, %c0_i32_0, %c0_i32_1 : i32, i32, i32
  }
  func.func @transform_15(%arg0: i32) -> (i32, i32, i32) {
    %c0_i32 = arith.constant 0 : i32
    %c0_i32_0 = arith.constant 0 : i32
    %c0_i32_1 = arith.constant 0 : i32
    %c0_i32_2 = arith.constant 0 : i32
    return %c0_i32, %c0_i32_0, %c0_i32_1 : i32, i32, i32
  }
  func.func @transform_16(%arg0: i32) -> (i32, i32, i32) {
    %c0_i32 = arith.constant 0 : i32
    %c0_i32_0 = arith.constant 0 : i32
    %c0_i32_1 = arith.constant 0 : i32
    %c0_i32_2 = arith.constant 0 : i32
    return %c0_i32, %c0_i32_0, %c0_i32_1 : i32, i32, i32
  }
  func.func @transform_17(%arg0: i32) -> (i32, i32, i32) {
    %c0_i32 = arith.constant 0 : i32
    %c0_i32_0 = arith.constant 0 : i32
    %c0_i32_1 = arith.constant 0 : i32
    %c0_i32_2 = arith.constant 0 : i32
    return %c0_i32, %c0_i32_0, %c0_i32_1 : i32, i32, i32
  }
  func.func @transform_18(%arg0: i32) -> (i32, i32, i32) {
    %c0_i32 = arith.constant 0 : i32
    %c0_i32_0 = arith.constant 0 : i32
    %c0_i32_1 = arith.constant 0 : i32
    %c0_i32_2 = arith.constant 0 : i32
    return %c0_i32, %c0_i32_0, %c0_i32_1 : i32, i32, i32
  }
  func.func @transform_19(%arg0: i32) -> (i32, i32) {
    %c0_i32 = arith.constant 0 : i32
    %c0_i32_0 = arith.constant 0 : i32
    %c0_i32_1 = arith.constant 0 : i32
    return %c0_i32, %c0_i32_0 : i32, i32
  }
  func.func @transform_20(%arg0: i32) -> (i32, i32) {
    %c0_i32 = arith.constant 0 : i32
    %c0_i32_0 = arith.constant 0 : i32
    %c0_i32_1 = arith.constant 0 : i32
    return %c0_i32, %c0_i32_0 : i32, i32
  }
  func.func @transform_21(%arg0: i32) -> (i32, i32) {
    %c0_i32 = arith.constant 0 : i32
    %c0_i32_0 = arith.constant 0 : i32
    %c0_i32_1 = arith.constant 0 : i32
    return %c0_i32, %c0_i32_0 : i32, i32
  }
  func.func @transform_22(%arg0: i32) -> (i32, i32) {
    %c0_i32 = arith.constant 0 : i32
    %c0_i32_0 = arith.constant 0 : i32
    %c0_i32_1 = arith.constant 0 : i32
    return %c0_i32, %c0_i32_0 : i32, i32
  }
  func.func @transform_23(%arg0: i32) -> (i32, i32) {
    %c0_i32 = arith.constant 0 : i32
    %c0_i32_0 = arith.constant 0 : i32
    %c0_i32_1 = arith.constant 0 : i32
    return %c0_i32, %c0_i32_0 : i32, i32
  }
  func.func @transform_24(%arg0: i32) -> (i32, i32) {
    %c0_i32 = arith.constant 0 : i32
    %c0_i32_0 = arith.constant 0 : i32
    %c0_i32_1 = arith.constant 0 : i32
    return %c0_i32, %c0_i32_0 : i32, i32
  }
  func.func @transform_25(%arg0: i32) -> (i32, i32) {
    %c0_i32 = arith.constant 0 : i32
    %c0_i32_0 = arith.constant 0 : i32
    %c0_i32_1 = arith.constant 0 : i32
    return %c0_i32, %c0_i32_0 : i32, i32
  }
  func.func @transform_26(%arg0: i32) -> (i32, i32, i32) {
    %c0_i32 = arith.constant 0 : i32
    %c0_i32_0 = arith.constant 0 : i32
    %c0_i32_1 = arith.constant 0 : i32
    return %arg0, %c0_i32, %c0_i32_0 : i32, i32, i32
  }
}

</mosaic_0001>

<llo_original>
// kernel: tpu_custom_call.1
$region0: #{tpu_custom_call.1}
  #allocation0 [shape = 'u32[]', space=smem, size = 0x4, offset = 0x4, fixed_abs, tag = 'smem constant byte address 0x4 - core index']
  #allocation1 [shape = 'u32[144,128]{1,0:T(1,128)}', space=vmem, size = 0x12000, scoped, tag = 'internal scratch']
  %s0 = inlined_call_operand.vmem [shape: f32[2,8,32], index: 0, kind: input, shape index: {}]
  %s1 = inlined_call_operand.vmem [shape: f32[2,8,32], index: 1, kind: input, shape index: {}]
  %s2 = inlined_call_operand.vmem [shape: f32[2,8,8], index: 2, kind: input, shape index: {}]
  %s3 = inlined_call_operand.vmem [shape: f32[2,8,8], index: 3, kind: input, shape index: {}]
  %s4 = inlined_call_operand.vmem [shape: f32[4,32,8], index: 4, kind: input, shape index: {}]
  %s5 = inlined_call_operand.vmem [shape: f32[4,1,8], index: 5, kind: input, shape index: {}]
  %s6 = inlined_call_operand.vmem [shape: f32[4,32,8], index: 6, kind: input, shape index: {}]
  %s7 = inlined_call_operand.vmem [shape: f32[4,1,8], index: 7, kind: input, shape index: {}]
  %s8 = inlined_call_operand.vmem [shape: f32[4,32,8], index: 8, kind: input, shape index: {}]
  %s9 = inlined_call_operand.vmem [shape: f32[4,1,8], index: 9, kind: input, shape index: {}]
  %s10 = inlined_call_operand.vmem [shape: f32[4,8,32], index: 10, kind: input, shape index: {}]
  %s11 = inlined_call_operand.vmem [shape: f32[1,32], index: 11, kind: input, shape index: {}]
  %s12 = inlined_call_operand.vmem [shape: f32[4,32,8], index: 12, kind: input, shape index: {}]
  %s13 = inlined_call_operand.vmem [shape: f32[4,1,8], index: 13, kind: input, shape index: {}]
  %s14 = inlined_call_operand.vmem [shape: f32[4,32,8], index: 14, kind: input, shape index: {}]
  %s15 = inlined_call_operand.vmem [shape: f32[4,1,8], index: 15, kind: input, shape index: {}]
  %s16 = inlined_call_operand.vmem [shape: f32[4,32,8], index: 16, kind: input, shape index: {}]
  %s17 = inlined_call_operand.vmem [shape: f32[4,1,8], index: 17, kind: input, shape index: {}]
  %s18 = inlined_call_operand.vmem [shape: f32[4,8,32], index: 18, kind: input, shape index: {}]
  %s19 = inlined_call_operand.vmem [shape: f32[1,32], index: 19, kind: input, shape index: {}]
  %s20 = inlined_call_operand.vmem [shape: f32[32,64], index: 20, kind: input, shape index: {}]
  %s21 = inlined_call_operand.vmem [shape: f32[1,64], index: 21, kind: input, shape index: {}]
  %s22 = inlined_call_operand.vmem [shape: f32[64,32], index: 22, kind: input, shape index: {}]
  %s23 = inlined_call_operand.vmem [shape: f32[1,32], index: 23, kind: input, shape index: {}]
  %s24 = inlined_call_operand.vmem [shape: f32[1,32], index: 24, kind: input, shape index: {}]
  %s25 = inlined_call_operand.vmem [shape: f32[1,32], index: 25, kind: input, shape index: {}]
  %s26 = inlined_call_operand.hbm [shape: f32[2,8,32], index: 26, kind: output, shape index: {}]
  %s27 = sld [smem:[#allocation0]]
  $region137: #{tpu_custom_call.1} parent=0
    _
  %s29 = ssub.s32 1, %s27
  %s30 = scalar_select 0, %s29, %s27
  $region1: #{tpu_custom_call.1} parent=0
    #allocation2 [shape = 'u8[8192]{0}', space=vmem, size = 0x2000, scoped, tag = 'output window, operand 0']
    #allocation3 [shape = 's32[2]{0}', space=sflag, size = 0x8, scoped, tag = 'scoped memory for tpu_custom_call.1']
    %31 = vsyncpa [#allocation3], 0
    %s32 = scalar_lea.sflag [#allocation3], 1
    %33 = vsyncpa %s32, 0
    loop: start=0, step=1, limit=4
    $region2: #{tpu_custom_call.1} parent=1 // loop_pre_header
      _
    $region3: #{tpu_custom_call.1} parent=1 // loop_header
      %s35 = sphi 0, %s39
      %p36 = scmp.ge.s32.totalorder %s35, 4
      %s45 = sphi 0, %s47
      %s48 = sphi 0, %s45
      %s49 = sphi 0, %s48
      %s65 = sphi 0, %s49
      %s71 = sphi 0, %s73
      %s74 = sphi 0, %s71
      %s75 = sphi 0, %s74
      %s91 = sphi 0, %s75
      %s97 = sphi 0, %s99
      %s100 = sphi 0, %s97
      %s101 = sphi 0, %s100
      %s117 = sphi 0, %s101
      %s123 = sphi 0, %s125
      %s126 = sphi 0, %s123
      %s127 = sphi 0, %s126
      %s143 = sphi 0, %s127
      %s147 = sphi 0, %s147
      %s149 = sphi 0, %s147
      %s150 = sphi 0, %s149
      %s164 = sphi 0, %s150
      %s168 = sphi 0, %s168
      %s170 = sphi 0, %s168
      %s171 = sphi 0, %s170
      %s185 = sphi 0, %s171
      %s189 = sphi 0, %s189
      %s191 = sphi 0, %s189
      %s192 = sphi 0, %s191
      %s206 = sphi 0, %s192
      %s210 = sphi 0, %s210
      %s212 = sphi 0, %s210
      %s213 = sphi 0, %s212
      %s227 = sphi 0, %s213
      %s231 = sphi 0, %s231
      %s233 = sphi 0, %s231
      %s234 = sphi 0, %s233
      %s248 = sphi 0, %s234
      %s252 = sphi 0, %s252
      %s254 = sphi 0, %s252
      %s255 = sphi 0, %s254
      %s269 = sphi 0, %s255
      %s273 = sphi 0, %s273
      %s275 = sphi 0, %s273
      %s276 = sphi 0, %s275
      %s290 = sphi 0, %s276
      %s294 = sphi 0, %s294
      %s296 = sphi 0, %s294
      %s297 = sphi 0, %s296
      %s311 = sphi 0, %s297
      %s315 = sphi 0, %s315
      %s317 = sphi 0, %s315
      %s318 = sphi 0, %s317
      %s332 = sphi 0, %s318
      %s336 = sphi 0, %s336
      %s338 = sphi 0, %s336
      %s339 = sphi 0, %s338
      %s353 = sphi 0, %s339
      %s357 = sphi 0, %s357
      %s359 = sphi 0, %s357
      %s360 = sphi 0, %s359
      %s374 = sphi 0, %s360
      %s378 = sphi 0, %s378
      %s380 = sphi 0, %s378
      %s381 = sphi 0, %s380
      %s395 = sphi 0, %s381
      %s399 = sphi 0, %s399
      %s401 = sphi 0, %s399
      %s402 = sphi 0, %s401
      %s416 = sphi 0, %s402
      %s420 = sphi 0, %s420
      %s422 = sphi 0, %s420
      %s423 = sphi 0, %s422
      %s437 = sphi 0, %s423
      %s441 = sphi 0, %s441
      %s443 = sphi 0, %s441
      %s444 = sphi 0, %s443
      %s458 = sphi 0, %s444
      %s462 = sphi 0, %s462
      %s464 = sphi 0, %s462
      %s465 = sphi 0, %s464
      %s479 = sphi 0, %s465
      %s483 = sphi 0, %s483
      %s485 = sphi 0, %s483
      %s486 = sphi 0, %s485
      %s500 = sphi 0, %s486
      %s504 = sphi 0, %s504
      %s506 = sphi 0, %s504
      %s507 = sphi 0, %s506
      %s521 = sphi 0, %s507
      %s525 = sphi 0, %s525
      %s527 = sphi 0, %s525
      %s528 = sphi 0, %s527
      %s542 = sphi 0, %s528
      %s546 = sphi 0, %s546
      %s548 = sphi 0, %s546
      %s549 = sphi 0, %s548
      %s563 = sphi 0, %s549
      %s567 = sphi 0, %s567
      %s569 = sphi 0, %s567
      %s570 = sphi 0, %s569
      %s584 = sphi 0, %s570
      %s588 = sphi 0, %s588
      %s590 = sphi 0, %s588
      %s591 = sphi 0, %s590
      %s605 = sphi 0, %s591
      %s611 = sphi 0, %s613
      %s614 = sphi 0, %s611
      %s615 = sphi 0, %s614
      %s631 = sphi 0, %s615
    $region4: #{tpu_custom_call.1} parent=1 // loop_header_branch
      %38 = sbr.rel (%p36) target = $region8
    $region5: #{tpu_custom_call.1} parent=1 // loop_body
      %s40 = ssub.s32 %s35, 1
      %s41 = ssub.s32 %s35, 2
      %s42 = sadd.s32 %s35, 1
      %s43 = ssub.s32 %s35, %s42
      %p44 = scmp.eq.s32.totalorder %s43, 0
      %s46 = sadd.s32 %s45, 1
      %s47 = scalar_select %p44, %s45, %s46
      %p50 = pneg %p44
      %p51 = scmp.eq.s32.totalorder %s35, 1
      %p52 = por %p50, %p51
      %p53 = scmp.ne.s32.totalorder %s45, %s48
      %p54 = scmp.eq.s32.totalorder %s35, 0
      %p55 = por %p53, %p54
      %p56 = scmp.ne.s32.totalorder %s45, %s48
      %p57 = scmp.eq.s32.totalorder %s40, 1
      %p58 = por %p56, %p57
      %p59 = scmp.ne.s32.totalorder %s48, %s49
      %p60 = scmp.eq.s32.totalorder %s40, 0
      %p61 = por %p59, %p60
      %p62 = scmp.ne.s32.totalorder %s48, %s49
      %p63 = scmp.eq.s32.totalorder %s41, 1
      %p64 = por %p62, %p63
      %p66 = scmp.ne.s32.totalorder %s49, %s65
      %p67 = scmp.eq.s32.totalorder %s41, 0
      %p68 = por %p66, %p67
      %s69 = ssub.s32 %s35, %s42
      %p70 = scmp.eq.s32.totalorder %s69, 0
      %s72 = sadd.s32 %s71, 1
      %s73 = scalar_select %p70, %s71, %s72
      %p76 = pneg %p70
      %p77 = scmp.eq.s32.totalorder %s35, 1
      %p78 = por %p76, %p77
      %p79 = scmp.ne.s32.totalorder %s71, %s74
      %p80 = scmp.eq.s32.totalorder %s35, 0
      %p81 = por %p79, %p80
      %p82 = scmp.ne.s32.totalorder %s71, %s74
      %p83 = scmp.eq.s32.totalorder %s40, 1
      %p84 = por %p82, %p83
      %p85 = scmp.ne.s32.totalorder %s74, %s75
      %p86 = scmp.eq.s32.totalorder %s40, 0
      %p87 = por %p85, %p86
      %p88 = scmp.ne.s32.totalorder %s74, %s75
      %p89 = scmp.eq.s32.totalorder %s41, 1
      %p90 = por %p88, %p89
      %p92 = scmp.ne.s32.totalorder %s75, %s91
      %p93 = scmp.eq.s32.totalorder %s41, 0
      %p94 = por %p92, %p93
      %s95 = ssub.s32 %s35, %s42
      %p96 = scmp.eq.s32.totalorder %s95, 0
      %s98 = sadd.s32 %s97, 1
      %s99 = scalar_select %p96, %s97, %s98
      %p102 = pneg %p96
      %p103 = scmp.eq.s32.totalorder %s35, 1
      %p104 = por %p102, %p103
      %p105 = scmp.ne.s32.totalorder %s97, %s100
      %p106 = scmp.eq.s32.totalorder %s35, 0
      %p107 = por %p105, %p106
      %p108 = scmp.ne.s32.totalorder %s97, %s100
      %p109 = scmp.eq.s32.totalorder %s40, 1
      %p110 = por %p108, %p109
      %p111 = scmp.ne.s32.totalorder %s100, %s101
      %p112 = scmp.eq.s32.totalorder %s40, 0
      %p113 = por %p111, %p112
      %p114 = scmp.ne.s32.totalorder %s100, %s101
      %p115 = scmp.eq.s32.totalorder %s41, 1
      %p116 = por %p114, %p115
      %p118 = scmp.ne.s32.totalorder %s101, %s117
      %p119 = scmp.eq.s32.totalorder %s41, 0
      %p120 = por %p118, %p119
      %s121 = ssub.s32 %s35, %s42
      %p122 = scmp.eq.s32.totalorder %s121, 0
      %s124 = sadd.s32 %s123, 1
      %s125 = scalar_select %p122, %s123, %s124
      %p128 = pneg %p122
      %p129 = scmp.eq.s32.totalorder %s35, 1
      %p130 = por %p128, %p129
      %p131 = scmp.ne.s32.totalorder %s123, %s126
      %p132 = scmp.eq.s32.totalorder %s35, 0
      %p133 = por %p131, %p132
      %p134 = scmp.ne.s32.totalorder %s123, %s126
      %p135 = scmp.eq.s32.totalorder %s40, 1
      %p136 = por %p134, %p135
      %p137 = scmp.ne.s32.totalorder %s126, %s127
      %p138 = scmp.eq.s32.totalorder %s40, 0
      %p139 = por %p137, %p138
      %p140 = scmp.ne.s32.totalorder %s126, %s127
      %p141 = scmp.eq.s32.totalorder %s41, 1
      %p142 = por %p140, %p141
      %p144 = scmp.ne.s32.totalorder %s127, %s143
      %p145 = scmp.eq.s32.totalorder %s41, 0
      %p146 = por %p144, %p145
      %s148 = sadd.s32 %s147, 1
      %p151 = scmp.eq.s32.totalorder %s35, 1
      %p152 = scmp.ne.s32.totalorder %s147, %s149
      %p153 = scmp.eq.s32.totalorder %s35, 0
      %p154 = por %p152, %p153
      %p155 = scmp.ne.s32.totalorder %s147, %s149
      %p156 = scmp.eq.s32.totalorder %s40, 1
      %p157 = por %p155, %p156
      %p158 = scmp.ne.s32.totalorder %s149, %s150
      %p159 = scmp.eq.s32.totalorder %s40, 0
      %p160 = por %p158, %p159
      %p161 = scmp.ne.s32.totalorder %s149, %s150
      %p162 = scmp.eq.s32.totalorder %s41, 1
      %p163 = por %p161, %p162
      %p165 = scmp.ne.s32.totalorder %s150, %s164
      %p166 = scmp.eq.s32.totalorder %s41, 0
      %p167 = por %p165, %p166
      %s169 = sadd.s32 %s168, 1
      %p172 = scmp.eq.s32.totalorder %s35, 1
      %p173 = scmp.ne.s32.totalorder %s168, %s170
      %p174 = scmp.eq.s32.totalorder %s35, 0
      %p175 = por %p173, %p174
      %p176 = scmp.ne.s32.totalorder %s168, %s170
      %p177 = scmp.eq.s32.totalorder %s40, 1
      %p178 = por %p176, %p177
      %p179 = scmp.ne.s32.totalorder %s170, %s171
      %p180 = scmp.eq.s32.totalorder %s40, 0
      %p181 = por %p179, %p180
      %p182 = scmp.ne.s32.totalorder %s170, %s171
      %p183 = scmp.eq.s32.totalorder %s41, 1
      %p184 = por %p182, %p183
      %p186 = scmp.ne.s32.totalorder %s171, %s185
      %p187 = scmp.eq.s32.totalorder %s41, 0
      %p188 = por %p186, %p187
      %s190 = sadd.s32 %s189, 1
      %p193 = scmp.eq.s32.totalorder %s35, 1
      %p194 = scmp.ne.s32.totalorder %s189, %s191
      %p195 = scmp.eq.s32.totalorder %s35, 0
      %p196 = por %p194, %p195
      %p197 = scmp.ne.s32.totalorder %s189, %s191
      %p198 = scmp.eq.s32.totalorder %s40, 1
      %p199 = por %p197, %p198
      %p200 = scmp.ne.s32.totalorder %s191, %s192
      %p201 = scmp.eq.s32.totalorder %s40, 0
      %p202 = por %p200, %p201
      %p203 = scmp.ne.s32.totalorder %s191, %s192
      %p204 = scmp.eq.s32.totalorder %s41, 1
      %p205 = por %p203, %p204
      %p207 = scmp.ne.s32.totalorder %s192, %s206
      %p208 = scmp.eq.s32.totalorder %s41, 0
      %p209 = por %p207, %p208
      %s211 = sadd.s32 %s210, 1
      %p214 = scmp.eq.s32.totalorder %s35, 1
      %p215 = scmp.ne.s32.totalorder %s210, %s212
      %p216 = scmp.eq.s32.totalorder %s35, 0
      %p217 = por %p215, %p216
      %p218 = scmp.ne.s32.totalorder %s210, %s212
      %p219 = scmp.eq.s32.totalorder %s40, 1
      %p220 = por %p218, %p219
      %p221 = scmp.ne.s32.totalorder %s212, %s213
      %p222 = scmp.eq.s32.totalorder %s40, 0
      %p223 = por %p221, %p222
      %p224 = scmp.ne.s32.totalorder %s212, %s213
      %p225 = scmp.eq.s32.totalorder %s41, 1
      %p226 = por %p224, %p225
      %p228 = scmp.ne.s32.totalorder %s213, %s227
      %p229 = scmp.eq.s32.totalorder %s41, 0
      %p230 = por %p228, %p229
      %s232 = sadd.s32 %s231, 1
      %p235 = scmp.eq.s32.totalorder %s35, 1
      %p236 = scmp.ne.s32.totalorder %s231, %s233
      %p237 = scmp.eq.s32.totalorder %s35, 0
      %p238 = por %p236, %p237
      %p239 = scmp.ne.s32.totalorder %s231, %s233
      %p240 = scmp.eq.s32.totalorder %s40, 1
      %p241 = por %p239, %p240
      %p242 = scmp.ne.s32.totalorder %s233, %s234
      %p243 = scmp.eq.s32.totalorder %s40, 0
      %p244 = por %p242, %p243
      %p245 = scmp.ne.s32.totalorder %s233, %s234
      %p246 = scmp.eq.s32.totalorder %s41, 1
      %p247 = por %p245, %p246
      %p249 = scmp.ne.s32.totalorder %s234, %s248
      %p250 = scmp.eq.s32.totalorder %s41, 0
      %p251 = por %p249, %p250
      %s253 = sadd.s32 %s252, 1
      %p256 = scmp.eq.s32.totalorder %s35, 1
      %p257 = scmp.ne.s32.totalorder %s252, %s254
      %p258 = scmp.eq.s32.totalorder %s35, 0
      %p259 = por %p257, %p258
      %p260 = scmp.ne.s32.totalorder %s252, %s254
      %p261 = scmp.eq.s32.totalorder %s40, 1
      %p262 = por %p260, %p261
      %p263 = scmp.ne.s32.totalorder %s254, %s255
      %p264 = scmp.eq.s32.totalorder %s40, 0
      %p265 = por %p263, %p264
      %p266 = scmp.ne.s32.totalorder %s254, %s255
      %p267 = scmp.eq.s32.totalorder %s41, 1
      %p268 = por %p266, %p267
      %p270 = scmp.ne.s32.totalorder %s255, %s269
      %p271 = scmp.eq.s32.totalorder %s41, 0
      %p272 = por %p270, %p271
      %s274 = sadd.s32 %s273, 1
      %p277 = scmp.eq.s32.totalorder %s35, 1
      %p278 = scmp.ne.s32.totalorder %s273, %s275
      %p279 = scmp.eq.s32.totalorder %s35, 0
      %p280 = por %p278, %p279
      %p281 = scmp.ne.s32.totalorder %s273, %s275
      %p282 = scmp.eq.s32.totalorder %s40, 1
      %p283 = por %p281, %p282
      %p284 = scmp.ne.s32.totalorder %s275, %s276
      %p285 = scmp.eq.s32.totalorder %s40, 0
      %p286 = por %p284, %p285
      %p287 = scmp.ne.s32.totalorder %s275, %s276
      %p288 = scmp.eq.s32.totalorder %s41, 1
      %p289 = por %p287, %p288
      %p291 = scmp.ne.s32.totalorder %s276, %s290
      %p292 = scmp.eq.s32.totalorder %s41, 0
      %p293 = por %p291, %p292
      %s295 = sadd.s32 %s294, 1
      %p298 = scmp.eq.s32.totalorder %s35, 1
      %p299 = scmp.ne.s32.totalorder %s294, %s296
      %p300 = scmp.eq.s32.totalorder %s35, 0
      %p301 = por %p299, %p300
      %p302 = scmp.ne.s32.totalorder %s294, %s296
      %p303 = scmp.eq.s32.totalorder %s40, 1
      %p304 = por %p302, %p303
      %p305 = scmp.ne.s32.totalorder %s296, %s297
      %p306 = scmp.eq.s32.totalorder %s40, 0
      %p307 = por %p305, %p306
      %p308 = scmp.ne.s32.totalorder %s296, %s297
      %p309 = scmp.eq.s32.totalorder %s41, 1
      %p310 = por %p308, %p309
      %p312 = scmp.ne.s32.totalorder %s297, %s311
      %p313 = scmp.eq.s32.totalorder %s41, 0
      %p314 = por %p312, %p313
      %s316 = sadd.s32 %s315, 1
      %p319 = scmp.eq.s32.totalorder %s35, 1
      %p320 = scmp.ne.s32.totalorder %s315, %s317
      %p321 = scmp.eq.s32.totalorder %s35, 0
      %p322 = por %p320, %p321
      %p323 = scmp.ne.s32.totalorder %s315, %s317
      %p324 = scmp.eq.s32.totalorder %s40, 1
      %p325 = por %p323, %p324
      %p326 = scmp.ne.s32.totalorder %s317, %s318
      %p327 = scmp.eq.s32.totalorder %s40, 0
      %p328 = por %p326, %p327
      %p329 = scmp.ne.s32.totalorder %s317, %s318
      %p330 = scmp.eq.s32.totalorder %s41, 1
      %p331 = por %p329, %p330
      %p333 = scmp.ne.s32.totalorder %s318, %s332
      %p334 = scmp.eq.s32.totalorder %s41, 0
      %p335 = por %p333, %p334
      %s337 = sadd.s32 %s336, 1
      %p340 = scmp.eq.s32.totalorder %s35, 1
      %p341 = scmp.ne.s32.totalorder %s336, %s338
      %p342 = scmp.eq.s32.totalorder %s35, 0
      %p343 = por %p341, %p342
      %p344 = scmp.ne.s32.totalorder %s336, %s338
      %p345 = scmp.eq.s32.totalorder %s40, 1
      %p346 = por %p344, %p345
      %p347 = scmp.ne.s32.totalorder %s338, %s339
      %p348 = scmp.eq.s32.totalorder %s40, 0
      %p349 = por %p347, %p348
      %p350 = scmp.ne.s32.totalorder %s338, %s339
      %p351 = scmp.eq.s32.totalorder %s41, 1
      %p352 = por %p350, %p351
      %p354 = scmp.ne.s32.totalorder %s339, %s353
      %p355 = scmp.eq.s32.totalorder %s41, 0
      %p356 = por %p354, %p355
      %s358 = sadd.s32 %s357, 1
      %p361 = scmp.eq.s32.totalorder %s35, 1
      %p362 = scmp.ne.s32.totalorder %s357, %s359
      %p363 = scmp.eq.s32.totalorder %s35, 0
      %p364 = por %p362, %p363
      %p365 = scmp.ne.s32.totalorder %s357, %s359
      %p366 = scmp.eq.s32.totalorder %s40, 1
      %p367 = por %p365, %p366
      %p368 = scmp.ne.s32.totalorder %s359, %s360
      %p369 = scmp.eq.s32.totalorder %s40, 0
      %p370 = por %p368, %p369
      %p371 = scmp.ne.s32.totalorder %s359, %s360
      %p372 = scmp.eq.s32.totalorder %s41, 1
      %p373 = por %p371, %p372
      %p375 = scmp.ne.s32.totalorder %s360, %s374
      %p376 = scmp.eq.s32.totalorder %s41, 0
      %p377 = por %p375, %p376
      %s379 = sadd.s32 %s378, 1
      %p382 = scmp.eq.s32.totalorder %s35, 1
      %p383 = scmp.ne.s32.totalorder %s378, %s380
      %p384 = scmp.eq.s32.totalorder %s35, 0
      %p385 = por %p383, %p384
      %p386 = scmp.ne.s32.totalorder %s378, %s380
      %p387 = scmp.eq.s32.totalorder %s40, 1
      %p388 = por %p386, %p387
      %p389 = scmp.ne.s32.totalorder %s380, %s381
      %p390 = scmp.eq.s32.totalorder %s40, 0
      %p391 = por %p389, %p390
      %p392 = scmp.ne.s32.totalorder %s380, %s381
      %p393 = scmp.eq.s32.totalorder %s41, 1
      %p394 = por %p392, %p393
      %p396 = scmp.ne.s32.totalorder %s381, %s395
      %p397 = scmp.eq.s32.totalorder %s41, 0
      %p398 = por %p396, %p397
      %s400 = sadd.s32 %s399, 1
      %p403 = scmp.eq.s32.totalorder %s35, 1
      %p404 = scmp.ne.s32.totalorder %s399, %s401
      %p405 = scmp.eq.s32.totalorder %s35, 0
      %p406 = por %p404, %p405
      %p407 = scmp.ne.s32.totalorder %s399, %s401
      %p408 = scmp.eq.s32.totalorder %s40, 1
      %p409 = por %p407, %p408
      %p410 = scmp.ne.s32.totalorder %s401, %s402
      %p411 = scmp.eq.s32.totalorder %s40, 0
      %p412 = por %p410, %p411
      %p413 = scmp.ne.s32.totalorder %s401, %s402
      %p414 = scmp.eq.s32.totalorder %s41, 1
      %p415 = por %p413, %p414
      %p417 = scmp.ne.s32.totalorder %s402, %s416
      %p418 = scmp.eq.s32.totalorder %s41, 0
      %p419 = por %p417, %p418
      %s421 = sadd.s32 %s420, 1
      %p424 = scmp.eq.s32.totalorder %s35, 1
      %p425 = scmp.ne.s32.totalorder %s420, %s422
      %p426 = scmp.eq.s32.totalorder %s35, 0
      %p427 = por %p425, %p426
      %p428 = scmp.ne.s32.totalorder %s420, %s422
      %p429 = scmp.eq.s32.totalorder %s40, 1
      %p430 = por %p428, %p429
      %p431 = scmp.ne.s32.totalorder %s422, %s423
      %p432 = scmp.eq.s32.totalorder %s40, 0
      %p433 = por %p431, %p432
      %p434 = scmp.ne.s32.totalorder %s422, %s423
      %p435 = scmp.eq.s32.totalorder %s41, 1
      %p436 = por %p434, %p435
      %p438 = scmp.ne.s32.totalorder %s423, %s437
      %p439 = scmp.eq.s32.totalorder %s41, 0
      %p440 = por %p438, %p439
      %s442 = sadd.s32 %s441, 1
      %p445 = scmp.eq.s32.totalorder %s35, 1
      %p446 = scmp.ne.s32.totalorder %s441, %s443
      %p447 = scmp.eq.s32.totalorder %s35, 0
      %p448 = por %p446, %p447
      %p449 = scmp.ne.s32.totalorder %s441, %s443
      %p450 = scmp.eq.s32.totalorder %s40, 1
      %p451 = por %p449, %p450
      %p452 = scmp.ne.s32.totalorder %s443, %s444
      %p453 = scmp.eq.s32.totalorder %s40, 0
      %p454 = por %p452, %p453
      %p455 = scmp.ne.s32.totalorder %s443, %s444
      %p456 = scmp.eq.s32.totalorder %s41, 1
      %p457 = por %p455, %p456
      %p459 = scmp.ne.s32.totalorder %s444, %s458
      %p460 = scmp.eq.s32.totalorder %s41, 0
      %p461 = por %p459, %p460
      %s463 = sadd.s32 %s462, 1
      %p466 = scmp.eq.s32.totalorder %s35, 1
      %p467 = scmp.ne.s32.totalorder %s462, %s464
      %p468 = scmp.eq.s32.totalorder %s35, 0
      %p469 = por %p467, %p468
      %p470 = scmp.ne.s32.totalorder %s462, %s464
      %p471 = scmp.eq.s32.totalorder %s40, 1
      %p472 = por %p470, %p471
      %p473 = scmp.ne.s32.totalorder %s464, %s465
      %p474 = scmp.eq.s32.totalorder %s40, 0
      %p475 = por %p473, %p474
      %p476 = scmp.ne.s32.totalorder %s464, %s465
      %p477 = scmp.eq.s32.totalorder %s41, 1
      %p478 = por %p476, %p477
      %p480 = scmp.ne.s32.totalorder %s465, %s479
      %p481 = scmp.eq.s32.totalorder %s41, 0
      %p482 = por %p480, %p481
      %s484 = sadd.s32 %s483, 1
      %p487 = scmp.eq.s32.totalorder %s35, 1
      %p488 = scmp.ne.s32.totalorder %s483, %s485
      %p489 = scmp.eq.s32.totalorder %s35, 0
      %p490 = por %p488, %p489
      %p491 = scmp.ne.s32.totalorder %s483, %s485
      %p492 = scmp.eq.s32.totalorder %s40, 1
      %p493 = por %p491, %p492
      %p494 = scmp.ne.s32.totalorder %s485, %s486
      %p495 = scmp.eq.s32.totalorder %s40, 0
      %p496 = por %p494, %p495
      %p497 = scmp.ne.s32.totalorder %s485, %s486
      %p498 = scmp.eq.s32.totalorder %s41, 1
      %p499 = por %p497, %p498
      %p501 = scmp.ne.s32.totalorder %s486, %s500
      %p502 = scmp.eq.s32.totalorder %s41, 0
      %p503 = por %p501, %p502
      %s505 = sadd.s32 %s504, 1
      %p508 = scmp.eq.s32.totalorder %s35, 1
      %p509 = scmp.ne.s32.totalorder %s504, %s506
      %p510 = scmp.eq.s32.totalorder %s35, 0
      %p511 = por %p509, %p510
      %p512 = scmp.ne.s32.totalorder %s504, %s506
      %p513 = scmp.eq.s32.totalorder %s40, 1
      %p514 = por %p512, %p513
      %p515 = scmp.ne.s32.totalorder %s506, %s507
      %p516 = scmp.eq.s32.totalorder %s40, 0
      %p517 = por %p515, %p516
      %p518 = scmp.ne.s32.totalorder %s506, %s507
      %p519 = scmp.eq.s32.totalorder %s41, 1
      %p520 = por %p518, %p519
      %p522 = scmp.ne.s32.totalorder %s507, %s521
      %p523 = scmp.eq.s32.totalorder %s41, 0
      %p524 = por %p522, %p523
      %s526 = sadd.s32 %s525, 1
      %p529 = scmp.eq.s32.totalorder %s35, 1
      %p530 = scmp.ne.s32.totalorder %s525, %s527
      %p531 = scmp.eq.s32.totalorder %s35, 0
      %p532 = por %p530, %p531
      %p533 = scmp.ne.s32.totalorder %s525, %s527
      %p534 = scmp.eq.s32.totalorder %s40, 1
      %p535 = por %p533, %p534
      %p536 = scmp.ne.s32.totalorder %s527, %s528
      %p537 = scmp.eq.s32.totalorder %s40, 0
      %p538 = por %p536, %p537
      %p539 = scmp.ne.s32.totalorder %s527, %s528
      %p540 = scmp.eq.s32.totalorder %s41, 1
      %p541 = por %p539, %p540
      %p543 = scmp.ne.s32.totalorder %s528, %s542
      %p544 = scmp.eq.s32.totalorder %s41, 0
      %p545 = por %p543, %p544
      %s547 = sadd.s32 %s546, 1
      %p550 = scmp.eq.s32.totalorder %s35, 1
      %p551 = scmp.ne.s32.totalorder %s546, %s548
      %p552 = scmp.eq.s32.totalorder %s35, 0
      %p553 = por %p551, %p552
      %p554 = scmp.ne.s32.totalorder %s546, %s548
      %p555 = scmp.eq.s32.totalorder %s40, 1
      %p556 = por %p554, %p555
      %p557 = scmp.ne.s32.totalorder %s548, %s549
      %p558 = scmp.eq.s32.totalorder %s40, 0
      %p559 = por %p557, %p558
      %p560 = scmp.ne.s32.totalorder %s548, %s549
      %p561 = scmp.eq.s32.totalorder %s41, 1
      %p562 = por %p560, %p561
      %p564 = scmp.ne.s32.totalorder %s549, %s563
      %p565 = scmp.eq.s32.totalorder %s41, 0
      %p566 = por %p564, %p565
      %s568 = sadd.s32 %s567, 1
      %p571 = scmp.eq.s32.totalorder %s35, 1
      %p572 = scmp.ne.s32.totalorder %s567, %s569
      %p573 = scmp.eq.s32.totalorder %s35, 0
      %p574 = por %p572, %p573
      %p575 = scmp.ne.s32.totalorder %s567, %s569
      %p576 = scmp.eq.s32.totalorder %s40, 1
      %p577 = por %p575, %p576
      %p578 = scmp.ne.s32.totalorder %s569, %s570
      %p579 = scmp.eq.s32.totalorder %s40, 0
      %p580 = por %p578, %p579
      %p581 = scmp.ne.s32.totalorder %s569, %s570
      %p582 = scmp.eq.s32.totalorder %s41, 1
      %p583 = por %p581, %p582
      %p585 = scmp.ne.s32.totalorder %s570, %s584
      %p586 = scmp.eq.s32.totalorder %s41, 0
      %p587 = por %p585, %p586
      %s589 = sadd.s32 %s588, 1
      %p592 = scmp.eq.s32.totalorder %s35, 1
      %p593 = scmp.ne.s32.totalorder %s588, %s590
      %p594 = scmp.eq.s32.totalorder %s35, 0
      %p595 = por %p593, %p594
      %p596 = scmp.ne.s32.totalorder %s588, %s590
      %p597 = scmp.eq.s32.totalorder %s40, 1
      %p598 = por %p596, %p597
      %p599 = scmp.ne.s32.totalorder %s590, %s591
      %p600 = scmp.eq.s32.totalorder %s40, 0
      %p601 = por %p599, %p600
      %p602 = scmp.ne.s32.totalorder %s590, %s591
      %p603 = scmp.eq.s32.totalorder %s41, 1
      %p604 = por %p602, %p603
      %p606 = scmp.ne.s32.totalorder %s591, %s605
      %p607 = scmp.eq.s32.totalorder %s41, 0
      %p608 = por %p606, %p607
      %s609 = ssub.s32 %s35, %s42
      %p610 = scmp.eq.s32.totalorder %s609, 0
      %s612 = sadd.s32 %s611, 1
      %s613 = scalar_select %p610, %s611, %s612
      %p616 = pneg %p610
      %p617 = scmp.eq.s32.totalorder %s35, 1
      %p618 = por %p616, %p617
      %p619 = scmp.ne.s32.totalorder %s611, %s614
      %p620 = scmp.eq.s32.totalorder %s35, 0
      %p621 = por %p619, %p620
      %p622 = scmp.ne.s32.totalorder %s611, %s614
      %p623 = scmp.eq.s32.totalorder %s40, 1
      %p624 = por %p622, %p623
      %p625 = scmp.ne.s32.totalorder %s614, %s615
      %p626 = scmp.eq.s32.totalorder %s40, 0
      %p627 = por %p625, %p626
      %p628 = scmp.ne.s32.totalorder %s614, %s615
      %p629 = scmp.eq.s32.totalorder %s41, 1
      %p630 = por %p628, %p629
      %p632 = scmp.ne.s32.totalorder %s615, %s631
      %p633 = scmp.eq.s32.totalorder %s41, 0
      %p634 = por %p632, %p633
      %p635 = scmp.le.s32.totalorder 1, %s35
      %p636 = scmp.lt.s32.totalorder %s35, 3
      %p637 = pnand %p635, %p636
      %p638 = pneg %p637
      // Predicated region
      $region9: #{tpu_custom_call.1} parent=5 // pred_check
        _
      $region10: #{tpu_custom_call.1} parent=5 // pred_check_branch
        %640 = sbr.rel (%p637) target = $region12
      $region11: #{tpu_custom_call.1} parent=5 // pred_region
        %s641 = ssub.s32 %s35, 1
        // Predicated region
        $region13: #{tpu_custom_call.1} parent=11 // pred_check
          %p642 = pneg %p160
        $region14: #{tpu_custom_call.1} parent=11 // pred_check_branch
          %644 = sbr.rel (%p642) target = $region16
        $region15: #{tpu_custom_call.1} parent=11 // pred_region
          _
        $region16: #{tpu_custom_call.1} parent=11 // pred_fallthru
          _
        // Predicated region
        $region17: #{tpu_custom_call.1} parent=11 // pred_check
          %p645 = pneg %p181
        $region18: #{tpu_custom_call.1} parent=11 // pred_check_branch
          %647 = sbr.rel (%p645) target = $region20
        $region19: #{tpu_custom_call.1} parent=11 // pred_region
          _
        $region20: #{tpu_custom_call.1} parent=11 // pred_fallthru
          _
        // Predicated region
        $region21: #{tpu_custom_call.1} parent=11 // pred_check
          %p648 = pneg %p202
        $region22: #{tpu_custom_call.1} parent=11 // pred_check_branch
          %650 = sbr.rel (%p648) target = $region24
        $region23: #{tpu_custom_call.1} parent=11 // pred_region
          _
        $region24: #{tpu_custom_call.1} parent=11 // pred_fallthru
          _
        // Predicated region
        $region25: #{tpu_custom_call.1} parent=11 // pred_check
          %p651 = pneg %p223
        $region26: #{tpu_custom_call.1} parent=11 // pred_check_branch
          %653 = sbr.rel (%p651) target = $region28
        $region27: #{tpu_custom_call.1} parent=11 // pred_region
          _
        $region28: #{tpu_custom_call.1} parent=11 // pred_fallthru
          _
        // Predicated region
        $region29: #{tpu_custom_call.1} parent=11 // pred_check
          %p654 = pneg %p244
        $region30: #{tpu_custom_call.1} parent=11 // pred_check_branch
          %656 = sbr.rel (%p654) target = $region32
        $region31: #{tpu_custom_call.1} parent=11 // pred_region
          _
        $region32: #{tpu_custom_call.1} parent=11 // pred_fallthru
          _
        // Predicated region
        $region33: #{tpu_custom_call.1} parent=11 // pred_check
          %p657 = pneg %p265
        $region34: #{tpu_custom_call.1} parent=11 // pred_check_branch
          %659 = sbr.rel (%p657) target = $region36
        $region35: #{tpu_custom_call.1} parent=11 // pred_region
          _
        $region36: #{tpu_custom_call.1} parent=11 // pred_fallthru
          _
        // Predicated region
        $region37: #{tpu_custom_call.1} parent=11 // pred_check
          %p660 = pneg %p286
        $region38: #{tpu_custom_call.1} parent=11 // pred_check_branch
          %662 = sbr.rel (%p660) target = $region40
        $region39: #{tpu_custom_call.1} parent=11 // pred_region
          _
        $region40: #{tpu_custom_call.1} parent=11 // pred_fallthru
          _
        // Predicated region
        $region41: #{tpu_custom_call.1} parent=11 // pred_check
          %p663 = pneg %p307
        $region42: #{tpu_custom_call.1} parent=11 // pred_check_branch
          %665 = sbr.rel (%p663) target = $region44
        $region43: #{tpu_custom_call.1} parent=11 // pred_region
          _
        $region44: #{tpu_custom_call.1} parent=11 // pred_fallthru
          _
        // Predicated region
        $region45: #{tpu_custom_call.1} parent=11 // pred_check
          %p666 = pneg %p328
        $region46: #{tpu_custom_call.1} parent=11 // pred_check_branch
          %668 = sbr.rel (%p666) target = $region48
        $region47: #{tpu_custom_call.1} parent=11 // pred_region
          _
        $region48: #{tpu_custom_call.1} parent=11 // pred_fallthru
          _
        // Predicated region
        $region49: #{tpu_custom_call.1} parent=11 // pred_check
          %p669 = pneg %p349
        $region50: #{tpu_custom_call.1} parent=11 // pred_check_branch
          %671 = sbr.rel (%p669) target = $region52
        $region51: #{tpu_custom_call.1} parent=11 // pred_region
          _
        $region52: #{tpu_custom_call.1} parent=11 // pred_fallthru
          _
        // Predicated region
        $region53: #{tpu_custom_call.1} parent=11 // pred_check
          %p672 = pneg %p370
        $region54: #{tpu_custom_call.1} parent=11 // pred_check_branch
          %674 = sbr.rel (%p672) target = $region56
        $region55: #{tpu_custom_call.1} parent=11 // pred_region
          _
        $region56: #{tpu_custom_call.1} parent=11 // pred_fallthru
          _
        // Predicated region
        $region57: #{tpu_custom_call.1} parent=11 // pred_check
          %p675 = pneg %p391
        $region58: #{tpu_custom_call.1} parent=11 // pred_check_branch
          %677 = sbr.rel (%p675) target = $region60
        $region59: #{tpu_custom_call.1} parent=11 // pred_region
          _
        $region60: #{tpu_custom_call.1} parent=11 // pred_fallthru
          _
        // Predicated region
        $region61: #{tpu_custom_call.1} parent=11 // pred_check
          %p678 = pneg %p412
        $region62: #{tpu_custom_call.1} parent=11 // pred_check_branch
          %680 = sbr.rel (%p678) target = $region64
        $region63: #{tpu_custom_call.1} parent=11 // pred_region
          _
        $region64: #{tpu_custom_call.1} parent=11 // pred_fallthru
          _
        // Predicated region
        $region65: #{tpu_custom_call.1} parent=11 // pred_check
          %p681 = pneg %p433
        $region66: #{tpu_custom_call.1} parent=11 // pred_check_branch
          %683 = sbr.rel (%p681) target = $region68
        $region67: #{tpu_custom_call.1} parent=11 // pred_region
          _
        $region68: #{tpu_custom_call.1} parent=11 // pred_fallthru
          _
        // Predicated region
        $region69: #{tpu_custom_call.1} parent=11 // pred_check
          %p684 = pneg %p454
        $region70: #{tpu_custom_call.1} parent=11 // pred_check_branch
          %686 = sbr.rel (%p684) target = $region72
        $region71: #{tpu_custom_call.1} parent=11 // pred_region
          _
        $region72: #{tpu_custom_call.1} parent=11 // pred_fallthru
          _
        // Predicated region
        $region73: #{tpu_custom_call.1} parent=11 // pred_check
          %p687 = pneg %p475
        $region74: #{tpu_custom_call.1} parent=11 // pred_check_branch
          %689 = sbr.rel (%p687) target = $region76
        $region75: #{tpu_custom_call.1} parent=11 // pred_region
          _
        $region76: #{tpu_custom_call.1} parent=11 // pred_fallthru
          _
        // Predicated region
        $region77: #{tpu_custom_call.1} parent=11 // pred_check
          %p690 = pneg %p496
        $region78: #{tpu_custom_call.1} parent=11 // pred_check_branch
          %692 = sbr.rel (%p690) target = $region80
        $region79: #{tpu_custom_call.1} parent=11 // pred_region
          _
        $region80: #{tpu_custom_call.1} parent=11 // pred_fallthru
          _
        // Predicated region
        $region81: #{tpu_custom_call.1} parent=11 // pred_check
          %p693 = pneg %p517
        $region82: #{tpu_custom_call.1} parent=11 // pred_check_branch
          %695 = sbr.rel (%p693) target = $region84
        $region83: #{tpu_custom_call.1} parent=11 // pred_region
          _
        $region84: #{tpu_custom_call.1} parent=11 // pred_fallthru
          _
        // Predicated region
        $region85: #{tpu_custom_call.1} parent=11 // pred_check
          %p696 = pneg %p538
        $region86: #{tpu_custom_call.1} parent=11 // pred_check_branch
          %698 = sbr.rel (%p696) target = $region88
        $region87: #{tpu_custom_call.1} parent=11 // pred_region
          _
        $region88: #{tpu_custom_call.1} parent=11 // pred_fallthru
          _
        // Predicated region
        $region89: #{tpu_custom_call.1} parent=11 // pred_check
          %p699 = pneg %p559
        $region90: #{tpu_custom_call.1} parent=11 // pred_check_branch
          %701 = sbr.rel (%p699) target = $region92
        $region91: #{tpu_custom_call.1} parent=11 // pred_region
          _
        $region92: #{tpu_custom_call.1} parent=11 // pred_fallthru
          _
        // Predicated region
        $region93: #{tpu_custom_call.1} parent=11 // pred_check
          %p702 = pneg %p580
        $region94: #{tpu_custom_call.1} parent=11 // pred_check_branch
          %704 = sbr.rel (%p702) target = $region96
        $region95: #{tpu_custom_call.1} parent=11 // pred_region
          _
        $region96: #{tpu_custom_call.1} parent=11 // pred_fallthru
          _
        // Predicated region
        $region97: #{tpu_custom_call.1} parent=11 // pred_check
          %p705 = pneg %p601
        $region98: #{tpu_custom_call.1} parent=11 // pred_check_branch
          %707 = sbr.rel (%p705) target = $region100
        $region99: #{tpu_custom_call.1} parent=11 // pred_region
          _
        $region100: #{tpu_custom_call.1} parent=11 // pred_fallthru
          _
      $region12: #{tpu_custom_call.1} parent=5 // pred_fallthru
        _
      %p708 = scmp.lt.s32.totalorder %s35, 2
      // Predicated region
      $region101: #{tpu_custom_call.1} parent=5 // pred_check
        %p709 = pneg %p708
      $region102: #{tpu_custom_call.1} parent=5 // pred_check_branch
        %711 = sbr.rel (%p709) target = $region104
      $region103: #{tpu_custom_call.1} parent=5 // pred_region
        // Predicated region
        $region105: #{tpu_custom_call.1} parent=103 // pred_check
          %p712 = pneg %p55
        $region106: #{tpu_custom_call.1} parent=103 // pred_check_branch
          %714 = sbr.rel (%p712) target = $region108
        $region107: #{tpu_custom_call.1} parent=103 // pred_region
          %p715 = scmp.lt.s32.totalorder %s35, 1
          %s716 = scalar_select %p715, %s35, 1
          %s717 = smul.addr %s716, 8
          %s718 = scalar_lea.vmem %s0, %s717
        $region108: #{tpu_custom_call.1} parent=103 // pred_fallthru
          _
        // Predicated region
        $region109: #{tpu_custom_call.1} parent=103 // pred_check
          %p719 = pneg %p81
        $region110: #{tpu_custom_call.1} parent=103 // pred_check_branch
          %721 = sbr.rel (%p719) target = $region112
        $region111: #{tpu_custom_call.1} parent=103 // pred_region
          %p722 = scmp.lt.s32.totalorder %s35, 1
          %s723 = scalar_select %p722, %s35, 1
          %s724 = smul.addr %s723, 8
          %s725 = scalar_lea.vmem %s1, %s724
        $region112: #{tpu_custom_call.1} parent=103 // pred_fallthru
          _
        // Predicated region
        $region113: #{tpu_custom_call.1} parent=103 // pred_check
          %p726 = pneg %p107
        $region114: #{tpu_custom_call.1} parent=103 // pred_check_branch
          %728 = sbr.rel (%p726) target = $region116
        $region115: #{tpu_custom_call.1} parent=103 // pred_region
          %p729 = scmp.lt.s32.totalorder %s35, 1
          %s730 = scalar_select %p729, %s35, 1
          %s731 = smul.addr %s730, 8
          %s732 = scalar_lea.vmem %s2, %s731
        $region116: #{tpu_custom_call.1} parent=103 // pred_fallthru
          _
        // Predicated region
        $region117: #{tpu_custom_call.1} parent=103 // pred_check
          %p733 = pneg %p133
        $region118: #{tpu_custom_call.1} parent=103 // pred_check_branch
          %735 = sbr.rel (%p733) target = $region120
        $region119: #{tpu_custom_call.1} parent=103 // pred_region
          %p736 = scmp.lt.s32.totalorder %s35, 1
          %s737 = scalar_select %p736, %s35, 1
          %s738 = smul.addr %s737, 8
          %s739 = scalar_lea.vmem %s3, %s738
        $region120: #{tpu_custom_call.1} parent=103 // pred_fallthru
          _
      $region104: #{tpu_custom_call.1} parent=5 // pred_fallthru
        _
      %p740 = scmp.le.s32.totalorder 1, %s35
      %p741 = scmp.lt.s32.totalorder %s35, 3
      %p742 = pnand %p740, %p741
      %p743 = pneg %p742
      // Predicated region
      $region121: #{tpu_custom_call.1} parent=5 // pred_check
        _
      $region122: #{tpu_custom_call.1} parent=5 // pred_check_branch
        %745 = sbr.rel (%p742) target = $region124
      $region123: #{tpu_custom_call.1} parent=5 // pred_region
        %s746 = ssub.s32 %s35, 1
        %p747 = scmp.lt.s32.totalorder %s40, 1
        %s748 = scalar_select %p747, %s40, 1
        %s749 = smul.addr %s748, 8
        %s750 = scalar_lea.vmem %s0, %s749
        %p751 = pneg %p61
        %p752 = pneg %p58
        %p753 = scmp.lt.s32.totalorder %s40, 1
        %s754 = scalar_select %p753, %s40, 1
        %s755 = smul.addr %s754, 8
        %s756 = scalar_lea.vmem %s1, %s755
        %p757 = pneg %p87
        %p758 = pneg %p84
        %p759 = scmp.lt.s32.totalorder %s40, 1
        %s760 = scalar_select %p759, %s40, 1
        %s761 = smul.addr %s760, 8
        %s762 = scalar_lea.vmem %s2, %s761
        %p763 = pneg %p113
        %p764 = pneg %p110
        %p765 = scmp.lt.s32.totalorder %s40, 1
        %s766 = scalar_select %p765, %s40, 1
        %s767 = smul.addr %s766, 8
        %s768 = scalar_lea.vmem %s3, %s767
        %p769 = pneg %p139
        %p770 = pneg %p136
        %p771 = pneg %p160
        %p772 = pneg %p157
        %p773 = pneg %p181
        %p774 = pneg %p178
        %p775 = pneg %p202
        %p776 = pneg %p199
        %p777 = pneg %p223
        %p778 = pneg %p220
        %p779 = pneg %p244
        %p780 = pneg %p241
        %p781 = pneg %p265
        %p782 = pneg %p262
        %p783 = pneg %p286
        %p784 = pneg %p283
        %p785 = pneg %p307
        %p786 = pneg %p304
        %p787 = pneg %p328
        %p788 = pneg %p325
        %p789 = pneg %p349
        %p790 = pneg %p346
        %p791 = pneg %p370
        %p792 = pneg %p367
        %p793 = pneg %p391
        %p794 = pneg %p388
        %p795 = pneg %p412
        %p796 = pneg %p409
        %p797 = pneg %p433
        %p798 = pneg %p430
        %p799 = pneg %p454
        %p800 = pneg %p451
        %p801 = pneg %p475
        %p802 = pneg %p472
        %p803 = pneg %p496
        %p804 = pneg %p493
        %p805 = pneg %p517
        %p806 = pneg %p514
        %p807 = pneg %p538
        %p808 = pneg %p535
        %p809 = pneg %p559
        %p810 = pneg %p556
        %p811 = pneg %p580
        %p812 = pneg %p577
        %p813 = pneg %p601
        %p814 = pneg %p598
        %p815 = pneg %p627
        %p816 = pneg %p624
        %s817 = sand.u32 %s614, 1
        %s818 = scalar_lea.sflag [#allocation3], %s817
        %s819 = sand.u32 %s614, 1
        %s820 = smul.addr %s819, 8
        %s821 = scalar_lea.vmem [#allocation2], %s820
        %p822 = scmp.lt.s32.totalorder %s40, 1
        %s823 = scalar_select %p822, %s40, 1
        %s824 = smul.addr %s823, 8
        %s825 = scalar_lea.vmem %s0, %s824
        %p826 = scmp.lt.s32.totalorder %s40, 1
        %s827 = scalar_select %p826, %s40, 1
        %s828 = smul.addr %s827, 8
        %s829 = scalar_lea.vmem %s1, %s828
        %p830 = scmp.lt.s32.totalorder %s40, 1
        %s831 = scalar_select %p830, %s40, 1
        %s832 = smul.addr %s831, 8
        %s833 = scalar_lea.vmem %s2, %s832
        %p834 = scmp.lt.s32.totalorder %s40, 1
        %s835 = scalar_select %p834, %s40, 1
        %s836 = smul.addr %s835, 8
        %s837 = scalar_lea.vmem %s3, %s836
        %v838 = vld [vmem:[%s825] sm:$0xff]
        %v839 = vld [vmem:[%s829] sm:$0xff]
        %v840 = vld [vmem:[%s833] sm:$0xff]
        %v841 = vld [vmem:[%s837] sm:$0xff]
        %v842 = vld [vmem:[%s24] sm:$0x1]
        %v843 = vld [vmem:[%s25] sm:$0x1]
        %v844 = vld [vmem:[%s4] sm:$0xff]
        %v845 = vld [vmem:[%s4 + $0x8] sm:$0xff]
        %v846 = vld [vmem:[%s4 + $0x10] sm:$0xff]
        %v847 = vld [vmem:[%s4 + $0x18] sm:$0xff]
        %v848 = vld [vmem:[%s5] sm:$0x1]
        %v850 = vlaneseq
        %v851 = vshrl.u32 %v850, 7
        %v852 = vsub.s32 0, %v851
        %v853 = vrot.slane %v848, %v852
        %vm855 = vcmask 261120
        %v857 = vsel %vm855, %v838, 0
        %859 = vmatprep.subr.mxu0 0.0
        %860 = vmatpush1.msra.mxu0 0.0
        %861 = vmatprep.subr.mxu0 0.0
        %862 = vmatpush1.msra.mxu0 0.0
        %863 = vmatprep.subr.mxu0 0.0
        %864 = vmatpush1.msra.mxu0 0.0
        %865 = vmatprep.subr.mxu0 0.0
        %866 = vmatpush1.msra.mxu0 0.0
        %867 = vmatprep.subr.mxu0 0.0
        %868 = vmatpush1.msra.mxu0 0.0
        %869 = vmatprep.subr.mxu0 0.0
        %870 = vmatpush1.msra.mxu0 0.0
        %871 = vmatprep.subr.mxu0 0.0
        %872 = vmatpush1.msra.mxu0 0.0
        %873 = vmatprep.subr.mxu0 0.0
        %874 = vmatpush1.msra.mxu0 0.0
        %875 = vmatprep.subr.mxu0 0.0
        %876 = vmatpush1.msra.mxu0 0.0
        %877 = vmatprep.subr.mxu0 0.0
        %878 = vmatpush1.msra.mxu0 0.0
        %879 = vmatprep.subr.mxu0 0.0
        %880 = vmatpush1.msra.mxu0 0.0
        %881 = vmatprep.subr.mxu0 0.0
        %882 = vmatpush1.msra.mxu0 0.0
        %883 = vmatprep.subr.mxu0 0.0
        %884 = vmatpush1.msra.mxu0 %v847
        %885 = vmatprep.subr.mxu0 0.0
        %886 = vmatpush1.msra.mxu0 %v846
        %887 = vmatprep.subr.mxu0 0.0
        %888 = vmatpush1.msra.mxu0 %v845
        %889 = vmatprep.subr.mxu0 0.0
        %890 = vmatpush1.msra.mxu0 %v844
        %891 = vmatprep.subr.mxu0 0.0
        %892 = vmatpush2.msra.mxu0 0.0
        %893 = vmatprep.subr.mxu0 0.0
        %894 = vmatpush2.msra.mxu0 0.0
        %895 = vmatprep.subr.mxu0 0.0
        %896 = vmatpush2.msra.mxu0 0.0
        %897 = vmatprep.subr.mxu0 0.0
        %898 = vmatpush2.msra.mxu0 0.0
        %899 = vmatprep.subr.mxu0 0.0
        %900 = vmatpush2.msra.mxu0 0.0
        %901 = vmatprep.subr.mxu0 0.0
        %902 = vmatpush2.msra.mxu0 0.0
        %903 = vmatprep.subr.mxu0 0.0
        %904 = vmatpush2.msra.mxu0 0.0
        %905 = vmatprep.subr.mxu0 0.0
        %906 = vmatpush2.msra.mxu0 0.0
        %907 = vmatprep.subr.mxu0 0.0
        %908 = vmatpush2.msra.mxu0 0.0
        %909 = vmatprep.subr.mxu0 0.0
        %910 = vmatpush2.msra.mxu0 0.0
        %911 = vmatprep.subr.mxu0 0.0
        %912 = vmatpush2.msra.mxu0 0.0
        %913 = vmatprep.subr.mxu0 0.0
        %914 = vmatpush2.msra.mxu0 0.0
        %915 = vmatprep.subr.mxu0 0.0
        %916 = vmatpush2.msra.mxu0 0.0
        %917 = vmatprep.subr.mxu0 0.0
        %918 = vmatpush2.msra.mxu0 0.0
        %919 = vmatprep.subr.mxu0 0.0
        %920 = vmatpush2.msra.mxu0 0.0
        %921 = vmatprep.subr.mxu0 0.0
        %922 = vmatpush2.msra.mxu0 0.0
        %923 = vmatprep.mubr.f32.mxu0 0.0
        %924 = vmatmul.mubr.f32.gmra.mxu0 %v857
        %v925 = vpop.f32.mrf.mxu0
        %v926 = vadd.f32 %v853, %v925
        %v927 = vpop.f32.mrf.mxu0
        %928 = vdwg.mxu0
        %v929 = vld [vmem:[%s6] sm:$0xff]
        %v930 = vld [vmem:[%s6 + $0x8] sm:$0xff]
        %v931 = vld [vmem:[%s6 + $0x10] sm:$0xff]
        %v932 = vld [vmem:[%s6 + $0x18] sm:$0xff]
        %v933 = vld [vmem:[%s7] sm:$0x1]
        %v935 = vlaneseq
        %v936 = vshrl.u32 %v935, 7
        %v937 = vsub.s32 0, %v936
        %v938 = vrot.slane %v933, %v937
        %940 = vmatprep.subr.mxu0 0.0
        %941 = vmatpush1.msra.mxu0 0.0
        %942 = vmatprep.subr.mxu0 0.0
        %943 = vmatpush1.msra.mxu0 0.0
        %944 = vmatprep.subr.mxu0 0.0
        %945 = vmatpush1.msra.mxu0 0.0
        %946 = vmatprep.subr.mxu0 0.0
        %947 = vmatpush1.msra.mxu0 0.0
        %948 = vmatprep.subr.mxu0 0.0
        %949 = vmatpush1.msra.mxu0 0.0
        %950 = vmatprep.subr.mxu0 0.0
        %951 = vmatpush1.msra.mxu0 0.0
        %952 = vmatprep.subr.mxu0 0.0
        %953 = vmatpush1.msra.mxu0 0.0
        %954 = vmatprep.subr.mxu0 0.0
        %955 = vmatpush1.msra.mxu0 0.0
        %956 = vmatprep.subr.mxu0 0.0
        %957 = vmatpush1.msra.mxu0 0.0
        %958 = vmatprep.subr.mxu0 0.0
        %959 = vmatpush1.msra.mxu0 0.0
        %960 = vmatprep.subr.mxu0 0.0
        %961 = vmatpush1.msra.mxu0 0.0
        %962 = vmatprep.subr.mxu0 0.0
        %963 = vmatpush1.msra.mxu0 0.0
        %964 = vmatprep.subr.mxu0 0.0
        %965 = vmatpush1.msra.mxu0 %v932
        %966 = vmatprep.subr.mxu0 0.0
        %967 = vmatpush1.msra.mxu0 %v931
        %968 = vmatprep.subr.mxu0 0.0
        %969 = vmatpush1.msra.mxu0 %v930
        %970 = vmatprep.subr.mxu0 0.0
        %971 = vmatpush1.msra.mxu0 %v929
        %972 = vmatprep.subr.mxu0 0.0
        %973 = vmatpush2.msra.mxu0 0.0
        %974 = vmatprep.subr.mxu0 0.0
        %975 = vmatpush2.msra.mxu0 0.0
        %976 = vmatprep.subr.mxu0 0.0
        %977 = vmatpush2.msra.mxu0 0.0
        %978 = vmatprep.subr.mxu0 0.0
        %979 = vmatpush2.msra.mxu0 0.0
        %980 = vmatprep.subr.mxu0 0.0
        %981 = vmatpush2.msra.mxu0 0.0
        %982 = vmatprep.subr.mxu0 0.0
        %983 = vmatpush2.msra.mxu0 0.0
        %984 = vmatprep.subr.mxu0 0.0
        %985 = vmatpush2.msra.mxu0 0.0
        %986 = vmatprep.subr.mxu0 0.0
        %987 = vmatpush2.msra.mxu0 0.0
        %988 = vmatprep.subr.mxu0 0.0
        %989 = vmatpush2.msra.mxu0 0.0
        %990 = vmatprep.subr.mxu0 0.0
        %991 = vmatpush2.msra.mxu0 0.0
        %992 = vmatprep.subr.mxu0 0.0
        %993 = vmatpush2.msra.mxu0 0.0
        %994 = vmatprep.subr.mxu0 0.0
        %995 = vmatpush2.msra.mxu0 0.0
        %996 = vmatprep.subr.mxu0 0.0
        %997 = vmatpush2.msra.mxu0 0.0
        %998 = vmatprep.subr.mxu0 0.0
        %999 = vmatpush2.msra.mxu0 0.0
        %1000 = vmatprep.subr.mxu0 0.0
        %1001 = vmatpush2.msra.mxu0 0.0
        %1002 = vmatprep.subr.mxu0 0.0
        %1003 = vmatpush2.msra.mxu0 0.0
        %1004 = vmatprep.mubr.f32.mxu0 0.0
        %1005 = vmatmul.mubr.f32.gmra.mxu0 %v857
        %v1006 = vpop.f32.mrf.mxu0
        %v1007 = vadd.f32 %v938, %v1006
        %v1008 = vpop.f32.mrf.mxu0
        %1009 = vdwg.mxu0
        %v1010 = vld [vmem:[%s8] sm:$0xff]
        %v1011 = vld [vmem:[%s8 + $0x8] sm:$0xff]
        %v1012 = vld [vmem:[%s8 + $0x10] sm:$0xff]
        %v1013 = vld [vmem:[%s8 + $0x18] sm:$0xff]
        %v1014 = vld [vmem:[%s9] sm:$0x1]
        %v1016 = vlaneseq
        %v1017 = vshrl.u32 %v1016, 7
        %v1018 = vsub.s32 0, %v1017
        %v1019 = vrot.slane %v1014, %v1018
        %1021 = vmatprep.subr.mxu0 0.0
        %1022 = vmatpush1.msra.mxu0 0.0
        %1023 = vmatprep.subr.mxu0 0.0
        %1024 = vmatpush1.msra.mxu0 0.0
        %1025 = vmatprep.subr.mxu0 0.0
        %1026 = vmatpush1.msra.mxu0 0.0
        %1027 = vmatprep.subr.mxu0 0.0
        %1028 = vmatpush1.msra.mxu0 0.0
        %1029 = vmatprep.subr.mxu0 0.0
        %1030 = vmatpush1.msra.mxu0 0.0
        %1031 = vmatprep.subr.mxu0 0.0
        %1032 = vmatpush1.msra.mxu0 0.0
        %1033 = vmatprep.subr.mxu0 0.0
        %1034 = vmatpush1.msra.mxu0 0.0
        %1035 = vmatprep.subr.mxu0 0.0
        %1036 = vmatpush1.msra.mxu0 0.0
        %1037 = vmatprep.subr.mxu0 0.0
        %1038 = vmatpush1.msra.mxu0 0.0
        %1039 = vmatprep.subr.mxu0 0.0
        %1040 = vmatpush1.msra.mxu0 0.0
        %1041 = vmatprep.subr.mxu0 0.0
        %1042 = vmatpush1.msra.mxu0 0.0
        %1043 = vmatprep.subr.mxu0 0.0
        %1044 = vmatpush1.msra.mxu0 0.0
        %1045 = vmatprep.subr.mxu0 0.0
        %1046 = vmatpush1.msra.mxu0 %v1013
        %1047 = vmatprep.subr.mxu0 0.0
        %1048 = vmatpush1.msra.mxu0 %v1012
        %1049 = vmatprep.subr.mxu0 0.0
        %1050 = vmatpush1.msra.mxu0 %v1011
        %1051 = vmatprep.subr.mxu0 0.0
        %1052 = vmatpush1.msra.mxu0 %v1010
        %1053 = vmatprep.subr.mxu0 0.0
        %1054 = vmatpush2.msra.mxu0 0.0
        %1055 = vmatprep.subr.mxu0 0.0
        %1056 = vmatpush2.msra.mxu0 0.0
        %1057 = vmatprep.subr.mxu0 0.0
        %1058 = vmatpush2.msra.mxu0 0.0
        %1059 = vmatprep.subr.mxu0 0.0
        %1060 = vmatpush2.msra.mxu0 0.0
        %1061 = vmatprep.subr.mxu0 0.0
        %1062 = vmatpush2.msra.mxu0 0.0
        %1063 = vmatprep.subr.mxu0 0.0
        %1064 = vmatpush2.msra.mxu0 0.0
        %1065 = vmatprep.subr.mxu0 0.0
        %1066 = vmatpush2.msra.mxu0 0.0
        %1067 = vmatprep.subr.mxu0 0.0
        %1068 = vmatpush2.msra.mxu0 0.0
        %1069 = vmatprep.subr.mxu0 0.0
        %1070 = vmatpush2.msra.mxu0 0.0
        %1071 = vmatprep.subr.mxu0 0.0
        %1072 = vmatpush2.msra.mxu0 0.0
        %1073 = vmatprep.subr.mxu0 0.0
        %1074 = vmatpush2.msra.mxu0 0.0
        %1075 = vmatprep.subr.mxu0 0.0
        %1076 = vmatpush2.msra.mxu0 0.0
        %1077 = vmatprep.subr.mxu0 0.0
        %1078 = vmatpush2.msra.mxu0 0.0
        %1079 = vmatprep.subr.mxu0 0.0
        %1080 = vmatpush2.msra.mxu0 0.0
        %1081 = vmatprep.subr.mxu0 0.0
        %1082 = vmatpush2.msra.mxu0 0.0
        %1083 = vmatprep.subr.mxu0 0.0
        %1084 = vmatpush2.msra.mxu0 0.0
        %1085 = vmatprep.mubr.f32.mxu0 0.0
        %1086 = vmatmul.mubr.f32.gmra.mxu0 %v857
        %v1087 = vpop.f32.mrf.mxu0
        %v1088 = vadd.f32 %v1019, %v1087
        %v1089 = vpop.f32.mrf.mxu0
        %1090 = vdwg.mxu0
        %vm1091 = vcmask 64512
        %v1093 = vsel %vm1091, %v926, 0
        %v1096 = vsel %vm1091, %v1007, 0
        %1098 = vmatprep.subr.mxu0 0.0
        %1099 = vmatpush1.xpose.msra.mxu0 0.0
        %1100 = vmatprep.subr.mxu0 0.0
        %1101 = vmatpush1.xpose.msra.mxu0 0.0
        %1102 = vmatprep.subr.mxu0 0.0
        %1103 = vmatpush1.xpose.msra.mxu0 0.0
        %1104 = vmatprep.subr.mxu0 0.0
        %1105 = vmatpush1.xpose.msra.mxu0 0.0
        %1106 = vmatprep.subr.mxu0 0.0
        %1107 = vmatpush1.xpose.msra.mxu0 0.0
        %1108 = vmatprep.subr.mxu0 0.0
        %1109 = vmatpush1.xpose.msra.mxu0 0.0
        %1110 = vmatprep.subr.mxu0 0.0
        %1111 = vmatpush1.xpose.msra.mxu0 0.0
        %1112 = vmatprep.subr.mxu0 0.0
        %1113 = vmatpush1.xpose.msra.mxu0 0.0
        %1114 = vmatprep.subr.mxu0 0.0
        %1115 = vmatpush1.xpose.msra.mxu0 0.0
        %1116 = vmatprep.subr.mxu0 0.0
        %1117 = vmatpush1.xpose.msra.mxu0 0.0
        %1118 = vmatprep.subr.mxu0 0.0
        %1119 = vmatpush1.xpose.msra.mxu0 0.0
        %1120 = vmatprep.subr.mxu0 0.0
        %1121 = vmatpush1.xpose.msra.mxu0 0.0
        %1122 = vmatprep.subr.mxu0 0.0
        %1123 = vmatpush1.xpose.msra.mxu0 0.0
        %1124 = vmatprep.subr.mxu0 0.0
        %1125 = vmatpush1.xpose.msra.mxu0 0.0
        %1126 = vmatprep.subr.mxu0 0.0
        %1127 = vmatpush1.xpose.msra.mxu0 0.0
        %1128 = vmatprep.subr.mxu0 0.0
        %1129 = vmatpush1.xpose.msra.mxu0 %v1096
        %1130 = vmatprep.subr.mxu0 0.0
        %1131 = vmatpush2.xpose.msra.mxu0 0.0
        %1132 = vmatprep.subr.mxu0 0.0
        %1133 = vmatpush2.xpose.msra.mxu0 0.0
        %1134 = vmatprep.subr.mxu0 0.0
        %1135 = vmatpush2.xpose.msra.mxu0 0.0
        %1136 = vmatprep.subr.mxu0 0.0
        %1137 = vmatpush2.xpose.msra.mxu0 0.0
        %1138 = vmatprep.subr.mxu0 0.0
        %1139 = vmatpush2.xpose.msra.mxu0 0.0
        %1140 = vmatprep.subr.mxu0 0.0
        %1141 = vmatpush2.xpose.msra.mxu0 0.0
        %1142 = vmatprep.subr.mxu0 0.0
        %1143 = vmatpush2.xpose.msra.mxu0 0.0
        %1144 = vmatprep.subr.mxu0 0.0
        %1145 = vmatpush2.xpose.msra.mxu0 0.0
        %1146 = vmatprep.subr.mxu0 0.0
        %1147 = vmatpush2.xpose.msra.mxu0 0.0
        %1148 = vmatprep.subr.mxu0 0.0
        %1149 = vmatpush2.xpose.msra.mxu0 0.0
        %1150 = vmatprep.subr.mxu0 0.0
        %1151 = vmatpush2.xpose.msra.mxu0 0.0
        %1152 = vmatprep.subr.mxu0 0.0
        %1153 = vmatpush2.xpose.msra.mxu0 0.0
        %1154 = vmatprep.subr.mxu0 0.0
        %1155 = vmatpush2.xpose.msra.mxu0 0.0
        %1156 = vmatprep.subr.mxu0 0.0
        %1157 = vmatpush2.xpose.msra.mxu0 0.0
        %1158 = vmatprep.subr.mxu0 0.0
        %1159 = vmatpush2.xpose.msra.mxu0 0.0
        %1160 = vmatprep.subr.mxu0 0.0
        %1161 = vmatpush2.xpose.msra.mxu0 0.0
        %1162 = vmatprep.mubr.f32.mxu0 0.0
        %1163 = vmatmul.mubr.f32.gmra.mxu0 %v1093
        %v1164 = vpop.f32.mrf.mxu0
        %v1165 = vadd.f32 %v840, %v1164
        %v1166 = vpop.f32.mrf.mxu0
        %1167 = vdwg.mxu0
        %v1168 = vsel %vm1091, %v1165, -inf
        %1169 = vmax.xlane.f32.xlu0 %v1168
        %v1170 = vpop.xlane.xlu0 %1169
        %v1171 = vsub.f32 %v1165, %v1170
        %v1172 = vmul.f32 %v1171, 1.442695
        %v1173 = vpow.pop %v1172
        %v1174 = vsel %vm1091, %v1173, 0.0
        %1175 = vadd.xlane.f32.xlu0 %v1174
        %v1176 = vpop.xlane.xlu0 %1175
        %v1177 = vrcp.pop %v1176
        %v1178 = vmul.f32 %v1173, %v1177
        %v1180 = vsel %vm1091, %v1178, 0
        %1182 = vmatprep.subr.mxu0 0.0
        %1183 = vmatpush1.msra.mxu0 0.0
        %1184 = vmatprep.subr.mxu0 0.0
        %1185 = vmatpush1.msra.mxu0 0.0
        %1186 = vmatprep.subr.mxu0 0.0
        %1187 = vmatpush1.msra.mxu0 0.0
        %1188 = vmatprep.subr.mxu0 0.0
        %1189 = vmatpush1.msra.mxu0 0.0
        %1190 = vmatprep.subr.mxu0 0.0
        %1191 = vmatpush1.msra.mxu0 0.0
        %1192 = vmatprep.subr.mxu0 0.0
        %1193 = vmatpush1.msra.mxu0 0.0
        %1194 = vmatprep.subr.mxu0 0.0
        %1195 = vmatpush1.msra.mxu0 0.0
        %1196 = vmatprep.subr.mxu0 0.0
        %1197 = vmatpush1.msra.mxu0 0.0
        %1198 = vmatprep.subr.mxu0 0.0
        %1199 = vmatpush1.msra.mxu0 0.0
        %1200 = vmatprep.subr.mxu0 0.0
        %1201 = vmatpush1.msra.mxu0 0.0
        %1202 = vmatprep.subr.mxu0 0.0
        %1203 = vmatpush1.msra.mxu0 0.0
        %1204 = vmatprep.subr.mxu0 0.0
        %1205 = vmatpush1.msra.mxu0 0.0
        %1206 = vmatprep.subr.mxu0 0.0
        %1207 = vmatpush1.msra.mxu0 0.0
        %1208 = vmatprep.subr.mxu0 0.0
        %1209 = vmatpush1.msra.mxu0 0.0
        %1210 = vmatprep.subr.mxu0 0.0
        %1211 = vmatpush1.msra.mxu0 0.0
        %1212 = vmatprep.subr.mxu0 0.0
        %1213 = vmatpush1.msra.mxu0 %v1088
        %1214 = vmatprep.subr.mxu0 0.0
        %1215 = vmatpush2.msra.mxu0 0.0
        %1216 = vmatprep.subr.mxu0 0.0
        %1217 = vmatpush2.msra.mxu0 0.0
        %1218 = vmatprep.subr.mxu0 0.0
        %1219 = vmatpush2.msra.mxu0 0.0
        %1220 = vmatprep.subr.mxu0 0.0
        %1221 = vmatpush2.msra.mxu0 0.0
        %1222 = vmatprep.subr.mxu0 0.0
        %1223 = vmatpush2.msra.mxu0 0.0
        %1224 = vmatprep.subr.mxu0 0.0
        %1225 = vmatpush2.msra.mxu0 0.0
        %1226 = vmatprep.subr.mxu0 0.0
        %1227 = vmatpush2.msra.mxu0 0.0
        %1228 = vmatprep.subr.mxu0 0.0
        %1229 = vmatpush2.msra.mxu0 0.0
        %1230 = vmatprep.subr.mxu0 0.0
        %1231 = vmatpush2.msra.mxu0 0.0
        %1232 = vmatprep.subr.mxu0 0.0
        %1233 = vmatpush2.msra.mxu0 0.0
        %1234 = vmatprep.subr.mxu0 0.0
        %1235 = vmatpush2.msra.mxu0 0.0
        %1236 = vmatprep.subr.mxu0 0.0
        %1237 = vmatpush2.msra.mxu0 0.0
        %1238 = vmatprep.subr.mxu0 0.0
        %1239 = vmatpush2.msra.mxu0 0.0
        %1240 = vmatprep.subr.mxu0 0.0
        %1241 = vmatpush2.msra.mxu0 0.0
        %1242 = vmatprep.subr.mxu0 0.0
        %1243 = vmatpush2.msra.mxu0 0.0
        %1244 = vmatprep.subr.mxu0 0.0
        %1245 = vmatpush2.msra.mxu0 0.0
        %1246 = vmatprep.mubr.f32.mxu0 0.0
        %1247 = vmatmul.mubr.f32.gmra.mxu0 %v1180
        %v1248 = vpop.f32.mrf.mxu0
        %v1249 = vadd.f32 0.0, %v1248
        %v1250 = vpop.f32.mrf.mxu0
        %1251 = vdwg.mxu0
        %v1252 = vld [vmem:[%s10] sm:$0xff]
        %s1253 = scalar_lea.vmem %s4, 32
        %v1254 = vld [vmem:[%s1253] sm:$0xff]
        %v1255 = vld [vmem:[%s1253 + $0x8] sm:$0xff]
        %v1256 = vld [vmem:[%s1253 + $0x10] sm:$0xff]
        %v1257 = vld [vmem:[%s1253 + $0x18] sm:$0xff]
        %s1258 = scalar_lea.vmem %s5, 1
        %v1259 = vld [vmem:[%s1258] sm:$0x1]
        %v1261 = vlaneseq
        %v1262 = vshrl.u32 %v1261, 7
        %v1263 = vsub.s32 0, %v1262
        %v1264 = vrot.slane %v1259, %v1263
        %1266 = vmatprep.subr.mxu0 0.0
        %1267 = vmatpush1.msra.mxu0 0.0
        %1268 = vmatprep.subr.mxu0 0.0
        %1269 = vmatpush1.msra.mxu0 0.0
        %1270 = vmatprep.subr.mxu0 0.0
        %1271 = vmatpush1.msra.mxu0 0.0
        %1272 = vmatprep.subr.mxu0 0.0
        %1273 = vmatpush1.msra.mxu0 0.0
        %1274 = vmatprep.subr.mxu0 0.0
        %1275 = vmatpush1.msra.mxu0 0.0
        %1276 = vmatprep.subr.mxu0 0.0
        %1277 = vmatpush1.msra.mxu0 0.0
        %1278 = vmatprep.subr.mxu0 0.0
        %1279 = vmatpush1.msra.mxu0 0.0
        %1280 = vmatprep.subr.mxu0 0.0
        %1281 = vmatpush1.msra.mxu0 0.0
        %1282 = vmatprep.subr.mxu0 0.0
        %1283 = vmatpush1.msra.mxu0 0.0
        %1284 = vmatprep.subr.mxu0 0.0
        %1285 = vmatpush1.msra.mxu0 0.0
        %1286 = vmatprep.subr.mxu0 0.0
        %1287 = vmatpush1.msra.mxu0 0.0
        %1288 = vmatprep.subr.mxu0 0.0
        %1289 = vmatpush1.msra.mxu0 0.0
        %1290 = vmatprep.subr.mxu0 0.0
        %1291 = vmatpush1.msra.mxu0 %v1257
        %1292 = vmatprep.subr.mxu0 0.0
        %1293 = vmatpush1.msra.mxu0 %v1256
        %1294 = vmatprep.subr.mxu0 0.0
        %1295 = vmatpush1.msra.mxu0 %v1255
        %1296 = vmatprep.subr.mxu0 0.0
        %1297 = vmatpush1.msra.mxu0 %v1254
        %1298 = vmatprep.subr.mxu0 0.0
        %1299 = vmatpush2.msra.mxu0 0.0
        %1300 = vmatprep.subr.mxu0 0.0
        %1301 = vmatpush2.msra.mxu0 0.0
        %1302 = vmatprep.subr.mxu0 0.0
        %1303 = vmatpush2.msra.mxu0 0.0
        %1304 = vmatprep.subr.mxu0 0.0
        %1305 = vmatpush2.msra.mxu0 0.0
        %1306 = vmatprep.subr.mxu0 0.0
        %1307 = vmatpush2.msra.mxu0 0.0
        %1308 = vmatprep.subr.mxu0 0.0
        %1309 = vmatpush2.msra.mxu0 0.0
        %1310 = vmatprep.subr.mxu0 0.0
        %1311 = vmatpush2.msra.mxu0 0.0
        %1312 = vmatprep.subr.mxu0 0.0
        %1313 = vmatpush2.msra.mxu0 0.0
        %1314 = vmatprep.subr.mxu0 0.0
        %1315 = vmatpush2.msra.mxu0 0.0
        %1316 = vmatprep.subr.mxu0 0.0
        %1317 = vmatpush2.msra.mxu0 0.0
        %1318 = vmatprep.subr.mxu0 0.0
        %1319 = vmatpush2.msra.mxu0 0.0
        %1320 = vmatprep.subr.mxu0 0.0
        %1321 = vmatpush2.msra.mxu0 0.0
        %1322 = vmatprep.subr.mxu0 0.0
        %1323 = vmatpush2.msra.mxu0 0.0
        %1324 = vmatprep.subr.mxu0 0.0
        %1325 = vmatpush2.msra.mxu0 0.0
        %1326 = vmatprep.subr.mxu0 0.0
        %1327 = vmatpush2.msra.mxu0 0.0
        %1328 = vmatprep.subr.mxu0 0.0
        %1329 = vmatpush2.msra.mxu0 0.0
        %1330 = vmatprep.mubr.f32.mxu0 0.0
        %1331 = vmatmul.mubr.f32.gmra.mxu0 %v857
        %v1332 = vpop.f32.mrf.mxu0
        %v1333 = vadd.f32 %v1264, %v1332
        %v1334 = vpop.f32.mrf.mxu0
        %1335 = vdwg.mxu0
        %s1336 = scalar_lea.vmem %s6, 32
        %v1337 = vld [vmem:[%s1336] sm:$0xff]
        %v1338 = vld [vmem:[%s1336 + $0x8] sm:$0xff]
        %v1339 = vld [vmem:[%s1336 + $0x10] sm:$0xff]
        %v1340 = vld [vmem:[%s1336 + $0x18] sm:$0xff]
        %s1341 = scalar_lea.vmem %s7, 1
        %v1342 = vld [vmem:[%s1341] sm:$0x1]
        %v1344 = vlaneseq
        %v1345 = vshrl.u32 %v1344, 7
        %v1346 = vsub.s32 0, %v1345
        %v1347 = vrot.slane %v1342, %v1346
        %1349 = vmatprep.subr.mxu0 0.0
        %1350 = vmatpush1.msra.mxu0 0.0
        %1351 = vmatprep.subr.mxu0 0.0
        %1352 = vmatpush1.msra.mxu0 0.0
        %1353 = vmatprep.subr.mxu0 0.0
        %1354 = vmatpush1.msra.mxu0 0.0
        %1355 = vmatprep.subr.mxu0 0.0
        %1356 = vmatpush1.msra.mxu0 0.0
        %1357 = vmatprep.subr.mxu0 0.0
        %1358 = vmatpush1.msra.mxu0 0.0
        %1359 = vmatprep.subr.mxu0 0.0
        %1360 = vmatpush1.msra.mxu0 0.0
        %1361 = vmatprep.subr.mxu0 0.0
        %1362 = vmatpush1.msra.mxu0 0.0
        %1363 = vmatprep.subr.mxu0 0.0
        %1364 = vmatpush1.msra.mxu0 0.0
        %1365 = vmatprep.subr.mxu0 0.0
        %1366 = vmatpush1.msra.mxu0 0.0
        %1367 = vmatprep.subr.mxu0 0.0
        %1368 = vmatpush1.msra.mxu0 0.0
        %1369 = vmatprep.subr.mxu0 0.0
        %1370 = vmatpush1.msra.mxu0 0.0
        %1371 = vmatprep.subr.mxu0 0.0
        %1372 = vmatpush1.msra.mxu0 0.0
        %1373 = vmatprep.subr.mxu0 0.0
        %1374 = vmatpush1.msra.mxu0 %v1340
        %1375 = vmatprep.subr.mxu0 0.0
        %1376 = vmatpush1.msra.mxu0 %v1339
        %1377 = vmatprep.subr.mxu0 0.0
        %1378 = vmatpush1.msra.mxu0 %v1338
        %1379 = vmatprep.subr.mxu0 0.0
        %1380 = vmatpush1.msra.mxu0 %v1337
        %1381 = vmatprep.subr.mxu0 0.0
        %1382 = vmatpush2.msra.mxu0 0.0
        %1383 = vmatprep.subr.mxu0 0.0
        %1384 = vmatpush2.msra.mxu0 0.0
        %1385 = vmatprep.subr.mxu0 0.0
        %1386 = vmatpush2.msra.mxu0 0.0
        %1387 = vmatprep.subr.mxu0 0.0
        %1388 = vmatpush2.msra.mxu0 0.0
        %1389 = vmatprep.subr.mxu0 0.0
        %1390 = vmatpush2.msra.mxu0 0.0
        %1391 = vmatprep.subr.mxu0 0.0
        %1392 = vmatpush2.msra.mxu0 0.0
        %1393 = vmatprep.subr.mxu0 0.0
        %1394 = vmatpush2.msra.mxu0 0.0
        %1395 = vmatprep.subr.mxu0 0.0
        %1396 = vmatpush2.msra.mxu0 0.0
        %1397 = vmatprep.subr.mxu0 0.0
        %1398 = vmatpush2.msra.mxu0 0.0
        %1399 = vmatprep.subr.mxu0 0.0
        %1400 = vmatpush2.msra.mxu0 0.0
        %1401 = vmatprep.subr.mxu0 0.0
        %1402 = vmatpush2.msra.mxu0 0.0
        %1403 = vmatprep.subr.mxu0 0.0
        %1404 = vmatpush2.msra.mxu0 0.0
        %1405 = vmatprep.subr.mxu0 0.0
        %1406 = vmatpush2.msra.mxu0 0.0
        %1407 = vmatprep.subr.mxu0 0.0
        %1408 = vmatpush2.msra.mxu0 0.0
        %1409 = vmatprep.subr.mxu0 0.0
        %1410 = vmatpush2.msra.mxu0 0.0
        %1411 = vmatprep.subr.mxu0 0.0
        %1412 = vmatpush2.msra.mxu0 0.0
        %1413 = vmatprep.mubr.f32.mxu0 0.0
        %1414 = vmatmul.mubr.f32.gmra.mxu0 %v857
        %v1415 = vpop.f32.mrf.mxu0
        %v1416 = vadd.f32 %v1347, %v1415
        %v1417 = vpop.f32.mrf.mxu0
        %1418 = vdwg.mxu0
        %s1419 = scalar_lea.vmem %s8, 32
        %v1420 = vld [vmem:[%s1419] sm:$0xff]
        %v1421 = vld [vmem:[%s1419 + $0x8] sm:$0xff]
        %v1422 = vld [vmem:[%s1419 + $0x10] sm:$0xff]
        %v1423 = vld [vmem:[%s1419 + $0x18] sm:$0xff]
        %s1424 = scalar_lea.vmem %s9, 1
        %v1425 = vld [vmem:[%s1424] sm:$0x1]
        %v1427 = vlaneseq
        %v1428 = vshrl.u32 %v1427, 7
        %v1429 = vsub.s32 0, %v1428
        %v1430 = vrot.slane %v1425, %v1429
        %1432 = vmatprep.subr.mxu0 0.0
        %1433 = vmatpush1.msra.mxu0 0.0
        %1434 = vmatprep.subr.mxu0 0.0
        %1435 = vmatpush1.msra.mxu0 0.0
        %1436 = vmatprep.subr.mxu0 0.0
        %1437 = vmatpush1.msra.mxu0 0.0
        %1438 = vmatprep.subr.mxu0 0.0
        %1439 = vmatpush1.msra.mxu0 0.0
        %1440 = vmatprep.subr.mxu0 0.0
        %1441 = vmatpush1.msra.mxu0 0.0
        %1442 = vmatprep.subr.mxu0 0.0
        %1443 = vmatpush1.msra.mxu0 0.0
        %1444 = vmatprep.subr.mxu0 0.0
        %1445 = vmatpush1.msra.mxu0 0.0
        %1446 = vmatprep.subr.mxu0 0.0
        %1447 = vmatpush1.msra.mxu0 0.0
        %1448 = vmatprep.subr.mxu0 0.0
        %1449 = vmatpush1.msra.mxu0 0.0
        %1450 = vmatprep.subr.mxu0 0.0
        %1451 = vmatpush1.msra.mxu0 0.0
        %1452 = vmatprep.subr.mxu0 0.0
        %1453 = vmatpush1.msra.mxu0 0.0
        %1454 = vmatprep.subr.mxu0 0.0
        %1455 = vmatpush1.msra.mxu0 0.0
        %1456 = vmatprep.subr.mxu0 0.0
        %1457 = vmatpush1.msra.mxu0 %v1423
        %1458 = vmatprep.subr.mxu0 0.0
        %1459 = vmatpush1.msra.mxu0 %v1422
        %1460 = vmatprep.subr.mxu0 0.0
        %1461 = vmatpush1.msra.mxu0 %v1421
        %1462 = vmatprep.subr.mxu0 0.0
        %1463 = vmatpush1.msra.mxu0 %v1420
        %1464 = vmatprep.subr.mxu0 0.0
        %1465 = vmatpush2.msra.mxu0 0.0
        %1466 = vmatprep.subr.mxu0 0.0
        %1467 = vmatpush2.msra.mxu0 0.0
        %1468 = vmatprep.subr.mxu0 0.0
        %1469 = vmatpush2.msra.mxu0 0.0
        %1470 = vmatprep.subr.mxu0 0.0
        %1471 = vmatpush2.msra.mxu0 0.0
        %1472 = vmatprep.subr.mxu0 0.0
        %1473 = vmatpush2.msra.mxu0 0.0
        %1474 = vmatprep.subr.mxu0 0.0
        %1475 = vmatpush2.msra.mxu0 0.0
        %1476 = vmatprep.subr.mxu0 0.0
        %1477 = vmatpush2.msra.mxu0 0.0
        %1478 = vmatprep.subr.mxu0 0.0
        %1479 = vmatpush2.msra.mxu0 0.0
        %1480 = vmatprep.subr.mxu0 0.0
        %1481 = vmatpush2.msra.mxu0 0.0
        %1482 = vmatprep.subr.mxu0 0.0
        %1483 = vmatpush2.msra.mxu0 0.0
        %1484 = vmatprep.subr.mxu0 0.0
        %1485 = vmatpush2.msra.mxu0 0.0
        %1486 = vmatprep.subr.mxu0 0.0
        %1487 = vmatpush2.msra.mxu0 0.0
        %1488 = vmatprep.subr.mxu0 0.0
        %1489 = vmatpush2.msra.mxu0 0.0
        %1490 = vmatprep.subr.mxu0 0.0
        %1491 = vmatpush2.msra.mxu0 0.0
        %1492 = vmatprep.subr.mxu0 0.0
        %1493 = vmatpush2.msra.mxu0 0.0
        %1494 = vmatprep.subr.mxu0 0.0
        %1495 = vmatpush2.msra.mxu0 0.0
        %1496 = vmatprep.mubr.f32.mxu0 0.0
        %1497 = vmatmul.mubr.f32.gmra.mxu0 %v857
        %v1498 = vpop.f32.mrf.mxu0
        %v1499 = vadd.f32 %v1430, %v1498
        %v1500 = vpop.f32.mrf.mxu0
        %1501 = vdwg.mxu0
        %v1503 = vsel %vm1091, %v1333, 0
        %v1506 = vsel %vm1091, %v1416, 0
        %1508 = vmatprep.subr.mxu0 0.0
        %1509 = vmatpush1.xpose.msra.mxu0 0.0
        %1510 = vmatprep.subr.mxu0 0.0
        %1511 = vmatpush1.xpose.msra.mxu0 0.0
        %1512 = vmatprep.subr.mxu0 0.0
        %1513 = vmatpush1.xpose.msra.mxu0 0.0
        %1514 = vmatprep.subr.mxu0 0.0
        %1515 = vmatpush1.xpose.msra.mxu0 0.0
        %1516 = vmatprep.subr.mxu0 0.0
        %1517 = vmatpush1.xpose.msra.mxu0 0.0
        %1518 = vmatprep.subr.mxu0 0.0
        %1519 = vmatpush1.xpose.msra.mxu0 0.0
        %1520 = vmatprep.subr.mxu0 0.0
        %1521 = vmatpush1.xpose.msra.mxu0 0.0
        %1522 = vmatprep.subr.mxu0 0.0
        %1523 = vmatpush1.xpose.msra.mxu0 0.0
        %1524 = vmatprep.subr.mxu0 0.0
        %1525 = vmatpush1.xpose.msra.mxu0 0.0
        %1526 = vmatprep.subr.mxu0 0.0
        %1527 = vmatpush1.xpose.msra.mxu0 0.0
        %1528 = vmatprep.subr.mxu0 0.0
        %1529 = vmatpush1.xpose.msra.mxu0 0.0
        %1530 = vmatprep.subr.mxu0 0.0
        %1531 = vmatpush1.xpose.msra.mxu0 0.0
        %1532 = vmatprep.subr.mxu0 0.0
        %1533 = vmatpush1.xpose.msra.mxu0 0.0
        %1534 = vmatprep.subr.mxu0 0.0
        %1535 = vmatpush1.xpose.msra.mxu0 0.0
        %1536 = vmatprep.subr.mxu0 0.0
        %1537 = vmatpush1.xpose.msra.mxu0 0.0
        %1538 = vmatprep.subr.mxu0 0.0
        %1539 = vmatpush1.xpose.msra.mxu0 %v1506
        %1540 = vmatprep.subr.mxu0 0.0
        %1541 = vmatpush2.xpose.msra.mxu0 0.0
        %1542 = vmatprep.subr.mxu0 0.0
        %1543 = vmatpush2.xpose.msra.mxu0 0.0
        %1544 = vmatprep.subr.mxu0 0.0
        %1545 = vmatpush2.xpose.msra.mxu0 0.0
        %1546 = vmatprep.subr.mxu0 0.0
        %1547 = vmatpush2.xpose.msra.mxu0 0.0
        %1548 = vmatprep.subr.mxu0 0.0
        %1549 = vmatpush2.xpose.msra.mxu0 0.0
        %1550 = vmatprep.subr.mxu0 0.0
        %1551 = vmatpush2.xpose.msra.mxu0 0.0
        %1552 = vmatprep.subr.mxu0 0.0
        %1553 = vmatpush2.xpose.msra.mxu0 0.0
        %1554 = vmatprep.subr.mxu0 0.0
        %1555 = vmatpush2.xpose.msra.mxu0 0.0
        %1556 = vmatprep.subr.mxu0 0.0
        %1557 = vmatpush2.xpose.msra.mxu0 0.0
        %1558 = vmatprep.subr.mxu0 0.0
        %1559 = vmatpush2.xpose.msra.mxu0 0.0
        %1560 = vmatprep.subr.mxu0 0.0
        %1561 = vmatpush2.xpose.msra.mxu0 0.0
        %1562 = vmatprep.subr.mxu0 0.0
        %1563 = vmatpush2.xpose.msra.mxu0 0.0
        %1564 = vmatprep.subr.mxu0 0.0
        %1565 = vmatpush2.xpose.msra.mxu0 0.0
        %1566 = vmatprep.subr.mxu0 0.0
        %1567 = vmatpush2.xpose.msra.mxu0 0.0
        %1568 = vmatprep.subr.mxu0 0.0
        %1569 = vmatpush2.xpose.msra.mxu0 0.0
        %1570 = vmatprep.subr.mxu0 0.0
        %1571 = vmatpush2.xpose.msra.mxu0 0.0
        %1572 = vmatprep.mubr.f32.mxu0 0.0
        %1573 = vmatmul.mubr.f32.gmra.mxu0 %v1503
        %v1574 = vpop.f32.mrf.mxu0
        %v1575 = vadd.f32 %v840, %v1574
        %v1576 = vpop.f32.mrf.mxu0
        %1577 = vdwg.mxu0
        %v1578 = vsel %vm1091, %v1575, -inf
        %1579 = vmax.xlane.f32.xlu0 %v1578
        %v1580 = vpop.xlane.xlu0 %1579
        %v1581 = vsub.f32 %v1575, %v1580
        %v1582 = vmul.f32 %v1581, 1.442695
        %v1583 = vpow.pop %v1582
        %v1584 = vsel %vm1091, %v1583, 0.0
        %1585 = vadd.xlane.f32.xlu0 %v1584
        %v1586 = vpop.xlane.xlu0 %1585
        %v1587 = vrcp.pop %v1586
        %v1588 = vmul.f32 %v1583, %v1587
        %v1590 = vsel %vm1091, %v1588, 0
        %1592 = vmatprep.subr.mxu0 0.0
        %1593 = vmatpush1.msra.mxu0 0.0
        %1594 = vmatprep.subr.mxu0 0.0
        %1595 = vmatpush1.msra.mxu0 0.0
        %1596 = vmatprep.subr.mxu0 0.0
        %1597 = vmatpush1.msra.mxu0 0.0
        %1598 = vmatprep.subr.mxu0 0.0
        %1599 = vmatpush1.msra.mxu0 0.0
        %1600 = vmatprep.subr.mxu0 0.0
        %1601 = vmatpush1.msra.mxu0 0.0
        %1602 = vmatprep.subr.mxu0 0.0
        %1603 = vmatpush1.msra.mxu0 0.0
        %1604 = vmatprep.subr.mxu0 0.0
        %1605 = vmatpush1.msra.mxu0 0.0
        %1606 = vmatprep.subr.mxu0 0.0
        %1607 = vmatpush1.msra.mxu0 0.0
        %1608 = vmatprep.subr.mxu0 0.0
        %1609 = vmatpush1.msra.mxu0 0.0
        %1610 = vmatprep.subr.mxu0 0.0
        %1611 = vmatpush1.msra.mxu0 0.0
        %1612 = vmatprep.subr.mxu0 0.0
        %1613 = vmatpush1.msra.mxu0 0.0
        %1614 = vmatprep.subr.mxu0 0.0
        %1615 = vmatpush1.msra.mxu0 0.0
        %1616 = vmatprep.subr.mxu0 0.0
        %1617 = vmatpush1.msra.mxu0 0.0
        %1618 = vmatprep.subr.mxu0 0.0
        %1619 = vmatpush1.msra.mxu0 0.0
        %1620 = vmatprep.subr.mxu0 0.0
        %1621 = vmatpush1.msra.mxu0 0.0
        %1622 = vmatprep.subr.mxu0 0.0
        %1623 = vmatpush1.msra.mxu0 %v1499
        %1624 = vmatprep.subr.mxu0 0.0
        %1625 = vmatpush2.msra.mxu0 0.0
        %1626 = vmatprep.subr.mxu0 0.0
        %1627 = vmatpush2.msra.mxu0 0.0
        %1628 = vmatprep.subr.mxu0 0.0
        %1629 = vmatpush2.msra.mxu0 0.0
        %1630 = vmatprep.subr.mxu0 0.0
        %1631 = vmatpush2.msra.mxu0 0.0
        %1632 = vmatprep.subr.mxu0 0.0
        %1633 = vmatpush2.msra.mxu0 0.0
        %1634 = vmatprep.subr.mxu0 0.0
        %1635 = vmatpush2.msra.mxu0 0.0
        %1636 = vmatprep.subr.mxu0 0.0
        %1637 = vmatpush2.msra.mxu0 0.0
        %1638 = vmatprep.subr.mxu0 0.0
        %1639 = vmatpush2.msra.mxu0 0.0
        %1640 = vmatprep.subr.mxu0 0.0
        %1641 = vmatpush2.msra.mxu0 0.0
        %1642 = vmatprep.subr.mxu0 0.0
        %1643 = vmatpush2.msra.mxu0 0.0
        %1644 = vmatprep.subr.mxu0 0.0
        %1645 = vmatpush2.msra.mxu0 0.0
        %1646 = vmatprep.subr.mxu0 0.0
        %1647 = vmatpush2.msra.mxu0 0.0
        %1648 = vmatprep.subr.mxu0 0.0
        %1649 = vmatpush2.msra.mxu0 0.0
        %1650 = vmatprep.subr.mxu0 0.0
        %1651 = vmatpush2.msra.mxu0 0.0
        %1652 = vmatprep.subr.mxu0 0.0
        %1653 = vmatpush2.msra.mxu0 0.0
        %1654 = vmatprep.subr.mxu0 0.0
        %1655 = vmatpush2.msra.mxu0 0.0
        %1656 = vmatprep.mubr.f32.mxu0 0.0
        %1657 = vmatmul.mubr.f32.gmra.mxu0 %v1590
        %v1658 = vpop.f32.mrf.mxu0
        %v1659 = vadd.f32 0.0, %v1658
        %v1660 = vpop.f32.mrf.mxu0
        %1661 = vdwg.mxu0
        %s1662 = scalar_lea.vmem %s10, 8
        %v1663 = vld [vmem:[%s1662] sm:$0xff]
        %v1665 = vsel %vm1091, %v1659, 0
        %1667 = vmatprep.subr.mxu0 0.0
        %1668 = vmatpush1.msra.mxu0 0.0
        %1669 = vmatprep.subr.mxu0 0.0
        %1670 = vmatpush1.msra.mxu0 0.0
        %1671 = vmatprep.subr.mxu0 0.0
        %1672 = vmatpush1.msra.mxu0 0.0
        %1673 = vmatprep.subr.mxu0 0.0
        %1674 = vmatpush1.msra.mxu0 0.0
        %1675 = vmatprep.subr.mxu0 0.0
        %1676 = vmatpush1.msra.mxu0 0.0
        %1677 = vmatprep.subr.mxu0 0.0
        %1678 = vmatpush1.msra.mxu0 0.0
        %1679 = vmatprep.subr.mxu0 0.0
        %1680 = vmatpush1.msra.mxu0 0.0
        %1681 = vmatprep.subr.mxu0 0.0
        %1682 = vmatpush1.msra.mxu0 0.0
        %1683 = vmatprep.subr.mxu0 0.0
        %1684 = vmatpush1.msra.mxu0 0.0
        %1685 = vmatprep.subr.mxu0 0.0
        %1686 = vmatpush1.msra.mxu0 0.0
        %1687 = vmatprep.subr.mxu0 0.0
        %1688 = vmatpush1.msra.mxu0 0.0
        %1689 = vmatprep.subr.mxu0 0.0
        %1690 = vmatpush1.msra.mxu0 0.0
        %1691 = vmatprep.subr.mxu0 0.0
        %1692 = vmatpush1.msra.mxu0 0.0
        %1693 = vmatprep.subr.mxu0 0.0
        %1694 = vmatpush1.msra.mxu0 0.0
        %1695 = vmatprep.subr.mxu0 0.0
        %1696 = vmatpush1.msra.mxu0 0.0
        %1697 = vmatprep.subr.mxu0 0.0
        %1698 = vmatpush1.msra.mxu0 %v1663
        %1699 = vmatprep.subr.mxu0 0.0
        %1700 = vmatpush2.msra.mxu0 0.0
        %1701 = vmatprep.subr.mxu0 0.0
        %1702 = vmatpush2.msra.mxu0 0.0
        %1703 = vmatprep.subr.mxu0 0.0
        %1704 = vmatpush2.msra.mxu0 0.0
        %1705 = vmatprep.subr.mxu0 0.0
        %1706 = vmatpush2.msra.mxu0 0.0
        %1707 = vmatprep.subr.mxu0 0.0
        %1708 = vmatpush2.msra.mxu0 0.0
        %1709 = vmatprep.subr.mxu0 0.0
        %1710 = vmatpush2.msra.mxu0 0.0
        %1711 = vmatprep.subr.mxu0 0.0
        %1712 = vmatpush2.msra.mxu0 0.0
        %1713 = vmatprep.subr.mxu0 0.0
        %1714 = vmatpush2.msra.mxu0 0.0
        %1715 = vmatprep.subr.mxu0 0.0
        %1716 = vmatpush2.msra.mxu0 0.0
        %1717 = vmatprep.subr.mxu0 0.0
        %1718 = vmatpush2.msra.mxu0 0.0
        %1719 = vmatprep.subr.mxu0 0.0
        %1720 = vmatpush2.msra.mxu0 0.0
        %1721 = vmatprep.subr.mxu0 0.0
        %1722 = vmatpush2.msra.mxu0 0.0
        %1723 = vmatprep.subr.mxu0 0.0
        %1724 = vmatpush2.msra.mxu0 0.0
        %1725 = vmatprep.subr.mxu0 0.0
        %1726 = vmatpush2.msra.mxu0 0.0
        %1727 = vmatprep.subr.mxu0 0.0
        %1728 = vmatpush2.msra.mxu0 0.0
        %1729 = vmatprep.subr.mxu0 0.0
        %1730 = vmatpush2.msra.mxu0 0.0
        %1731 = vmatprep.mubr.f32.mxu0 0.0
        %1732 = vmatmul.mubr.f32.gmra.mxu0 %v1665
        %v1733 = vpop.f32.mrf.mxu0
        %v1734 = vadd.f32 0.0, %v1733
        %v1735 = vpop.f32.mrf.mxu0
        %1736 = vdwg.mxu0
        %v1738 = vsel %vm1091, %v1249, 0
        %1740 = vmatprep.subr.mxu0 0.0
        %1741 = vmatpush1.msra.mxu0 0.0
        %1742 = vmatprep.subr.mxu0 0.0
        %1743 = vmatpush1.msra.mxu0 0.0
        %1744 = vmatprep.subr.mxu0 0.0
        %1745 = vmatpush1.msra.mxu0 0.0
        %1746 = vmatprep.subr.mxu0 0.0
        %1747 = vmatpush1.msra.mxu0 0.0
        %1748 = vmatprep.subr.mxu0 0.0
        %1749 = vmatpush1.msra.mxu0 0.0
        %1750 = vmatprep.subr.mxu0 0.0
        %1751 = vmatpush1.msra.mxu0 0.0
        %1752 = vmatprep.subr.mxu0 0.0
        %1753 = vmatpush1.msra.mxu0 0.0
        %1754 = vmatprep.subr.mxu0 0.0
        %1755 = vmatpush1.msra.mxu0 0.0
        %1756 = vmatprep.subr.mxu0 0.0
        %1757 = vmatpush1.msra.mxu0 0.0
        %1758 = vmatprep.subr.mxu0 0.0
        %1759 = vmatpush1.msra.mxu0 0.0
        %1760 = vmatprep.subr.mxu0 0.0
        %1761 = vmatpush1.msra.mxu0 0.0
        %1762 = vmatprep.subr.mxu0 0.0
        %1763 = vmatpush1.msra.mxu0 0.0
        %1764 = vmatprep.subr.mxu0 0.0
        %1765 = vmatpush1.msra.mxu0 0.0
        %1766 = vmatprep.subr.mxu0 0.0
        %1767 = vmatpush1.msra.mxu0 0.0
        %1768 = vmatprep.subr.mxu0 0.0
        %1769 = vmatpush1.msra.mxu0 0.0
        %1770 = vmatprep.subr.mxu0 0.0
        %1771 = vmatpush1.msra.mxu0 %v1252
        %1772 = vmatprep.subr.mxu0 0.0
        %1773 = vmatpush2.msra.mxu0 0.0
        %1774 = vmatprep.subr.mxu0 0.0
        %1775 = vmatpush2.msra.mxu0 0.0
        %1776 = vmatprep.subr.mxu0 0.0
        %1777 = vmatpush2.msra.mxu0 0.0
        %1778 = vmatprep.subr.mxu0 0.0
        %1779 = vmatpush2.msra.mxu0 0.0
        %1780 = vmatprep.subr.mxu0 0.0
        %1781 = vmatpush2.msra.mxu0 0.0
        %1782 = vmatprep.subr.mxu0 0.0
        %1783 = vmatpush2.msra.mxu0 0.0
        %1784 = vmatprep.subr.mxu0 0.0
        %1785 = vmatpush2.msra.mxu0 0.0
        %1786 = vmatprep.subr.mxu0 0.0
        %1787 = vmatpush2.msra.mxu0 0.0
        %1788 = vmatprep.subr.mxu0 0.0
        %1789 = vmatpush2.msra.mxu0 0.0
        %1790 = vmatprep.subr.mxu0 0.0
        %1791 = vmatpush2.msra.mxu0 0.0
        %1792 = vmatprep.subr.mxu0 0.0
        %1793 = vmatpush2.msra.mxu0 0.0
        %1794 = vmatprep.subr.mxu0 0.0
        %1795 = vmatpush2.msra.mxu0 0.0
        %1796 = vmatprep.subr.mxu0 0.0
        %1797 = vmatpush2.msra.mxu0 0.0
        %1798 = vmatprep.subr.mxu0 0.0
        %1799 = vmatpush2.msra.mxu0 0.0
        %1800 = vmatprep.subr.mxu0 0.0
        %1801 = vmatpush2.msra.mxu0 0.0
        %1802 = vmatprep.subr.mxu0 0.0
        %1803 = vmatpush2.msra.mxu0 0.0
        %1804 = vmatprep.mubr.f32.mxu0 0.0
        %1805 = vmatmul.mubr.f32.gmra.mxu0 %v1738
        %v1806 = vpop.f32.mrf.mxu0
        %v1807 = vadd.f32 %v1734, %v1806
        %v1808 = vpop.f32.mrf.mxu0
        %1809 = vdwg.mxu0
        %s1810 = scalar_lea.vmem %s4, 64
        %v1811 = vld [vmem:[%s1810] sm:$0xff]
        %v1812 = vld [vmem:[%s1810 + $0x8] sm:$0xff]
        %v1813 = vld [vmem:[%s1810 + $0x10] sm:$0xff]
        %v1814 = vld [vmem:[%s1810 + $0x18] sm:$0xff]
        %s1815 = scalar_lea.vmem %s5, 2
        %v1816 = vld [vmem:[%s1815] sm:$0x1]
        %v1818 = vlaneseq
        %v1819 = vshrl.u32 %v1818, 7
        %v1820 = vsub.s32 0, %v1819
        %v1821 = vrot.slane %v1816, %v1820
        %1823 = vmatprep.subr.mxu0 0.0
        %1824 = vmatpush1.msra.mxu0 0.0
        %1825 = vmatprep.subr.mxu0 0.0
        %1826 = vmatpush1.msra.mxu0 0.0
        %1827 = vmatprep.subr.mxu0 0.0
        %1828 = vmatpush1.msra.mxu0 0.0
        %1829 = vmatprep.subr.mxu0 0.0
        %1830 = vmatpush1.msra.mxu0 0.0
        %1831 = vmatprep.subr.mxu0 0.0
        %1832 = vmatpush1.msra.mxu0 0.0
        %1833 = vmatprep.subr.mxu0 0.0
        %1834 = vmatpush1.msra.mxu0 0.0
        %1835 = vmatprep.subr.mxu0 0.0
        %1836 = vmatpush1.msra.mxu0 0.0
        %1837 = vmatprep.subr.mxu0 0.0
        %1838 = vmatpush1.msra.mxu0 0.0
        %1839 = vmatprep.subr.mxu0 0.0
        %1840 = vmatpush1.msra.mxu0 0.0
        %1841 = vmatprep.subr.mxu0 0.0
        %1842 = vmatpush1.msra.mxu0 0.0
        %1843 = vmatprep.subr.mxu0 0.0
        %1844 = vmatpush1.msra.mxu0 0.0
        %1845 = vmatprep.subr.mxu0 0.0
        %1846 = vmatpush1.msra.mxu0 0.0
        %1847 = vmatprep.subr.mxu0 0.0
        %1848 = vmatpush1.msra.mxu0 %v1814
        %1849 = vmatprep.subr.mxu0 0.0
        %1850 = vmatpush1.msra.mxu0 %v1813
        %1851 = vmatprep.subr.mxu0 0.0
        %1852 = vmatpush1.msra.mxu0 %v1812
        %1853 = vmatprep.subr.mxu0 0.0
        %1854 = vmatpush1.msra.mxu0 %v1811
        %1855 = vmatprep.subr.mxu0 0.0
        %1856 = vmatpush2.msra.mxu0 0.0
        %1857 = vmatprep.subr.mxu0 0.0
        %1858 = vmatpush2.msra.mxu0 0.0
        %1859 = vmatprep.subr.mxu0 0.0
        %1860 = vmatpush2.msra.mxu0 0.0
        %1861 = vmatprep.subr.mxu0 0.0
        %1862 = vmatpush2.msra.mxu0 0.0
        %1863 = vmatprep.subr.mxu0 0.0
        %1864 = vmatpush2.msra.mxu0 0.0
        %1865 = vmatprep.subr.mxu0 0.0
        %1866 = vmatpush2.msra.mxu0 0.0
        %1867 = vmatprep.subr.mxu0 0.0
        %1868 = vmatpush2.msra.mxu0 0.0
        %1869 = vmatprep.subr.mxu0 0.0
        %1870 = vmatpush2.msra.mxu0 0.0
        %1871 = vmatprep.subr.mxu0 0.0
        %1872 = vmatpush2.msra.mxu0 0.0
        %1873 = vmatprep.subr.mxu0 0.0
        %1874 = vmatpush2.msra.mxu0 0.0
        %1875 = vmatprep.subr.mxu0 0.0
        %1876 = vmatpush2.msra.mxu0 0.0
        %1877 = vmatprep.subr.mxu0 0.0
        %1878 = vmatpush2.msra.mxu0 0.0
        %1879 = vmatprep.subr.mxu0 0.0
        %1880 = vmatpush2.msra.mxu0 0.0
        %1881 = vmatprep.subr.mxu0 0.0
        %1882 = vmatpush2.msra.mxu0 0.0
        %1883 = vmatprep.subr.mxu0 0.0
        %1884 = vmatpush2.msra.mxu0 0.0
        %1885 = vmatprep.subr.mxu0 0.0
        %1886 = vmatpush2.msra.mxu0 0.0
        %1887 = vmatprep.mubr.f32.mxu0 0.0
        %1888 = vmatmul.mubr.f32.gmra.mxu0 %v857
        %v1889 = vpop.f32.mrf.mxu0
        %v1890 = vadd.f32 %v1821, %v1889
        %v1891 = vpop.f32.mrf.mxu0
        %1892 = vdwg.mxu0
        %s1893 = scalar_lea.vmem %s6, 64
        %v1894 = vld [vmem:[%s1893] sm:$0xff]
        %v1895 = vld [vmem:[%s1893 + $0x8] sm:$0xff]
        %v1896 = vld [vmem:[%s1893 + $0x10] sm:$0xff]
        %v1897 = vld [vmem:[%s1893 + $0x18] sm:$0xff]
        %s1898 = scalar_lea.vmem %s7, 2
        %v1899 = vld [vmem:[%s1898] sm:$0x1]
        %v1901 = vlaneseq
        %v1902 = vshrl.u32 %v1901, 7
        %v1903 = vsub.s32 0, %v1902
        %v1904 = vrot.slane %v1899, %v1903
        %1906 = vmatprep.subr.mxu0 0.0
        %1907 = vmatpush1.msra.mxu0 0.0
        %1908 = vmatprep.subr.mxu0 0.0
        %1909 = vmatpush1.msra.mxu0 0.0
        %1910 = vmatprep.subr.mxu0 0.0
        %1911 = vmatpush1.msra.mxu0 0.0
        %1912 = vmatprep.subr.mxu0 0.0
        %1913 = vmatpush1.msra.mxu0 0.0
        %1914 = vmatprep.subr.mxu0 0.0
        %1915 = vmatpush1.msra.mxu0 0.0
        %1916 = vmatprep.subr.mxu0 0.0
        %1917 = vmatpush1.msra.mxu0 0.0
        %1918 = vmatprep.subr.mxu0 0.0
        %1919 = vmatpush1.msra.mxu0 0.0
        %1920 = vmatprep.subr.mxu0 0.0
        %1921 = vmatpush1.msra.mxu0 0.0
        %1922 = vmatprep.subr.mxu0 0.0
        %1923 = vmatpush1.msra.mxu0 0.0
        %1924 = vmatprep.subr.mxu0 0.0
        %1925 = vmatpush1.msra.mxu0 0.0
        %1926 = vmatprep.subr.mxu0 0.0
        %1927 = vmatpush1.msra.mxu0 0.0
        %1928 = vmatprep.subr.mxu0 0.0
        %1929 = vmatpush1.msra.mxu0 0.0
        %1930 = vmatprep.subr.mxu0 0.0
        %1931 = vmatpush1.msra.mxu0 %v1897
        %1932 = vmatprep.subr.mxu0 0.0
        %1933 = vmatpush1.msra.mxu0 %v1896
        %1934 = vmatprep.subr.mxu0 0.0
        %1935 = vmatpush1.msra.mxu0 %v1895
        %1936 = vmatprep.subr.mxu0 0.0
        %1937 = vmatpush1.msra.mxu0 %v1894
        %1938 = vmatprep.subr.mxu0 0.0
        %1939 = vmatpush2.msra.mxu0 0.0
        %1940 = vmatprep.subr.mxu0 0.0
        %1941 = vmatpush2.msra.mxu0 0.0
        %1942 = vmatprep.subr.mxu0 0.0
        %1943 = vmatpush2.msra.mxu0 0.0
        %1944 = vmatprep.subr.mxu0 0.0
        %1945 = vmatpush2.msra.mxu0 0.0
        %1946 = vmatprep.subr.mxu0 0.0
        %1947 = vmatpush2.msra.mxu0 0.0
        %1948 = vmatprep.subr.mxu0 0.0
        %1949 = vmatpush2.msra.mxu0 0.0
        %1950 = vmatprep.subr.mxu0 0.0
        %1951 = vmatpush2.msra.mxu0 0.0
        %1952 = vmatprep.subr.mxu0 0.0
        %1953 = vmatpush2.msra.mxu0 0.0
        %1954 = vmatprep.subr.mxu0 0.0
        %1955 = vmatpush2.msra.mxu0 0.0
        %1956 = vmatprep.subr.mxu0 0.0
        %1957 = vmatpush2.msra.mxu0 0.0
        %1958 = vmatprep.subr.mxu0 0.0
        %1959 = vmatpush2.msra.mxu0 0.0
        %1960 = vmatprep.subr.mxu0 0.0
        %1961 = vmatpush2.msra.mxu0 0.0
        %1962 = vmatprep.subr.mxu0 0.0
        %1963 = vmatpush2.msra.mxu0 0.0
        %1964 = vmatprep.subr.mxu0 0.0
        %1965 = vmatpush2.msra.mxu0 0.0
        %1966 = vmatprep.subr.mxu0 0.0
        %1967 = vmatpush2.msra.mxu0 0.0
        %1968 = vmatprep.subr.mxu0 0.0
        %1969 = vmatpush2.msra.mxu0 0.0
        %1970 = vmatprep.mubr.f32.mxu0 0.0
        %1971 = vmatmul.mubr.f32.gmra.mxu0 %v857
        %v1972 = vpop.f32.mrf.mxu0
        %v1973 = vadd.f32 %v1904, %v1972
        %v1974 = vpop.f32.mrf.mxu0
        %1975 = vdwg.mxu0
        %s1976 = scalar_lea.vmem %s8, 64
        %v1977 = vld [vmem:[%s1976] sm:$0xff]
        %v1978 = vld [vmem:[%s1976 + $0x8] sm:$0xff]
        %v1979 = vld [vmem:[%s1976 + $0x10] sm:$0xff]
        %v1980 = vld [vmem:[%s1976 + $0x18] sm:$0xff]
        %s1981 = scalar_lea.vmem %s9, 2
        %v1982 = vld [vmem:[%s1981] sm:$0x1]
        %v1984 = vlaneseq
        %v1985 = vshrl.u32 %v1984, 7
        %v1986 = vsub.s32 0, %v1985
        %v1987 = vrot.slane %v1982, %v1986
        %1989 = vmatprep.subr.mxu0 0.0
        %1990 = vmatpush1.msra.mxu0 0.0
        %1991 = vmatprep.subr.mxu0 0.0
        %1992 = vmatpush1.msra.mxu0 0.0
        %1993 = vmatprep.subr.mxu0 0.0
        %1994 = vmatpush1.msra.mxu0 0.0
        %1995 = vmatprep.subr.mxu0 0.0
        %1996 = vmatpush1.msra.mxu0 0.0
        %1997 = vmatprep.subr.mxu0 0.0
        %1998 = vmatpush1.msra.mxu0 0.0
        %1999 = vmatprep.subr.mxu0 0.0
        %2000 = vmatpush1.msra.mxu0 0.0
        %2001 = vmatprep.subr.mxu0 0.0
        %2002 = vmatpush1.msra.mxu0 0.0
        %2003 = vmatprep.subr.mxu0 0.0
        %2004 = vmatpush1.msra.mxu0 0.0
        %2005 = vmatprep.subr.mxu0 0.0
        %2006 = vmatpush1.msra.mxu0 0.0
        %2007 = vmatprep.subr.mxu0 0.0
        %2008 = vmatpush1.msra.mxu0 0.0
        %2009 = vmatprep.subr.mxu0 0.0
        %2010 = vmatpush1.msra.mxu0 0.0
        %2011 = vmatprep.subr.mxu0 0.0
        %2012 = vmatpush1.msra.mxu0 0.0
        %2013 = vmatprep.subr.mxu0 0.0
        %2014 = vmatpush1.msra.mxu0 %v1980
        %2015 = vmatprep.subr.mxu0 0.0
        %2016 = vmatpush1.msra.mxu0 %v1979
        %2017 = vmatprep.subr.mxu0 0.0
        %2018 = vmatpush1.msra.mxu0 %v1978
        %2019 = vmatprep.subr.mxu0 0.0
        %2020 = vmatpush1.msra.mxu0 %v1977
        %2021 = vmatprep.subr.mxu0 0.0
        %2022 = vmatpush2.msra.mxu0 0.0
        %2023 = vmatprep.subr.mxu0 0.0
        %2024 = vmatpush2.msra.mxu0 0.0
        %2025 = vmatprep.subr.mxu0 0.0
        %2026 = vmatpush2.msra.mxu0 0.0
        %2027 = vmatprep.subr.mxu0 0.0
        %2028 = vmatpush2.msra.mxu0 0.0
        %2029 = vmatprep.subr.mxu0 0.0
        %2030 = vmatpush2.msra.mxu0 0.0
        %2031 = vmatprep.subr.mxu0 0.0
        %2032 = vmatpush2.msra.mxu0 0.0
        %2033 = vmatprep.subr.mxu0 0.0
        %2034 = vmatpush2.msra.mxu0 0.0
        %2035 = vmatprep.subr.mxu0 0.0
        %2036 = vmatpush2.msra.mxu0 0.0
        %2037 = vmatprep.subr.mxu0 0.0
        %2038 = vmatpush2.msra.mxu0 0.0
        %2039 = vmatprep.subr.mxu0 0.0
        %2040 = vmatpush2.msra.mxu0 0.0
        %2041 = vmatprep.subr.mxu0 0.0
        %2042 = vmatpush2.msra.mxu0 0.0
        %2043 = vmatprep.subr.mxu0 0.0
        %2044 = vmatpush2.msra.mxu0 0.0
        %2045 = vmatprep.subr.mxu0 0.0
        %2046 = vmatpush2.msra.mxu0 0.0
        %2047 = vmatprep.subr.mxu0 0.0
        %2048 = vmatpush2.msra.mxu0 0.0
        %2049 = vmatprep.subr.mxu0 0.0
        %2050 = vmatpush2.msra.mxu0 0.0
        %2051 = vmatprep.subr.mxu0 0.0
        %2052 = vmatpush2.msra.mxu0 0.0
        %2053 = vmatprep.mubr.f32.mxu0 0.0
        %2054 = vmatmul.mubr.f32.gmra.mxu0 %v857
        %v2055 = vpop.f32.mrf.mxu0
        %v2056 = vadd.f32 %v1987, %v2055
        %v2057 = vpop.f32.mrf.mxu0
        %2058 = vdwg.mxu0
        %v2060 = vsel %vm1091, %v1890, 0
        %v2063 = vsel %vm1091, %v1973, 0
        %2065 = vmatprep.subr.mxu0 0.0
        %2066 = vmatpush1.xpose.msra.mxu0 0.0
        %2067 = vmatprep.subr.mxu0 0.0
        %2068 = vmatpush1.xpose.msra.mxu0 0.0
        %2069 = vmatprep.subr.mxu0 0.0
        %2070 = vmatpush1.xpose.msra.mxu0 0.0
        %2071 = vmatprep.subr.mxu0 0.0
        %2072 = vmatpush1.xpose.msra.mxu0 0.0
        %2073 = vmatprep.subr.mxu0 0.0
        %2074 = vmatpush1.xpose.msra.mxu0 0.0
        %2075 = vmatprep.subr.mxu0 0.0
        %2076 = vmatpush1.xpose.msra.mxu0 0.0
        %2077 = vmatprep.subr.mxu0 0.0
        %2078 = vmatpush1.xpose.msra.mxu0 0.0
        %2079 = vmatprep.subr.mxu0 0.0
        %2080 = vmatpush1.xpose.msra.mxu0 0.0
        %2081 = vmatprep.subr.mxu0 0.0
        %2082 = vmatpush1.xpose.msra.mxu0 0.0
        %2083 = vmatprep.subr.mxu0 0.0
        %2084 = vmatpush1.xpose.msra.mxu0 0.0
        %2085 = vmatprep.subr.mxu0 0.0
        %2086 = vmatpush1.xpose.msra.mxu0 0.0
        %2087 = vmatprep.subr.mxu0 0.0
        %2088 = vmatpush1.xpose.msra.mxu0 0.0
        %2089 = vmatprep.subr.mxu0 0.0
        %2090 = vmatpush1.xpose.msra.mxu0 0.0
        %2091 = vmatprep.subr.mxu0 0.0
        %2092 = vmatpush1.xpose.msra.mxu0 0.0
        %2093 = vmatprep.subr.mxu0 0.0
        %2094 = vmatpush1.xpose.msra.mxu0 0.0
        %2095 = vmatprep.subr.mxu0 0.0
        %2096 = vmatpush1.xpose.msra.mxu0 %v2063
        %2097 = vmatprep.subr.mxu0 0.0
        %2098 = vmatpush2.xpose.msra.mxu0 0.0
        %2099 = vmatprep.subr.mxu0 0.0
        %2100 = vmatpush2.xpose.msra.mxu0 0.0
        %2101 = vmatprep.subr.mxu0 0.0
        %2102 = vmatpush2.xpose.msra.mxu0 0.0
        %2103 = vmatprep.subr.mxu0 0.0
        %2104 = vmatpush2.xpose.msra.mxu0 0.0
        %2105 = vmatprep.subr.mxu0 0.0
        %2106 = vmatpush2.xpose.msra.mxu0 0.0
        %2107 = vmatprep.subr.mxu0 0.0
        %2108 = vmatpush2.xpose.msra.mxu0 0.0
        %2109 = vmatprep.subr.mxu0 0.0
        %2110 = vmatpush2.xpose.msra.mxu0 0.0
        %2111 = vmatprep.subr.mxu0 0.0
        %2112 = vmatpush2.xpose.msra.mxu0 0.0
        %2113 = vmatprep.subr.mxu0 0.0
        %2114 = vmatpush2.xpose.msra.mxu0 0.0
        %2115 = vmatprep.subr.mxu0 0.0
        %2116 = vmatpush2.xpose.msra.mxu0 0.0
        %2117 = vmatprep.subr.mxu0 0.0
        %2118 = vmatpush2.xpose.msra.mxu0 0.0
        %2119 = vmatprep.subr.mxu0 0.0
        %2120 = vmatpush2.xpose.msra.mxu0 0.0
        %2121 = vmatprep.subr.mxu0 0.0
        %2122 = vmatpush2.xpose.msra.mxu0 0.0
        %2123 = vmatprep.subr.mxu0 0.0
        %2124 = vmatpush2.xpose.msra.mxu0 0.0
        %2125 = vmatprep.subr.mxu0 0.0
        %2126 = vmatpush2.xpose.msra.mxu0 0.0
        %2127 = vmatprep.subr.mxu0 0.0
        %2128 = vmatpush2.xpose.msra.mxu0 0.0
        %2129 = vmatprep.mubr.f32.mxu0 0.0
        %2130 = vmatmul.mubr.f32.gmra.mxu0 %v2060
        %v2131 = vpop.f32.mrf.mxu0
        %v2132 = vadd.f32 %v840, %v2131
        %v2133 = vpop.f32.mrf.mxu0
        %2134 = vdwg.mxu0
        %v2135 = vsel %vm1091, %v2132, -inf
        %2136 = vmax.xlane.f32.xlu0 %v2135
        %v2137 = vpop.xlane.xlu0 %2136
        %v2138 = vsub.f32 %v2132, %v2137
        %v2139 = vmul.f32 %v2138, 1.442695
        %v2140 = vpow.pop %v2139
        %v2141 = vsel %vm1091, %v2140, 0.0
        %2142 = vadd.xlane.f32.xlu0 %v2141
        %v2143 = vpop.xlane.xlu0 %2142
        %v2144 = vrcp.pop %v2143
        %v2145 = vmul.f32 %v2140, %v2144
        %v2147 = vsel %vm1091, %v2145, 0
        %2149 = vmatprep.subr.mxu0 0.0
        %2150 = vmatpush1.msra.mxu0 0.0
        %2151 = vmatprep.subr.mxu0 0.0
        %2152 = vmatpush1.msra.mxu0 0.0
        %2153 = vmatprep.subr.mxu0 0.0
        %2154 = vmatpush1.msra.mxu0 0.0
        %2155 = vmatprep.subr.mxu0 0.0
        %2156 = vmatpush1.msra.mxu0 0.0
        %2157 = vmatprep.subr.mxu0 0.0
        %2158 = vmatpush1.msra.mxu0 0.0
        %2159 = vmatprep.subr.mxu0 0.0
        %2160 = vmatpush1.msra.mxu0 0.0
        %2161 = vmatprep.subr.mxu0 0.0
        %2162 = vmatpush1.msra.mxu0 0.0
        %2163 = vmatprep.subr.mxu0 0.0
        %2164 = vmatpush1.msra.mxu0 0.0
        %2165 = vmatprep.subr.mxu0 0.0
        %2166 = vmatpush1.msra.mxu0 0.0
        %2167 = vmatprep.subr.mxu0 0.0
        %2168 = vmatpush1.msra.mxu0 0.0
        %2169 = vmatprep.subr.mxu0 0.0
        %2170 = vmatpush1.msra.mxu0 0.0
        %2171 = vmatprep.subr.mxu0 0.0
        %2172 = vmatpush1.msra.mxu0 0.0
        %2173 = vmatprep.subr.mxu0 0.0
        %2174 = vmatpush1.msra.mxu0 0.0
        %2175 = vmatprep.subr.mxu0 0.0
        %2176 = vmatpush1.msra.mxu0 0.0
        %2177 = vmatprep.subr.mxu0 0.0
        %2178 = vmatpush1.msra.mxu0 0.0
        %2179 = vmatprep.subr.mxu0 0.0
        %2180 = vmatpush1.msra.mxu0 %v2056
        %2181 = vmatprep.subr.mxu0 0.0
        %2182 = vmatpush2.msra.mxu0 0.0
        %2183 = vmatprep.subr.mxu0 0.0
        %2184 = vmatpush2.msra.mxu0 0.0
        %2185 = vmatprep.subr.mxu0 0.0
        %2186 = vmatpush2.msra.mxu0 0.0
        %2187 = vmatprep.subr.mxu0 0.0
        %2188 = vmatpush2.msra.mxu0 0.0
        %2189 = vmatprep.subr.mxu0 0.0
        %2190 = vmatpush2.msra.mxu0 0.0
        %2191 = vmatprep.subr.mxu0 0.0
        %2192 = vmatpush2.msra.mxu0 0.0
        %2193 = vmatprep.subr.mxu0 0.0
        %2194 = vmatpush2.msra.mxu0 0.0
        %2195 = vmatprep.subr.mxu0 0.0
        %2196 = vmatpush2.msra.mxu0 0.0
        %2197 = vmatprep.subr.mxu0 0.0
        %2198 = vmatpush2.msra.mxu0 0.0
        %2199 = vmatprep.subr.mxu0 0.0
        %2200 = vmatpush2.msra.mxu0 0.0
        %2201 = vmatprep.subr.mxu0 0.0
        %2202 = vmatpush2.msra.mxu0 0.0
        %2203 = vmatprep.subr.mxu0 0.0
        %2204 = vmatpush2.msra.mxu0 0.0
        %2205 = vmatprep.subr.mxu0 0.0
        %2206 = vmatpush2.msra.mxu0 0.0
        %2207 = vmatprep.subr.mxu0 0.0
        %2208 = vmatpush2.msra.mxu0 0.0
        %2209 = vmatprep.subr.mxu0 0.0
        %2210 = vmatpush2.msra.mxu0 0.0
        %2211 = vmatprep.subr.mxu0 0.0
        %2212 = vmatpush2.msra.mxu0 0.0
        %2213 = vmatprep.mubr.f32.mxu0 0.0
        %2214 = vmatmul.mubr.f32.gmra.mxu0 %v2147
        %v2215 = vpop.f32.mrf.mxu0
        %v2216 = vadd.f32 0.0, %v2215
        %v2217 = vpop.f32.mrf.mxu0
        %2218 = vdwg.mxu0
        %s2219 = scalar_lea.vmem %s10, 16
        %v2220 = vld [vmem:[%s2219] sm:$0xff]
        %v2222 = vsel %vm1091, %v2216, 0
        %2224 = vmatprep.subr.mxu0 0.0
        %2225 = vmatpush1.msra.mxu0 0.0
        %2226 = vmatprep.subr.mxu0 0.0
        %2227 = vmatpush1.msra.mxu0 0.0
        %2228 = vmatprep.subr.mxu0 0.0
        %2229 = vmatpush1.msra.mxu0 0.0
        %2230 = vmatprep.subr.mxu0 0.0
        %2231 = vmatpush1.msra.mxu0 0.0
        %2232 = vmatprep.subr.mxu0 0.0
        %2233 = vmatpush1.msra.mxu0 0.0
        %2234 = vmatprep.subr.mxu0 0.0
        %2235 = vmatpush1.msra.mxu0 0.0
        %2236 = vmatprep.subr.mxu0 0.0
        %2237 = vmatpush1.msra.mxu0 0.0
        %2238 = vmatprep.subr.mxu0 0.0
        %2239 = vmatpush1.msra.mxu0 0.0
        %2240 = vmatprep.subr.mxu0 0.0
        %2241 = vmatpush1.msra.mxu0 0.0
        %2242 = vmatprep.subr.mxu0 0.0
        %2243 = vmatpush1.msra.mxu0 0.0
        %2244 = vmatprep.subr.mxu0 0.0
        %2245 = vmatpush1.msra.mxu0 0.0
        %2246 = vmatprep.subr.mxu0 0.0
        %2247 = vmatpush1.msra.mxu0 0.0
        %2248 = vmatprep.subr.mxu0 0.0
        %2249 = vmatpush1.msra.mxu0 0.0
        %2250 = vmatprep.subr.mxu0 0.0
        %2251 = vmatpush1.msra.mxu0 0.0
        %2252 = vmatprep.subr.mxu0 0.0
        %2253 = vmatpush1.msra.mxu0 0.0
        %2254 = vmatprep.subr.mxu0 0.0
        %2255 = vmatpush1.msra.mxu0 %v2220
        %2256 = vmatprep.subr.mxu0 0.0
        %2257 = vmatpush2.msra.mxu0 0.0
        %2258 = vmatprep.subr.mxu0 0.0
        %2259 = vmatpush2.msra.mxu0 0.0
        %2260 = vmatprep.subr.mxu0 0.0
        %2261 = vmatpush2.msra.mxu0 0.0
        %2262 = vmatprep.subr.mxu0 0.0
        %2263 = vmatpush2.msra.mxu0 0.0
        %2264 = vmatprep.subr.mxu0 0.0
        %2265 = vmatpush2.msra.mxu0 0.0
        %2266 = vmatprep.subr.mxu0 0.0
        %2267 = vmatpush2.msra.mxu0 0.0
        %2268 = vmatprep.subr.mxu0 0.0
        %2269 = vmatpush2.msra.mxu0 0.0
        %2270 = vmatprep.subr.mxu0 0.0
        %2271 = vmatpush2.msra.mxu0 0.0
        %2272 = vmatprep.subr.mxu0 0.0
        %2273 = vmatpush2.msra.mxu0 0.0
        %2274 = vmatprep.subr.mxu0 0.0
        %2275 = vmatpush2.msra.mxu0 0.0
        %2276 = vmatprep.subr.mxu0 0.0
        %2277 = vmatpush2.msra.mxu0 0.0
        %2278 = vmatprep.subr.mxu0 0.0
        %2279 = vmatpush2.msra.mxu0 0.0
        %2280 = vmatprep.subr.mxu0 0.0
        %2281 = vmatpush2.msra.mxu0 0.0
        %2282 = vmatprep.subr.mxu0 0.0
        %2283 = vmatpush2.msra.mxu0 0.0
        %2284 = vmatprep.subr.mxu0 0.0
        %2285 = vmatpush2.msra.mxu0 0.0
        %2286 = vmatprep.subr.mxu0 0.0
        %2287 = vmatpush2.msra.mxu0 0.0
        %2288 = vmatprep.mubr.f32.mxu0 0.0
        %2289 = vmatmul.mubr.f32.gmra.mxu0 %v2222
        %v2290 = vpop.f32.mrf.mxu0
        %v2291 = vadd.f32 0.0, %v2290
        %v2292 = vpop.f32.mrf.mxu0
        %2293 = vdwg.mxu0
        %v2294 = vadd.f32 %v1807, %v2291
        %s2295 = scalar_lea.vmem %s4, 96
        %v2296 = vld [vmem:[%s2295] sm:$0xff]
        %v2297 = vld [vmem:[%s2295 + $0x8] sm:$0xff]
        %v2298 = vld [vmem:[%s2295 + $0x10] sm:$0xff]
        %v2299 = vld [vmem:[%s2295 + $0x18] sm:$0xff]
        %s2300 = scalar_lea.vmem %s5, 3
        %v2301 = vld [vmem:[%s2300] sm:$0x1]
        %v2303 = vlaneseq
        %v2304 = vshrl.u32 %v2303, 7
        %v2305 = vsub.s32 0, %v2304
        %v2306 = vrot.slane %v2301, %v2305
        %2308 = vmatprep.subr.mxu0 0.0
        %2309 = vmatpush1.msra.mxu0 0.0
        %2310 = vmatprep.subr.mxu0 0.0
        %2311 = vmatpush1.msra.mxu0 0.0
        %2312 = vmatprep.subr.mxu0 0.0
        %2313 = vmatpush1.msra.mxu0 0.0
        %2314 = vmatprep.subr.mxu0 0.0
        %2315 = vmatpush1.msra.mxu0 0.0
        %2316 = vmatprep.subr.mxu0 0.0
        %2317 = vmatpush1.msra.mxu0 0.0
        %2318 = vmatprep.subr.mxu0 0.0
        %2319 = vmatpush1.msra.mxu0 0.0
        %2320 = vmatprep.subr.mxu0 0.0
        %2321 = vmatpush1.msra.mxu0 0.0
        %2322 = vmatprep.subr.mxu0 0.0
        %2323 = vmatpush1.msra.mxu0 0.0
        %2324 = vmatprep.subr.mxu0 0.0
        %2325 = vmatpush1.msra.mxu0 0.0
        %2326 = vmatprep.subr.mxu0 0.0
        %2327 = vmatpush1.msra.mxu0 0.0
        %2328 = vmatprep.subr.mxu0 0.0
        %2329 = vmatpush1.msra.mxu0 0.0
        %2330 = vmatprep.subr.mxu0 0.0
        %2331 = vmatpush1.msra.mxu0 0.0
        %2332 = vmatprep.subr.mxu0 0.0
        %2333 = vmatpush1.msra.mxu0 %v2299
        %2334 = vmatprep.subr.mxu0 0.0
        %2335 = vmatpush1.msra.mxu0 %v2298
        %2336 = vmatprep.subr.mxu0 0.0
        %2337 = vmatpush1.msra.mxu0 %v2297
        %2338 = vmatprep.subr.mxu0 0.0
        %2339 = vmatpush1.msra.mxu0 %v2296
        %2340 = vmatprep.subr.mxu0 0.0
        %2341 = vmatpush2.msra.mxu0 0.0
        %2342 = vmatprep.subr.mxu0 0.0
        %2343 = vmatpush2.msra.mxu0 0.0
        %2344 = vmatprep.subr.mxu0 0.0
        %2345 = vmatpush2.msra.mxu0 0.0
        %2346 = vmatprep.subr.mxu0 0.0
        %2347 = vmatpush2.msra.mxu0 0.0
        %2348 = vmatprep.subr.mxu0 0.0
        %2349 = vmatpush2.msra.mxu0 0.0
        %2350 = vmatprep.subr.mxu0 0.0
        %2351 = vmatpush2.msra.mxu0 0.0
        %2352 = vmatprep.subr.mxu0 0.0
        %2353 = vmatpush2.msra.mxu0 0.0
        %2354 = vmatprep.subr.mxu0 0.0
        %2355 = vmatpush2.msra.mxu0 0.0
        %2356 = vmatprep.subr.mxu0 0.0
        %2357 = vmatpush2.msra.mxu0 0.0
        %2358 = vmatprep.subr.mxu0 0.0
        %2359 = vmatpush2.msra.mxu0 0.0
        %2360 = vmatprep.subr.mxu0 0.0
        %2361 = vmatpush2.msra.mxu0 0.0
        %2362 = vmatprep.subr.mxu0 0.0
        %2363 = vmatpush2.msra.mxu0 0.0
        %2364 = vmatprep.subr.mxu0 0.0
        %2365 = vmatpush2.msra.mxu0 0.0
        %2366 = vmatprep.subr.mxu0 0.0
        %2367 = vmatpush2.msra.mxu0 0.0
        %2368 = vmatprep.subr.mxu0 0.0
        %2369 = vmatpush2.msra.mxu0 0.0
        %2370 = vmatprep.subr.mxu0 0.0
        %2371 = vmatpush2.msra.mxu0 0.0
        %2372 = vmatprep.mubr.f32.mxu0 0.0
        %2373 = vmatmul.mubr.f32.gmra.mxu0 %v857
        %v2374 = vpop.f32.mrf.mxu0
        %v2375 = vadd.f32 %v2306, %v2374
        %v2376 = vpop.f32.mrf.mxu0
        %2377 = vdwg.mxu0
        %s2378 = scalar_lea.vmem %s6, 96
        %v2379 = vld [vmem:[%s2378] sm:$0xff]
        %v2380 = vld [vmem:[%s2378 + $0x8] sm:$0xff]
        %v2381 = vld [vmem:[%s2378 + $0x10] sm:$0xff]
        %v2382 = vld [vmem:[%s2378 + $0x18] sm:$0xff]
        %s2383 = scalar_lea.vmem %s7, 3
        %v2384 = vld [vmem:[%s2383] sm:$0x1]
        %v2386 = vlaneseq
        %v2387 = vshrl.u32 %v2386, 7
        %v2388 = vsub.s32 0, %v2387
        %v2389 = vrot.slane %v2384, %v2388
        %2391 = vmatprep.subr.mxu0 0.0
        %2392 = vmatpush1.msra.mxu0 0.0
        %2393 = vmatprep.subr.mxu0 0.0
        %2394 = vmatpush1.msra.mxu0 0.0
        %2395 = vmatprep.subr.mxu0 0.0
        %2396 = vmatpush1.msra.mxu0 0.0
        %2397 = vmatprep.subr.mxu0 0.0
        %2398 = vmatpush1.msra.mxu0 0.0
        %2399 = vmatprep.subr.mxu0 0.0
        %2400 = vmatpush1.msra.mxu0 0.0
        %2401 = vmatprep.subr.mxu0 0.0
        %2402 = vmatpush1.msra.mxu0 0.0
        %2403 = vmatprep.subr.mxu0 0.0
        %2404 = vmatpush1.msra.mxu0 0.0
        %2405 = vmatprep.subr.mxu0 0.0
        %2406 = vmatpush1.msra.mxu0 0.0
        %2407 = vmatprep.subr.mxu0 0.0
        %2408 = vmatpush1.msra.mxu0 0.0
        %2409 = vmatprep.subr.mxu0 0.0
        %2410 = vmatpush1.msra.mxu0 0.0
        %2411 = vmatprep.subr.mxu0 0.0
        %2412 = vmatpush1.msra.mxu0 0.0
        %2413 = vmatprep.subr.mxu0 0.0
        %2414 = vmatpush1.msra.mxu0 0.0
        %2415 = vmatprep.subr.mxu0 0.0
        %2416 = vmatpush1.msra.mxu0 %v2382
        %2417 = vmatprep.subr.mxu0 0.0
        %2418 = vmatpush1.msra.mxu0 %v2381
        %2419 = vmatprep.subr.mxu0 0.0
        %2420 = vmatpush1.msra.mxu0 %v2380
        %2421 = vmatprep.subr.mxu0 0.0
        %2422 = vmatpush1.msra.mxu0 %v2379
        %2423 = vmatprep.subr.mxu0 0.0
        %2424 = vmatpush2.msra.mxu0 0.0
        %2425 = vmatprep.subr.mxu0 0.0
        %2426 = vmatpush2.msra.mxu0 0.0
        %2427 = vmatprep.subr.mxu0 0.0
        %2428 = vmatpush2.msra.mxu0 0.0
        %2429 = vmatprep.subr.mxu0 0.0
        %2430 = vmatpush2.msra.mxu0 0.0
        %2431 = vmatprep.subr.mxu0 0.0
        %2432 = vmatpush2.msra.mxu0 0.0
        %2433 = vmatprep.subr.mxu0 0.0
        %2434 = vmatpush2.msra.mxu0 0.0
        %2435 = vmatprep.subr.mxu0 0.0
        %2436 = vmatpush2.msra.mxu0 0.0
        %2437 = vmatprep.subr.mxu0 0.0
        %2438 = vmatpush2.msra.mxu0 0.0
        %2439 = vmatprep.subr.mxu0 0.0
        %2440 = vmatpush2.msra.mxu0 0.0
        %2441 = vmatprep.subr.mxu0 0.0
        %2442 = vmatpush2.msra.mxu0 0.0
        %2443 = vmatprep.subr.mxu0 0.0
        %2444 = vmatpush2.msra.mxu0 0.0
        %2445 = vmatprep.subr.mxu0 0.0
        %2446 = vmatpush2.msra.mxu0 0.0
        %2447 = vmatprep.subr.mxu0 0.0
        %2448 = vmatpush2.msra.mxu0 0.0
        %2449 = vmatprep.subr.mxu0 0.0
        %2450 = vmatpush2.msra.mxu0 0.0
        %2451 = vmatprep.subr.mxu0 0.0
        %2452 = vmatpush2.msra.mxu0 0.0
        %2453 = vmatprep.subr.mxu0 0.0
        %2454 = vmatpush2.msra.mxu0 0.0
        %2455 = vmatprep.mubr.f32.mxu0 0.0
        %2456 = vmatmul.mubr.f32.gmra.mxu0 %v857
        %v2457 = vpop.f32.mrf.mxu0
        %v2458 = vadd.f32 %v2389, %v2457
        %v2459 = vpop.f32.mrf.mxu0
        %2460 = vdwg.mxu0
        %s2461 = scalar_lea.vmem %s8, 96
        %v2462 = vld [vmem:[%s2461] sm:$0xff]
        %v2463 = vld [vmem:[%s2461 + $0x8] sm:$0xff]
        %v2464 = vld [vmem:[%s2461 + $0x10] sm:$0xff]
        %v2465 = vld [vmem:[%s2461 + $0x18] sm:$0xff]
        %s2466 = scalar_lea.vmem %s9, 3
        %v2467 = vld [vmem:[%s2466] sm:$0x1]
        %v2469 = vlaneseq
        %v2470 = vshrl.u32 %v2469, 7
        %v2471 = vsub.s32 0, %v2470
        %v2472 = vrot.slane %v2467, %v2471
        %2474 = vmatprep.subr.mxu0 0.0
        %2475 = vmatpush1.msra.mxu0 0.0
        %2476 = vmatprep.subr.mxu0 0.0
        %2477 = vmatpush1.msra.mxu0 0.0
        %2478 = vmatprep.subr.mxu0 0.0
        %2479 = vmatpush1.msra.mxu0 0.0
        %2480 = vmatprep.subr.mxu0 0.0
        %2481 = vmatpush1.msra.mxu0 0.0
        %2482 = vmatprep.subr.mxu0 0.0
        %2483 = vmatpush1.msra.mxu0 0.0
        %2484 = vmatprep.subr.mxu0 0.0
        %2485 = vmatpush1.msra.mxu0 0.0
        %2486 = vmatprep.subr.mxu0 0.0
        %2487 = vmatpush1.msra.mxu0 0.0
        %2488 = vmatprep.subr.mxu0 0.0
        %2489 = vmatpush1.msra.mxu0 0.0
        %2490 = vmatprep.subr.mxu0 0.0
        %2491 = vmatpush1.msra.mxu0 0.0
        %2492 = vmatprep.subr.mxu0 0.0
        %2493 = vmatpush1.msra.mxu0 0.0
        %2494 = vmatprep.subr.mxu0 0.0
        %2495 = vmatpush1.msra.mxu0 0.0
        %2496 = vmatprep.subr.mxu0 0.0
        %2497 = vmatpush1.msra.mxu0 0.0
        %2498 = vmatprep.subr.mxu0 0.0
        %2499 = vmatpush1.msra.mxu0 %v2465
        %2500 = vmatprep.subr.mxu0 0.0
        %2501 = vmatpush1.msra.mxu0 %v2464
        %2502 = vmatprep.subr.mxu0 0.0
        %2503 = vmatpush1.msra.mxu0 %v2463
        %2504 = vmatprep.subr.mxu0 0.0
        %2505 = vmatpush1.msra.mxu0 %v2462
        %2506 = vmatprep.subr.mxu0 0.0
        %2507 = vmatpush2.msra.mxu0 0.0
        %2508 = vmatprep.subr.mxu0 0.0
        %2509 = vmatpush2.msra.mxu0 0.0
        %2510 = vmatprep.subr.mxu0 0.0
        %2511 = vmatpush2.msra.mxu0 0.0
        %2512 = vmatprep.subr.mxu0 0.0
        %2513 = vmatpush2.msra.mxu0 0.0
        %2514 = vmatprep.subr.mxu0 0.0
        %2515 = vmatpush2.msra.mxu0 0.0
        %2516 = vmatprep.subr.mxu0 0.0
        %2517 = vmatpush2.msra.mxu0 0.0
        %2518 = vmatprep.subr.mxu0 0.0
        %2519 = vmatpush2.msra.mxu0 0.0
        %2520 = vmatprep.subr.mxu0 0.0
        %2521 = vmatpush2.msra.mxu0 0.0
        %2522 = vmatprep.subr.mxu0 0.0
        %2523 = vmatpush2.msra.mxu0 0.0
        %2524 = vmatprep.subr.mxu0 0.0
        %2525 = vmatpush2.msra.mxu0 0.0
        %2526 = vmatprep.subr.mxu0 0.0
        %2527 = vmatpush2.msra.mxu0 0.0
        %2528 = vmatprep.subr.mxu0 0.0
        %2529 = vmatpush2.msra.mxu0 0.0
        %2530 = vmatprep.subr.mxu0 0.0
        %2531 = vmatpush2.msra.mxu0 0.0
        %2532 = vmatprep.subr.mxu0 0.0
        %2533 = vmatpush2.msra.mxu0 0.0
        %2534 = vmatprep.subr.mxu0 0.0
        %2535 = vmatpush2.msra.mxu0 0.0
        %2536 = vmatprep.subr.mxu0 0.0
        %2537 = vmatpush2.msra.mxu0 0.0
        %2538 = vmatprep.mubr.f32.mxu0 0.0
        %2539 = vmatmul.mubr.f32.gmra.mxu0 %v857
        %v2540 = vpop.f32.mrf.mxu0
        %v2541 = vadd.f32 %v2472, %v2540
        %v2542 = vpop.f32.mrf.mxu0
        %2543 = vdwg.mxu0
        %v2545 = vsel %vm1091, %v2375, 0
        %v2548 = vsel %vm1091, %v2458, 0
        %2550 = vmatprep.subr.mxu0 0.0
        %2551 = vmatpush1.xpose.msra.mxu0 0.0
        %2552 = vmatprep.subr.mxu0 0.0
        %2553 = vmatpush1.xpose.msra.mxu0 0.0
        %2554 = vmatprep.subr.mxu0 0.0
        %2555 = vmatpush1.xpose.msra.mxu0 0.0
        %2556 = vmatprep.subr.mxu0 0.0
        %2557 = vmatpush1.xpose.msra.mxu0 0.0
        %2558 = vmatprep.subr.mxu0 0.0
        %2559 = vmatpush1.xpose.msra.mxu0 0.0
        %2560 = vmatprep.subr.mxu0 0.0
        %2561 = vmatpush1.xpose.msra.mxu0 0.0
        %2562 = vmatprep.subr.mxu0 0.0
        %2563 = vmatpush1.xpose.msra.mxu0 0.0
        %2564 = vmatprep.subr.mxu0 0.0
        %2565 = vmatpush1.xpose.msra.mxu0 0.0
        %2566 = vmatprep.subr.mxu0 0.0
        %2567 = vmatpush1.xpose.msra.mxu0 0.0
        %2568 = vmatprep.subr.mxu0 0.0
        %2569 = vmatpush1.xpose.msra.mxu0 0.0
        %2570 = vmatprep.subr.mxu0 0.0
        %2571 = vmatpush1.xpose.msra.mxu0 0.0
        %2572 = vmatprep.subr.mxu0 0.0
        %2573 = vmatpush1.xpose.msra.mxu0 0.0
        %2574 = vmatprep.subr.mxu0 0.0
        %2575 = vmatpush1.xpose.msra.mxu0 0.0
        %2576 = vmatprep.subr.mxu0 0.0
        %2577 = vmatpush1.xpose.msra.mxu0 0.0
        %2578 = vmatprep.subr.mxu0 0.0
        %2579 = vmatpush1.xpose.msra.mxu0 0.0
        %2580 = vmatprep.subr.mxu0 0.0
        %2581 = vmatpush1.xpose.msra.mxu0 %v2548
        %2582 = vmatprep.subr.mxu0 0.0
        %2583 = vmatpush2.xpose.msra.mxu0 0.0
        %2584 = vmatprep.subr.mxu0 0.0
        %2585 = vmatpush2.xpose.msra.mxu0 0.0
        %2586 = vmatprep.subr.mxu0 0.0
        %2587 = vmatpush2.xpose.msra.mxu0 0.0
        %2588 = vmatprep.subr.mxu0 0.0
        %2589 = vmatpush2.xpose.msra.mxu0 0.0
        %2590 = vmatprep.subr.mxu0 0.0
        %2591 = vmatpush2.xpose.msra.mxu0 0.0
        %2592 = vmatprep.subr.mxu0 0.0
        %2593 = vmatpush2.xpose.msra.mxu0 0.0
        %2594 = vmatprep.subr.mxu0 0.0
        %2595 = vmatpush2.xpose.msra.mxu0 0.0
        %2596 = vmatprep.subr.mxu0 0.0
        %2597 = vmatpush2.xpose.msra.mxu0 0.0
        %2598 = vmatprep.subr.mxu0 0.0
        %2599 = vmatpush2.xpose.msra.mxu0 0.0
        %2600 = vmatprep.subr.mxu0 0.0
        %2601 = vmatpush2.xpose.msra.mxu0 0.0
        %2602 = vmatprep.subr.mxu0 0.0
        %2603 = vmatpush2.xpose.msra.mxu0 0.0
        %2604 = vmatprep.subr.mxu0 0.0
        %2605 = vmatpush2.xpose.msra.mxu0 0.0
        %2606 = vmatprep.subr.mxu0 0.0
        %2607 = vmatpush2.xpose.msra.mxu0 0.0
        %2608 = vmatprep.subr.mxu0 0.0
        %2609 = vmatpush2.xpose.msra.mxu0 0.0
        %2610 = vmatprep.subr.mxu0 0.0
        %2611 = vmatpush2.xpose.msra.mxu0 0.0
        %2612 = vmatprep.subr.mxu0 0.0
        %2613 = vmatpush2.xpose.msra.mxu0 0.0
        %2614 = vmatprep.mubr.f32.mxu0 0.0
        %2615 = vmatmul.mubr.f32.gmra.mxu0 %v2545
        %v2616 = vpop.f32.mrf.mxu0
        %v2617 = vadd.f32 %v840, %v2616
        %v2618 = vpop.f32.mrf.mxu0
        %2619 = vdwg.mxu0
        %v2620 = vsel %vm1091, %v2617, -inf
        %2621 = vmax.xlane.f32.xlu0 %v2620
        %v2622 = vpop.xlane.xlu0 %2621
        %v2623 = vsub.f32 %v2617, %v2622
        %v2624 = vmul.f32 %v2623, 1.442695
        %v2625 = vpow.pop %v2624
        %v2626 = vsel %vm1091, %v2625, 0.0
        %2627 = vadd.xlane.f32.xlu0 %v2626
        %v2628 = vpop.xlane.xlu0 %2627
        %v2629 = vrcp.pop %v2628
        %v2630 = vmul.f32 %v2625, %v2629
        %v2632 = vsel %vm1091, %v2630, 0
        %2634 = vmatprep.subr.mxu0 0.0
        %2635 = vmatpush1.msra.mxu0 0.0
        %2636 = vmatprep.subr.mxu0 0.0
        %2637 = vmatpush1.msra.mxu0 0.0
        %2638 = vmatprep.subr.mxu0 0.0
        %2639 = vmatpush1.msra.mxu0 0.0
        %2640 = vmatprep.subr.mxu0 0.0
        %2641 = vmatpush1.msra.mxu0 0.0
        %2642 = vmatprep.subr.mxu0 0.0
        %2643 = vmatpush1.msra.mxu0 0.0
        %2644 = vmatprep.subr.mxu0 0.0
        %2645 = vmatpush1.msra.mxu0 0.0
        %2646 = vmatprep.subr.mxu0 0.0
        %2647 = vmatpush1.msra.mxu0 0.0
        %2648 = vmatprep.subr.mxu0 0.0
        %2649 = vmatpush1.msra.mxu0 0.0
        %2650 = vmatprep.subr.mxu0 0.0
        %2651 = vmatpush1.msra.mxu0 0.0
        %2652 = vmatprep.subr.mxu0 0.0
        %2653 = vmatpush1.msra.mxu0 0.0
        %2654 = vmatprep.subr.mxu0 0.0
        %2655 = vmatpush1.msra.mxu0 0.0
        %2656 = vmatprep.subr.mxu0 0.0
        %2657 = vmatpush1.msra.mxu0 0.0
        %2658 = vmatprep.subr.mxu0 0.0
        %2659 = vmatpush1.msra.mxu0 0.0
        %2660 = vmatprep.subr.mxu0 0.0
        %2661 = vmatpush1.msra.mxu0 0.0
        %2662 = vmatprep.subr.mxu0 0.0
        %2663 = vmatpush1.msra.mxu0 0.0
        %2664 = vmatprep.subr.mxu0 0.0
        %2665 = vmatpush1.msra.mxu0 %v2541
        %2666 = vmatprep.subr.mxu0 0.0
        %2667 = vmatpush2.msra.mxu0 0.0
        %2668 = vmatprep.subr.mxu0 0.0
        %2669 = vmatpush2.msra.mxu0 0.0
        %2670 = vmatprep.subr.mxu0 0.0
        %2671 = vmatpush2.msra.mxu0 0.0
        %2672 = vmatprep.subr.mxu0 0.0
        %2673 = vmatpush2.msra.mxu0 0.0
        %2674 = vmatprep.subr.mxu0 0.0
        %2675 = vmatpush2.msra.mxu0 0.0
        %2676 = vmatprep.subr.mxu0 0.0
        %2677 = vmatpush2.msra.mxu0 0.0
        %2678 = vmatprep.subr.mxu0 0.0
        %2679 = vmatpush2.msra.mxu0 0.0
        %2680 = vmatprep.subr.mxu0 0.0
        %2681 = vmatpush2.msra.mxu0 0.0
        %2682 = vmatprep.subr.mxu0 0.0
        %2683 = vmatpush2.msra.mxu0 0.0
        %2684 = vmatprep.subr.mxu0 0.0
        %2685 = vmatpush2.msra.mxu0 0.0
        %2686 = vmatprep.subr.mxu0 0.0
        %2687 = vmatpush2.msra.mxu0 0.0
        %2688 = vmatprep.subr.mxu0 0.0
        %2689 = vmatpush2.msra.mxu0 0.0
        %2690 = vmatprep.subr.mxu0 0.0
        %2691 = vmatpush2.msra.mxu0 0.0
        %2692 = vmatprep.subr.mxu0 0.0
        %2693 = vmatpush2.msra.mxu0 0.0
        %2694 = vmatprep.subr.mxu0 0.0
        %2695 = vmatpush2.msra.mxu0 0.0
        %2696 = vmatprep.subr.mxu0 0.0
        %2697 = vmatpush2.msra.mxu0 0.0
        %2698 = vmatprep.mubr.f32.mxu0 0.0
        %2699 = vmatmul.mubr.f32.gmra.mxu0 %v2632
        %v2700 = vpop.f32.mrf.mxu0
        %v2701 = vadd.f32 0.0, %v2700
        %v2702 = vpop.f32.mrf.mxu0
        %2703 = vdwg.mxu0
        %s2704 = scalar_lea.vmem %s10, 24
        %v2705 = vld [vmem:[%s2704] sm:$0xff]
        %v2707 = vsel %vm1091, %v2701, 0
        %2709 = vmatprep.subr.mxu0 0.0
        %2710 = vmatpush1.msra.mxu0 0.0
        %2711 = vmatprep.subr.mxu0 0.0
        %2712 = vmatpush1.msra.mxu0 0.0
        %2713 = vmatprep.subr.mxu0 0.0
        %2714 = vmatpush1.msra.mxu0 0.0
        %2715 = vmatprep.subr.mxu0 0.0
        %2716 = vmatpush1.msra.mxu0 0.0
        %2717 = vmatprep.subr.mxu0 0.0
        %2718 = vmatpush1.msra.mxu0 0.0
        %2719 = vmatprep.subr.mxu0 0.0
        %2720 = vmatpush1.msra.mxu0 0.0
        %2721 = vmatprep.subr.mxu0 0.0
        %2722 = vmatpush1.msra.mxu0 0.0
        %2723 = vmatprep.subr.mxu0 0.0
        %2724 = vmatpush1.msra.mxu0 0.0
        %2725 = vmatprep.subr.mxu0 0.0
        %2726 = vmatpush1.msra.mxu0 0.0
        %2727 = vmatprep.subr.mxu0 0.0
        %2728 = vmatpush1.msra.mxu0 0.0
        %2729 = vmatprep.subr.mxu0 0.0
        %2730 = vmatpush1.msra.mxu0 0.0
        %2731 = vmatprep.subr.mxu0 0.0
        %2732 = vmatpush1.msra.mxu0 0.0
        %2733 = vmatprep.subr.mxu0 0.0
        %2734 = vmatpush1.msra.mxu0 0.0
        %2735 = vmatprep.subr.mxu0 0.0
        %2736 = vmatpush1.msra.mxu0 0.0
        %2737 = vmatprep.subr.mxu0 0.0
        %2738 = vmatpush1.msra.mxu0 0.0
        %2739 = vmatprep.subr.mxu0 0.0
        %2740 = vmatpush1.msra.mxu0 %v2705
        %2741 = vmatprep.subr.mxu0 0.0
        %2742 = vmatpush2.msra.mxu0 0.0
        %2743 = vmatprep.subr.mxu0 0.0
        %2744 = vmatpush2.msra.mxu0 0.0
        %2745 = vmatprep.subr.mxu0 0.0
        %2746 = vmatpush2.msra.mxu0 0.0
        %2747 = vmatprep.subr.mxu0 0.0
        %2748 = vmatpush2.msra.mxu0 0.0
        %2749 = vmatprep.subr.mxu0 0.0
        %2750 = vmatpush2.msra.mxu0 0.0
        %2751 = vmatprep.subr.mxu0 0.0
        %2752 = vmatpush2.msra.mxu0 0.0
        %2753 = vmatprep.subr.mxu0 0.0
        %2754 = vmatpush2.msra.mxu0 0.0
        %2755 = vmatprep.subr.mxu0 0.0
        %2756 = vmatpush2.msra.mxu0 0.0
        %2757 = vmatprep.subr.mxu0 0.0
        %2758 = vmatpush2.msra.mxu0 0.0
        %2759 = vmatprep.subr.mxu0 0.0
        %2760 = vmatpush2.msra.mxu0 0.0
        %2761 = vmatprep.subr.mxu0 0.0
        %2762 = vmatpush2.msra.mxu0 0.0
        %2763 = vmatprep.subr.mxu0 0.0
        %2764 = vmatpush2.msra.mxu0 0.0
        %2765 = vmatprep.subr.mxu0 0.0
        %2766 = vmatpush2.msra.mxu0 0.0
        %2767 = vmatprep.subr.mxu0 0.0
        %2768 = vmatpush2.msra.mxu0 0.0
        %2769 = vmatprep.subr.mxu0 0.0
        %2770 = vmatpush2.msra.mxu0 0.0
        %2771 = vmatprep.subr.mxu0 0.0
        %2772 = vmatpush2.msra.mxu0 0.0
        %2773 = vmatprep.mubr.f32.mxu0 0.0
        %2774 = vmatmul.mubr.f32.gmra.mxu0 %v2707
        %v2775 = vpop.f32.mrf.mxu0
        %v2776 = vadd.f32 0.0, %v2775
        %v2777 = vpop.f32.mrf.mxu0
        %2778 = vdwg.mxu0
        %v2779 = vadd.f32 %v2294, %v2776
        %v2780 = vld [vmem:[%s11] sm:$0x1]
        %v2782 = vlaneseq
        %v2783 = vshrl.u32 %v2782, 7
        %v2784 = vsub.s32 0, %v2783
        %v2785 = vrot.slane %v2780, %v2784
        %v2787 = vadd.f32 %v2779, %v2785
        %v2788 = vadd.f32 %v2787, %v838
        %v2789 = vsel %vm855, %v2788, 0.0
        %2790 = vadd.xlane.f32.xlu0 %v2789
        %v2791 = vpop.xlane.xlu0 %2790
        %v2792 = vrcp.pop 32.0
        %v2793 = vmul.f32 %v2791, %v2792
        %v2794 = vsub.f32 %v2788, %v2793
        %v2795 = vmul.f32 %v2794, %v2794
        %v2796 = vsel %vm855, %v2795, 0.0
        %2797 = vadd.xlane.f32.xlu0 %v2796
        %v2798 = vpop.xlane.xlu0 %2797
        %v2799 = vmul.f32 %v2798, %v2792
        %v2800 = vadd.f32 %v2799, 1e-05
        %v2801 = vrsqrt.pop %v2800
        %v2802 = vmul.f32 %v2794, %v2801
        %v2804 = vlaneseq
        %v2805 = vshrl.u32 %v2804, 7
        %v2806 = vsub.s32 0, %v2805
        %v2807 = vrot.slane %v842, %v2806
        %v2809 = vmul.f32 %v2802, %v2807
        %v2811 = vlaneseq
        %v2812 = vshrl.u32 %v2811, 7
        %v2813 = vsub.s32 0, %v2812
        %v2814 = vrot.slane %v843, %v2813
        %v2816 = vadd.f32 %v2809, %v2814
        %v2817 = vld [vmem:[%s12] sm:$0xff]
        %v2818 = vld [vmem:[%s12 + $0x8] sm:$0xff]
        %v2819 = vld [vmem:[%s12 + $0x10] sm:$0xff]
        %v2820 = vld [vmem:[%s12 + $0x18] sm:$0xff]
        %v2821 = vld [vmem:[%s13] sm:$0x1]
        %v2823 = vlaneseq
        %v2824 = vshrl.u32 %v2823, 7
        %v2825 = vsub.s32 0, %v2824
        %v2826 = vrot.slane %v2821, %v2825
        %v2829 = vsel %vm855, %v2816, 0
        %2831 = vmatprep.subr.mxu0 0.0
        %2832 = vmatpush1.msra.mxu0 0.0
        %2833 = vmatprep.subr.mxu0 0.0
        %2834 = vmatpush1.msra.mxu0 0.0
        %2835 = vmatprep.subr.mxu0 0.0
        %2836 = vmatpush1.msra.mxu0 0.0
        %2837 = vmatprep.subr.mxu0 0.0
        %2838 = vmatpush1.msra.mxu0 0.0
        %2839 = vmatprep.subr.mxu0 0.0
        %2840 = vmatpush1.msra.mxu0 0.0
        %2841 = vmatprep.subr.mxu0 0.0
        %2842 = vmatpush1.msra.mxu0 0.0
        %2843 = vmatprep.subr.mxu0 0.0
        %2844 = vmatpush1.msra.mxu0 0.0
        %2845 = vmatprep.subr.mxu0 0.0
        %2846 = vmatpush1.msra.mxu0 0.0
        %2847 = vmatprep.subr.mxu0 0.0
        %2848 = vmatpush1.msra.mxu0 0.0
        %2849 = vmatprep.subr.mxu0 0.0
        %2850 = vmatpush1.msra.mxu0 0.0
        %2851 = vmatprep.subr.mxu0 0.0
        %2852 = vmatpush1.msra.mxu0 0.0
        %2853 = vmatprep.subr.mxu0 0.0
        %2854 = vmatpush1.msra.mxu0 0.0
        %2855 = vmatprep.subr.mxu0 0.0
        %2856 = vmatpush1.msra.mxu0 %v2820
        %2857 = vmatprep.subr.mxu0 0.0
        %2858 = vmatpush1.msra.mxu0 %v2819
        %2859 = vmatprep.subr.mxu0 0.0
        %2860 = vmatpush1.msra.mxu0 %v2818
        %2861 = vmatprep.subr.mxu0 0.0
        %2862 = vmatpush1.msra.mxu0 %v2817
        %2863 = vmatprep.subr.mxu0 0.0
        %2864 = vmatpush2.msra.mxu0 0.0
        %2865 = vmatprep.subr.mxu0 0.0
        %2866 = vmatpush2.msra.mxu0 0.0
        %2867 = vmatprep.subr.mxu0 0.0
        %2868 = vmatpush2.msra.mxu0 0.0
        %2869 = vmatprep.subr.mxu0 0.0
        %2870 = vmatpush2.msra.mxu0 0.0
        %2871 = vmatprep.subr.mxu0 0.0
        %2872 = vmatpush2.msra.mxu0 0.0
        %2873 = vmatprep.subr.mxu0 0.0
        %2874 = vmatpush2.msra.mxu0 0.0
        %2875 = vmatprep.subr.mxu0 0.0
        %2876 = vmatpush2.msra.mxu0 0.0
        %2877 = vmatprep.subr.mxu0 0.0
        %2878 = vmatpush2.msra.mxu0 0.0
        %2879 = vmatprep.subr.mxu0 0.0
        %2880 = vmatpush2.msra.mxu0 0.0
        %2881 = vmatprep.subr.mxu0 0.0
        %2882 = vmatpush2.msra.mxu0 0.0
        %2883 = vmatprep.subr.mxu0 0.0
        %2884 = vmatpush2.msra.mxu0 0.0
        %2885 = vmatprep.subr.mxu0 0.0
        %2886 = vmatpush2.msra.mxu0 0.0
        %2887 = vmatprep.subr.mxu0 0.0
        %2888 = vmatpush2.msra.mxu0 0.0
        %2889 = vmatprep.subr.mxu0 0.0
        %2890 = vmatpush2.msra.mxu0 0.0
        %2891 = vmatprep.subr.mxu0 0.0
        %2892 = vmatpush2.msra.mxu0 0.0
        %2893 = vmatprep.subr.mxu0 0.0
        %2894 = vmatpush2.msra.mxu0 0.0
        %2895 = vmatprep.mubr.f32.mxu0 0.0
        %2896 = vmatmul.mubr.f32.gmra.mxu0 %v2829
        %v2897 = vpop.f32.mrf.mxu0
        %v2898 = vadd.f32 %v2826, %v2897
        %v2899 = vpop.f32.mrf.mxu0
        %2900 = vdwg.mxu0
        %v2901 = vld [vmem:[%s14] sm:$0xff]
        %v2902 = vld [vmem:[%s14 + $0x8] sm:$0xff]
        %v2903 = vld [vmem:[%s14 + $0x10] sm:$0xff]
        %v2904 = vld [vmem:[%s14 + $0x18] sm:$0xff]
        %v2905 = vld [vmem:[%s15] sm:$0x1]
        %v2907 = vlaneseq
        %v2908 = vshrl.u32 %v2907, 7
        %v2909 = vsub.s32 0, %v2908
        %v2910 = vrot.slane %v2905, %v2909
        %v2913 = vsel %vm855, %v839, 0
        %2915 = vmatprep.subr.mxu0 0.0
        %2916 = vmatpush1.msra.mxu0 0.0
        %2917 = vmatprep.subr.mxu0 0.0
        %2918 = vmatpush1.msra.mxu0 0.0
        %2919 = vmatprep.subr.mxu0 0.0
        %2920 = vmatpush1.msra.mxu0 0.0
        %2921 = vmatprep.subr.mxu0 0.0
        %2922 = vmatpush1.msra.mxu0 0.0
        %2923 = vmatprep.subr.mxu0 0.0
        %2924 = vmatpush1.msra.mxu0 0.0
        %2925 = vmatprep.subr.mxu0 0.0
        %2926 = vmatpush1.msra.mxu0 0.0
        %2927 = vmatprep.subr.mxu0 0.0
        %2928 = vmatpush1.msra.mxu0 0.0
        %2929 = vmatprep.subr.mxu0 0.0
        %2930 = vmatpush1.msra.mxu0 0.0
        %2931 = vmatprep.subr.mxu0 0.0
        %2932 = vmatpush1.msra.mxu0 0.0
        %2933 = vmatprep.subr.mxu0 0.0
        %2934 = vmatpush1.msra.mxu0 0.0
        %2935 = vmatprep.subr.mxu0 0.0
        %2936 = vmatpush1.msra.mxu0 0.0
        %2937 = vmatprep.subr.mxu0 0.0
        %2938 = vmatpush1.msra.mxu0 0.0
        %2939 = vmatprep.subr.mxu0 0.0
        %2940 = vmatpush1.msra.mxu0 %v2904
        %2941 = vmatprep.subr.mxu0 0.0
        %2942 = vmatpush1.msra.mxu0 %v2903
        %2943 = vmatprep.subr.mxu0 0.0
        %2944 = vmatpush1.msra.mxu0 %v2902
        %2945 = vmatprep.subr.mxu0 0.0
        %2946 = vmatpush1.msra.mxu0 %v2901
        %2947 = vmatprep.subr.mxu0 0.0
        %2948 = vmatpush2.msra.mxu0 0.0
        %2949 = vmatprep.subr.mxu0 0.0
        %2950 = vmatpush2.msra.mxu0 0.0
        %2951 = vmatprep.subr.mxu0 0.0
        %2952 = vmatpush2.msra.mxu0 0.0
        %2953 = vmatprep.subr.mxu0 0.0
        %2954 = vmatpush2.msra.mxu0 0.0
        %2955 = vmatprep.subr.mxu0 0.0
        %2956 = vmatpush2.msra.mxu0 0.0
        %2957 = vmatprep.subr.mxu0 0.0
        %2958 = vmatpush2.msra.mxu0 0.0
        %2959 = vmatprep.subr.mxu0 0.0
        %2960 = vmatpush2.msra.mxu0 0.0
        %2961 = vmatprep.subr.mxu0 0.0
        %2962 = vmatpush2.msra.mxu0 0.0
        %2963 = vmatprep.subr.mxu0 0.0
        %2964 = vmatpush2.msra.mxu0 0.0
        %2965 = vmatprep.subr.mxu0 0.0
        %2966 = vmatpush2.msra.mxu0 0.0
        %2967 = vmatprep.subr.mxu0 0.0
        %2968 = vmatpush2.msra.mxu0 0.0
        %2969 = vmatprep.subr.mxu0 0.0
        %2970 = vmatpush2.msra.mxu0 0.0
        %2971 = vmatprep.subr.mxu0 0.0
        %2972 = vmatpush2.msra.mxu0 0.0
        %2973 = vmatprep.subr.mxu0 0.0
        %2974 = vmatpush2.msra.mxu0 0.0
        %2975 = vmatprep.subr.mxu0 0.0
        %2976 = vmatpush2.msra.mxu0 0.0
        %2977 = vmatprep.subr.mxu0 0.0
        %2978 = vmatpush2.msra.mxu0 0.0
        %2979 = vmatprep.mubr.f32.mxu0 0.0
        %2980 = vmatmul.mubr.f32.gmra.mxu0 %v2913
        %v2981 = vpop.f32.mrf.mxu0
        %v2982 = vadd.f32 %v2910, %v2981
        %v2983 = vpop.f32.mrf.mxu0
        %2984 = vdwg.mxu0
        %v2985 = vld [vmem:[%s16] sm:$0xff]
        %v2986 = vld [vmem:[%s16 + $0x8] sm:$0xff]
        %v2987 = vld [vmem:[%s16 + $0x10] sm:$0xff]
        %v2988 = vld [vmem:[%s16 + $0x18] sm:$0xff]
        %v2989 = vld [vmem:[%s17] sm:$0x1]
        %v2991 = vlaneseq
        %v2992 = vshrl.u32 %v2991, 7
        %v2993 = vsub.s32 0, %v2992
        %v2994 = vrot.slane %v2989, %v2993
        %2996 = vmatprep.subr.mxu0 0.0
        %2997 = vmatpush1.msra.mxu0 0.0
        %2998 = vmatprep.subr.mxu0 0.0
        %2999 = vmatpush1.msra.mxu0 0.0
        %3000 = vmatprep.subr.mxu0 0.0
        %3001 = vmatpush1.msra.mxu0 0.0
        %3002 = vmatprep.subr.mxu0 0.0
        %3003 = vmatpush1.msra.mxu0 0.0
        %3004 = vmatprep.subr.mxu0 0.0
        %3005 = vmatpush1.msra.mxu0 0.0
        %3006 = vmatprep.subr.mxu0 0.0
        %3007 = vmatpush1.msra.mxu0 0.0
        %3008 = vmatprep.subr.mxu0 0.0
        %3009 = vmatpush1.msra.mxu0 0.0
        %3010 = vmatprep.subr.mxu0 0.0
        %3011 = vmatpush1.msra.mxu0 0.0
        %3012 = vmatprep.subr.mxu0 0.0
        %3013 = vmatpush1.msra.mxu0 0.0
        %3014 = vmatprep.subr.mxu0 0.0
        %3015 = vmatpush1.msra.mxu0 0.0
        %3016 = vmatprep.subr.mxu0 0.0
        %3017 = vmatpush1.msra.mxu0 0.0
        %3018 = vmatprep.subr.mxu0 0.0
        %3019 = vmatpush1.msra.mxu0 0.0
        %3020 = vmatprep.subr.mxu0 0.0
        %3021 = vmatpush1.msra.mxu0 %v2988
        %3022 = vmatprep.subr.mxu0 0.0
        %3023 = vmatpush1.msra.mxu0 %v2987
        %3024 = vmatprep.subr.mxu0 0.0
        %3025 = vmatpush1.msra.mxu0 %v2986
        %3026 = vmatprep.subr.mxu0 0.0
        %3027 = vmatpush1.msra.mxu0 %v2985
        %3028 = vmatprep.subr.mxu0 0.0
        %3029 = vmatpush2.msra.mxu0 0.0
        %3030 = vmatprep.subr.mxu0 0.0
        %3031 = vmatpush2.msra.mxu0 0.0
        %3032 = vmatprep.subr.mxu0 0.0
        %3033 = vmatpush2.msra.mxu0 0.0
        %3034 = vmatprep.subr.mxu0 0.0
        %3035 = vmatpush2.msra.mxu0 0.0
        %3036 = vmatprep.subr.mxu0 0.0
        %3037 = vmatpush2.msra.mxu0 0.0
        %3038 = vmatprep.subr.mxu0 0.0
        %3039 = vmatpush2.msra.mxu0 0.0
        %3040 = vmatprep.subr.mxu0 0.0
        %3041 = vmatpush2.msra.mxu0 0.0
        %3042 = vmatprep.subr.mxu0 0.0
        %3043 = vmatpush2.msra.mxu0 0.0
        %3044 = vmatprep.subr.mxu0 0.0
        %3045 = vmatpush2.msra.mxu0 0.0
        %3046 = vmatprep.subr.mxu0 0.0
        %3047 = vmatpush2.msra.mxu0 0.0
        %3048 = vmatprep.subr.mxu0 0.0
        %3049 = vmatpush2.msra.mxu0 0.0
        %3050 = vmatprep.subr.mxu0 0.0
        %3051 = vmatpush2.msra.mxu0 0.0
        %3052 = vmatprep.subr.mxu0 0.0
        %3053 = vmatpush2.msra.mxu0 0.0
        %3054 = vmatprep.subr.mxu0 0.0
        %3055 = vmatpush2.msra.mxu0 0.0
        %3056 = vmatprep.subr.mxu0 0.0
        %3057 = vmatpush2.msra.mxu0 0.0
        %3058 = vmatprep.subr.mxu0 0.0
        %3059 = vmatpush2.msra.mxu0 0.0
        %3060 = vmatprep.mubr.f32.mxu0 0.0
        %3061 = vmatmul.mubr.f32.gmra.mxu0 %v2913
        %v3062 = vpop.f32.mrf.mxu0
        %v3063 = vadd.f32 %v2994, %v3062
        %v3064 = vpop.f32.mrf.mxu0
        %3065 = vdwg.mxu0
        %v3067 = vsel %vm1091, %v2898, 0
        %v3070 = vsel %vm1091, %v2982, 0
        %3072 = vmatprep.subr.mxu0 0.0
        %3073 = vmatpush1.xpose.msra.mxu0 0.0
        %3074 = vmatprep.subr.mxu0 0.0
        %3075 = vmatpush1.xpose.msra.mxu0 0.0
        %3076 = vmatprep.subr.mxu0 0.0
        %3077 = vmatpush1.xpose.msra.mxu0 0.0
        %3078 = vmatprep.subr.mxu0 0.0
        %3079 = vmatpush1.xpose.msra.mxu0 0.0
        %3080 = vmatprep.subr.mxu0 0.0
        %3081 = vmatpush1.xpose.msra.mxu0 0.0
        %3082 = vmatprep.subr.mxu0 0.0
        %3083 = vmatpush1.xpose.msra.mxu0 0.0
        %3084 = vmatprep.subr.mxu0 0.0
        %3085 = vmatpush1.xpose.msra.mxu0 0.0
        %3086 = vmatprep.subr.mxu0 0.0
        %3087 = vmatpush1.xpose.msra.mxu0 0.0
        %3088 = vmatprep.subr.mxu0 0.0
        %3089 = vmatpush1.xpose.msra.mxu0 0.0
        %3090 = vmatprep.subr.mxu0 0.0
        %3091 = vmatpush1.xpose.msra.mxu0 0.0
        %3092 = vmatprep.subr.mxu0 0.0
        %3093 = vmatpush1.xpose.msra.mxu0 0.0
        %3094 = vmatprep.subr.mxu0 0.0
        %3095 = vmatpush1.xpose.msra.mxu0 0.0
        %3096 = vmatprep.subr.mxu0 0.0
        %3097 = vmatpush1.xpose.msra.mxu0 0.0
        %3098 = vmatprep.subr.mxu0 0.0
        %3099 = vmatpush1.xpose.msra.mxu0 0.0
        %3100 = vmatprep.subr.mxu0 0.0
        %3101 = vmatpush1.xpose.msra.mxu0 0.0
        %3102 = vmatprep.subr.mxu0 0.0
        %3103 = vmatpush1.xpose.msra.mxu0 %v3070
        %3104 = vmatprep.subr.mxu0 0.0
        %3105 = vmatpush2.xpose.msra.mxu0 0.0
        %3106 = vmatprep.subr.mxu0 0.0
        %3107 = vmatpush2.xpose.msra.mxu0 0.0
        %3108 = vmatprep.subr.mxu0 0.0
        %3109 = vmatpush2.xpose.msra.mxu0 0.0
        %3110 = vmatprep.subr.mxu0 0.0
        %3111 = vmatpush2.xpose.msra.mxu0 0.0
        %3112 = vmatprep.subr.mxu0 0.0
        %3113 = vmatpush2.xpose.msra.mxu0 0.0
        %3114 = vmatprep.subr.mxu0 0.0
        %3115 = vmatpush2.xpose.msra.mxu0 0.0
        %3116 = vmatprep.subr.mxu0 0.0
        %3117 = vmatpush2.xpose.msra.mxu0 0.0
        %3118 = vmatprep.subr.mxu0 0.0
        %3119 = vmatpush2.xpose.msra.mxu0 0.0
        %3120 = vmatprep.subr.mxu0 0.0
        %3121 = vmatpush2.xpose.msra.mxu0 0.0
        %3122 = vmatprep.subr.mxu0 0.0
        %3123 = vmatpush2.xpose.msra.mxu0 0.0
        %3124 = vmatprep.subr.mxu0 0.0
        %3125 = vmatpush2.xpose.msra.mxu0 0.0
        %3126 = vmatprep.subr.mxu0 0.0
        %3127 = vmatpush2.xpose.msra.mxu0 0.0
        %3128 = vmatprep.subr.mxu0 0.0
        %3129 = vmatpush2.xpose.msra.mxu0 0.0
        %3130 = vmatprep.subr.mxu0 0.0
        %3131 = vmatpush2.xpose.msra.mxu0 0.0
        %3132 = vmatprep.subr.mxu0 0.0
        %3133 = vmatpush2.xpose.msra.mxu0 0.0
        %3134 = vmatprep.subr.mxu0 0.0
        %3135 = vmatpush2.xpose.msra.mxu0 0.0
        %3136 = vmatprep.mubr.f32.mxu0 0.0
        %3137 = vmatmul.mubr.f32.gmra.mxu0 %v3067
        %v3138 = vpop.f32.mrf.mxu0
        %v3139 = vadd.f32 %v841, %v3138
        %v3140 = vpop.f32.mrf.mxu0
        %3141 = vdwg.mxu0
        %v3142 = vsel %vm1091, %v3139, -inf
        %3143 = vmax.xlane.f32.xlu0 %v3142
        %v3144 = vpop.xlane.xlu0 %3143
        %v3145 = vsub.f32 %v3139, %v3144
        %v3146 = vmul.f32 %v3145, 1.442695
        %v3147 = vpow.pop %v3146
        %v3148 = vsel %vm1091, %v3147, 0.0
        %3149 = vadd.xlane.f32.xlu0 %v3148
        %v3150 = vpop.xlane.xlu0 %3149
        %v3151 = vrcp.pop %v3150
        %v3152 = vmul.f32 %v3147, %v3151
        %v3154 = vsel %vm1091, %v3152, 0
        %3156 = vmatprep.subr.mxu0 0.0
        %3157 = vmatpush1.msra.mxu0 0.0
        %3158 = vmatprep.subr.mxu0 0.0
        %3159 = vmatpush1.msra.mxu0 0.0
        %3160 = vmatprep.subr.mxu0 0.0
        %3161 = vmatpush1.msra.mxu0 0.0
        %3162 = vmatprep.subr.mxu0 0.0
        %3163 = vmatpush1.msra.mxu0 0.0
        %3164 = vmatprep.subr.mxu0 0.0
        %3165 = vmatpush1.msra.mxu0 0.0
        %3166 = vmatprep.subr.mxu0 0.0
        %3167 = vmatpush1.msra.mxu0 0.0
        %3168 = vmatprep.subr.mxu0 0.0
        %3169 = vmatpush1.msra.mxu0 0.0
        %3170 = vmatprep.subr.mxu0 0.0
        %3171 = vmatpush1.msra.mxu0 0.0
        %3172 = vmatprep.subr.mxu0 0.0
        %3173 = vmatpush1.msra.mxu0 0.0
        %3174 = vmatprep.subr.mxu0 0.0
        %3175 = vmatpush1.msra.mxu0 0.0
        %3176 = vmatprep.subr.mxu0 0.0
        %3177 = vmatpush1.msra.mxu0 0.0
        %3178 = vmatprep.subr.mxu0 0.0
        %3179 = vmatpush1.msra.mxu0 0.0
        %3180 = vmatprep.subr.mxu0 0.0
        %3181 = vmatpush1.msra.mxu0 0.0
        %3182 = vmatprep.subr.mxu0 0.0
        %3183 = vmatpush1.msra.mxu0 0.0
        %3184 = vmatprep.subr.mxu0 0.0
        %3185 = vmatpush1.msra.mxu0 0.0
        %3186 = vmatprep.subr.mxu0 0.0
        %3187 = vmatpush1.msra.mxu0 %v3063
        %3188 = vmatprep.subr.mxu0 0.0
        %3189 = vmatpush2.msra.mxu0 0.0
        %3190 = vmatprep.subr.mxu0 0.0
        %3191 = vmatpush2.msra.mxu0 0.0
        %3192 = vmatprep.subr.mxu0 0.0
        %3193 = vmatpush2.msra.mxu0 0.0
        %3194 = vmatprep.subr.mxu0 0.0
        %3195 = vmatpush2.msra.mxu0 0.0
        %3196 = vmatprep.subr.mxu0 0.0
        %3197 = vmatpush2.msra.mxu0 0.0
        %3198 = vmatprep.subr.mxu0 0.0
        %3199 = vmatpush2.msra.mxu0 0.0
        %3200 = vmatprep.subr.mxu0 0.0
        %3201 = vmatpush2.msra.mxu0 0.0
        %3202 = vmatprep.subr.mxu0 0.0
        %3203 = vmatpush2.msra.mxu0 0.0
        %3204 = vmatprep.subr.mxu0 0.0
        %3205 = vmatpush2.msra.mxu0 0.0
        %3206 = vmatprep.subr.mxu0 0.0
        %3207 = vmatpush2.msra.mxu0 0.0
        %3208 = vmatprep.subr.mxu0 0.0
        %3209 = vmatpush2.msra.mxu0 0.0
        %3210 = vmatprep.subr.mxu0 0.0
        %3211 = vmatpush2.msra.mxu0 0.0
        %3212 = vmatprep.subr.mxu0 0.0
        %3213 = vmatpush2.msra.mxu0 0.0
        %3214 = vmatprep.subr.mxu0 0.0
        %3215 = vmatpush2.msra.mxu0 0.0
        %3216 = vmatprep.subr.mxu0 0.0
        %3217 = vmatpush2.msra.mxu0 0.0
        %3218 = vmatprep.subr.mxu0 0.0
        %3219 = vmatpush2.msra.mxu0 0.0
        %3220 = vmatprep.mubr.f32.mxu0 0.0
        %3221 = vmatmul.mubr.f32.gmra.mxu0 %v3154
        %v3222 = vpop.f32.mrf.mxu0
        %v3223 = vadd.f32 0.0, %v3222
        %v3224 = vpop.f32.mrf.mxu0
        %3225 = vdwg.mxu0
        %v3226 = vld [vmem:[%s18] sm:$0xff]
        %s3227 = scalar_lea.vmem %s12, 32
        %v3228 = vld [vmem:[%s3227] sm:$0xff]
        %v3229 = vld [vmem:[%s3227 + $0x8] sm:$0xff]
        %v3230 = vld [vmem:[%s3227 + $0x10] sm:$0xff]
        %v3231 = vld [vmem:[%s3227 + $0x18] sm:$0xff]
        %s3232 = scalar_lea.vmem %s13, 1
        %v3233 = vld [vmem:[%s3232] sm:$0x1]
        %v3235 = vlaneseq
        %v3236 = vshrl.u32 %v3235, 7
        %v3237 = vsub.s32 0, %v3236
        %v3238 = vrot.slane %v3233, %v3237
        %3240 = vmatprep.subr.mxu0 0.0
        %3241 = vmatpush1.msra.mxu0 0.0
        %3242 = vmatprep.subr.mxu0 0.0
        %3243 = vmatpush1.msra.mxu0 0.0
        %3244 = vmatprep.subr.mxu0 0.0
        %3245 = vmatpush1.msra.mxu0 0.0
        %3246 = vmatprep.subr.mxu0 0.0
        %3247 = vmatpush1.msra.mxu0 0.0
        %3248 = vmatprep.subr.mxu0 0.0
        %3249 = vmatpush1.msra.mxu0 0.0
        %3250 = vmatprep.subr.mxu0 0.0
        %3251 = vmatpush1.msra.mxu0 0.0
        %3252 = vmatprep.subr.mxu0 0.0
        %3253 = vmatpush1.msra.mxu0 0.0
        %3254 = vmatprep.subr.mxu0 0.0
        %3255 = vmatpush1.msra.mxu0 0.0
        %3256 = vmatprep.subr.mxu0 0.0
        %3257 = vmatpush1.msra.mxu0 0.0
        %3258 = vmatprep.subr.mxu0 0.0
        %3259 = vmatpush1.msra.mxu0 0.0
        %3260 = vmatprep.subr.mxu0 0.0
        %3261 = vmatpush1.msra.mxu0 0.0
        %3262 = vmatprep.subr.mxu0 0.0
        %3263 = vmatpush1.msra.mxu0 0.0
        %3264 = vmatprep.subr.mxu0 0.0
        %3265 = vmatpush1.msra.mxu0 %v3231
        %3266 = vmatprep.subr.mxu0 0.0
        %3267 = vmatpush1.msra.mxu0 %v3230
        %3268 = vmatprep.subr.mxu0 0.0
        %3269 = vmatpush1.msra.mxu0 %v3229
        %3270 = vmatprep.subr.mxu0 0.0
        %3271 = vmatpush1.msra.mxu0 %v3228
        %3272 = vmatprep.subr.mxu0 0.0
        %3273 = vmatpush2.msra.mxu0 0.0
        %3274 = vmatprep.subr.mxu0 0.0
        %3275 = vmatpush2.msra.mxu0 0.0
        %3276 = vmatprep.subr.mxu0 0.0
        %3277 = vmatpush2.msra.mxu0 0.0
        %3278 = vmatprep.subr.mxu0 0.0
        %3279 = vmatpush2.msra.mxu0 0.0
        %3280 = vmatprep.subr.mxu0 0.0
        %3281 = vmatpush2.msra.mxu0 0.0
        %3282 = vmatprep.subr.mxu0 0.0
        %3283 = vmatpush2.msra.mxu0 0.0
        %3284 = vmatprep.subr.mxu0 0.0
        %3285 = vmatpush2.msra.mxu0 0.0
        %3286 = vmatprep.subr.mxu0 0.0
        %3287 = vmatpush2.msra.mxu0 0.0
        %3288 = vmatprep.subr.mxu0 0.0
        %3289 = vmatpush2.msra.mxu0 0.0
        %3290 = vmatprep.subr.mxu0 0.0
        %3291 = vmatpush2.msra.mxu0 0.0
        %3292 = vmatprep.subr.mxu0 0.0
        %3293 = vmatpush2.msra.mxu0 0.0
        %3294 = vmatprep.subr.mxu0 0.0
        %3295 = vmatpush2.msra.mxu0 0.0
        %3296 = vmatprep.subr.mxu0 0.0
        %3297 = vmatpush2.msra.mxu0 0.0
        %3298 = vmatprep.subr.mxu0 0.0
        %3299 = vmatpush2.msra.mxu0 0.0
        %3300 = vmatprep.subr.mxu0 0.0
        %3301 = vmatpush2.msra.mxu0 0.0
        %3302 = vmatprep.subr.mxu0 0.0
        %3303 = vmatpush2.msra.mxu0 0.0
        %3304 = vmatprep.mubr.f32.mxu0 0.0
        %3305 = vmatmul.mubr.f32.gmra.mxu0 %v2829
        %v3306 = vpop.f32.mrf.mxu0
        %v3307 = vadd.f32 %v3238, %v3306
        %v3308 = vpop.f32.mrf.mxu0
        %3309 = vdwg.mxu0
        %s3310 = scalar_lea.vmem %s14, 32
        %v3311 = vld [vmem:[%s3310] sm:$0xff]
        %v3312 = vld [vmem:[%s3310 + $0x8] sm:$0xff]
        %v3313 = vld [vmem:[%s3310 + $0x10] sm:$0xff]
        %v3314 = vld [vmem:[%s3310 + $0x18] sm:$0xff]
        %s3315 = scalar_lea.vmem %s15, 1
        %v3316 = vld [vmem:[%s3315] sm:$0x1]
        %v3318 = vlaneseq
        %v3319 = vshrl.u32 %v3318, 7
        %v3320 = vsub.s32 0, %v3319
        %v3321 = vrot.slane %v3316, %v3320
        %3323 = vmatprep.subr.mxu0 0.0
        %3324 = vmatpush1.msra.mxu0 0.0
        %3325 = vmatprep.subr.mxu0 0.0
        %3326 = vmatpush1.msra.mxu0 0.0
        %3327 = vmatprep.subr.mxu0 0.0
        %3328 = vmatpush1.msra.mxu0 0.0
        %3329 = vmatprep.subr.mxu0 0.0
        %3330 = vmatpush1.msra.mxu0 0.0
        %3331 = vmatprep.subr.mxu0 0.0
        %3332 = vmatpush1.msra.mxu0 0.0
        %3333 = vmatprep.subr.mxu0 0.0
        %3334 = vmatpush1.msra.mxu0 0.0
        %3335 = vmatprep.subr.mxu0 0.0
        %3336 = vmatpush1.msra.mxu0 0.0
        %3337 = vmatprep.subr.mxu0 0.0
        %3338 = vmatpush1.msra.mxu0 0.0
        %3339 = vmatprep.subr.mxu0 0.0
        %3340 = vmatpush1.msra.mxu0 0.0
        %3341 = vmatprep.subr.mxu0 0.0
        %3342 = vmatpush1.msra.mxu0 0.0
        %3343 = vmatprep.subr.mxu0 0.0
        %3344 = vmatpush1.msra.mxu0 0.0
        %3345 = vmatprep.subr.mxu0 0.0
        %3346 = vmatpush1.msra.mxu0 0.0
        %3347 = vmatprep.subr.mxu0 0.0
        %3348 = vmatpush1.msra.mxu0 %v3314
        %3349 = vmatprep.subr.mxu0 0.0
        %3350 = vmatpush1.msra.mxu0 %v3313
        %3351 = vmatprep.subr.mxu0 0.0
        %3352 = vmatpush1.msra.mxu0 %v3312
        %3353 = vmatprep.subr.mxu0 0.0
        %3354 = vmatpush1.msra.mxu0 %v3311
        %3355 = vmatprep.subr.mxu0 0.0
        %3356 = vmatpush2.msra.mxu0 0.0
        %3357 = vmatprep.subr.mxu0 0.0
        %3358 = vmatpush2.msra.mxu0 0.0
        %3359 = vmatprep.subr.mxu0 0.0
        %3360 = vmatpush2.msra.mxu0 0.0
        %3361 = vmatprep.subr.mxu0 0.0
        %3362 = vmatpush2.msra.mxu0 0.0
        %3363 = vmatprep.subr.mxu0 0.0
        %3364 = vmatpush2.msra.mxu0 0.0
        %3365 = vmatprep.subr.mxu0 0.0
        %3366 = vmatpush2.msra.mxu0 0.0
        %3367 = vmatprep.subr.mxu0 0.0
        %3368 = vmatpush2.msra.mxu0 0.0
        %3369 = vmatprep.subr.mxu0 0.0
        %3370 = vmatpush2.msra.mxu0 0.0
        %3371 = vmatprep.subr.mxu0 0.0
        %3372 = vmatpush2.msra.mxu0 0.0
        %3373 = vmatprep.subr.mxu0 0.0
        %3374 = vmatpush2.msra.mxu0 0.0
        %3375 = vmatprep.subr.mxu0 0.0
        %3376 = vmatpush2.msra.mxu0 0.0
        %3377 = vmatprep.subr.mxu0 0.0
        %3378 = vmatpush2.msra.mxu0 0.0
        %3379 = vmatprep.subr.mxu0 0.0
        %3380 = vmatpush2.msra.mxu0 0.0
        %3381 = vmatprep.subr.mxu0 0.0
        %3382 = vmatpush2.msra.mxu0 0.0
        %3383 = vmatprep.subr.mxu0 0.0
        %3384 = vmatpush2.msra.mxu0 0.0
        %3385 = vmatprep.subr.mxu0 0.0
        %3386 = vmatpush2.msra.mxu0 0.0
        %3387 = vmatprep.mubr.f32.mxu0 0.0
        %3388 = vmatmul.mubr.f32.gmra.mxu0 %v2913
        %v3389 = vpop.f32.mrf.mxu0
        %v3390 = vadd.f32 %v3321, %v3389
        %v3391 = vpop.f32.mrf.mxu0
        %3392 = vdwg.mxu0
        %s3393 = scalar_lea.vmem %s16, 32
        %v3394 = vld [vmem:[%s3393] sm:$0xff]
        %v3395 = vld [vmem:[%s3393 + $0x8] sm:$0xff]
        %v3396 = vld [vmem:[%s3393 + $0x10] sm:$0xff]
        %v3397 = vld [vmem:[%s3393 + $0x18] sm:$0xff]
        %s3398 = scalar_lea.vmem %s17, 1
        %v3399 = vld [vmem:[%s3398] sm:$0x1]
        %v3401 = vlaneseq
        %v3402 = vshrl.u32 %v3401, 7
        %v3403 = vsub.s32 0, %v3402
        %v3404 = vrot.slane %v3399, %v3403
        %3406 = vmatprep.subr.mxu0 0.0
        %3407 = vmatpush1.msra.mxu0 0.0
        %3408 = vmatprep.subr.mxu0 0.0
        %3409 = vmatpush1.msra.mxu0 0.0
        %3410 = vmatprep.subr.mxu0 0.0
        %3411 = vmatpush1.msra.mxu0 0.0
        %3412 = vmatprep.subr.mxu0 0.0
        %3413 = vmatpush1.msra.mxu0 0.0
        %3414 = vmatprep.subr.mxu0 0.0
        %3415 = vmatpush1.msra.mxu0 0.0
        %3416 = vmatprep.subr.mxu0 0.0
        %3417 = vmatpush1.msra.mxu0 0.0
        %3418 = vmatprep.subr.mxu0 0.0
        %3419 = vmatpush1.msra.mxu0 0.0
        %3420 = vmatprep.subr.mxu0 0.0
        %3421 = vmatpush1.msra.mxu0 0.0
        %3422 = vmatprep.subr.mxu0 0.0
        %3423 = vmatpush1.msra.mxu0 0.0
        %3424 = vmatprep.subr.mxu0 0.0
        %3425 = vmatpush1.msra.mxu0 0.0
        %3426 = vmatprep.subr.mxu0 0.0
        %3427 = vmatpush1.msra.mxu0 0.0
        %3428 = vmatprep.subr.mxu0 0.0
        %3429 = vmatpush1.msra.mxu0 0.0
        %3430 = vmatprep.subr.mxu0 0.0
        %3431 = vmatpush1.msra.mxu0 %v3397
        %3432 = vmatprep.subr.mxu0 0.0
        %3433 = vmatpush1.msra.mxu0 %v3396
        %3434 = vmatprep.subr.mxu0 0.0
        %3435 = vmatpush1.msra.mxu0 %v3395
        %3436 = vmatprep.subr.mxu0 0.0
        %3437 = vmatpush1.msra.mxu0 %v3394
        %3438 = vmatprep.subr.mxu0 0.0
        %3439 = vmatpush2.msra.mxu0 0.0
        %3440 = vmatprep.subr.mxu0 0.0
        %3441 = vmatpush2.msra.mxu0 0.0
        %3442 = vmatprep.subr.mxu0 0.0
        %3443 = vmatpush2.msra.mxu0 0.0
        %3444 = vmatprep.subr.mxu0 0.0
        %3445 = vmatpush2.msra.mxu0 0.0
        %3446 = vmatprep.subr.mxu0 0.0
        %3447 = vmatpush2.msra.mxu0 0.0
        %3448 = vmatprep.subr.mxu0 0.0
        %3449 = vmatpush2.msra.mxu0 0.0
        %3450 = vmatprep.subr.mxu0 0.0
        %3451 = vmatpush2.msra.mxu0 0.0
        %3452 = vmatprep.subr.mxu0 0.0
        %3453 = vmatpush2.msra.mxu0 0.0
        %3454 = vmatprep.subr.mxu0 0.0
        %3455 = vmatpush2.msra.mxu0 0.0
        %3456 = vmatprep.subr.mxu0 0.0
        %3457 = vmatpush2.msra.mxu0 0.0
        %3458 = vmatprep.subr.mxu0 0.0
        %3459 = vmatpush2.msra.mxu0 0.0
        %3460 = vmatprep.subr.mxu0 0.0
        %3461 = vmatpush2.msra.mxu0 0.0
        %3462 = vmatprep.subr.mxu0 0.0
        %3463 = vmatpush2.msra.mxu0 0.0
        %3464 = vmatprep.subr.mxu0 0.0
        %3465 = vmatpush2.msra.mxu0 0.0
        %3466 = vmatprep.subr.mxu0 0.0
        %3467 = vmatpush2.msra.mxu0 0.0
        %3468 = vmatprep.subr.mxu0 0.0
        %3469 = vmatpush2.msra.mxu0 0.0
        %3470 = vmatprep.mubr.f32.mxu0 0.0
        %3471 = vmatmul.mubr.f32.gmra.mxu0 %v2913
        %v3472 = vpop.f32.mrf.mxu0
        %v3473 = vadd.f32 %v3404, %v3472
        %v3474 = vpop.f32.mrf.mxu0
        %3475 = vdwg.mxu0
        %v3477 = vsel %vm1091, %v3307, 0
        %v3480 = vsel %vm1091, %v3390, 0
        %3482 = vmatprep.subr.mxu0 0.0
        %3483 = vmatpush1.xpose.msra.mxu0 0.0
        %3484 = vmatprep.subr.mxu0 0.0
        %3485 = vmatpush1.xpose.msra.mxu0 0.0
        %3486 = vmatprep.subr.mxu0 0.0
        %3487 = vmatpush1.xpose.msra.mxu0 0.0
        %3488 = vmatprep.subr.mxu0 0.0
        %3489 = vmatpush1.xpose.msra.mxu0 0.0
        %3490 = vmatprep.subr.mxu0 0.0
        %3491 = vmatpush1.xpose.msra.mxu0 0.0
        %3492 = vmatprep.subr.mxu0 0.0
        %3493 = vmatpush1.xpose.msra.mxu0 0.0
        %3494 = vmatprep.subr.mxu0 0.0
        %3495 = vmatpush1.xpose.msra.mxu0 0.0
        %3496 = vmatprep.subr.mxu0 0.0
        %3497 = vmatpush1.xpose.msra.mxu0 0.0
        %3498 = vmatprep.subr.mxu0 0.0
        %3499 = vmatpush1.xpose.msra.mxu0 0.0
        %3500 = vmatprep.subr.mxu0 0.0
        %3501 = vmatpush1.xpose.msra.mxu0 0.0
        %3502 = vmatprep.subr.mxu0 0.0
        %3503 = vmatpush1.xpose.msra.mxu0 0.0
        %3504 = vmatprep.subr.mxu0 0.0
        %3505 = vmatpush1.xpose.msra.mxu0 0.0
        %3506 = vmatprep.subr.mxu0 0.0
        %3507 = vmatpush1.xpose.msra.mxu0 0.0
        %3508 = vmatprep.subr.mxu0 0.0
        %3509 = vmatpush1.xpose.msra.mxu0 0.0
        %3510 = vmatprep.subr.mxu0 0.0
        %3511 = vmatpush1.xpose.msra.mxu0 0.0
        %3512 = vmatprep.subr.mxu0 0.0
        %3513 = vmatpush1.xpose.msra.mxu0 %v3480
        %3514 = vmatprep.subr.mxu0 0.0
        %3515 = vmatpush2.xpose.msra.mxu0 0.0
        %3516 = vmatprep.subr.mxu0 0.0
        %3517 = vmatpush2.xpose.msra.mxu0 0.0
        %3518 = vmatprep.subr.mxu0 0.0
        %3519 = vmatpush2.xpose.msra.mxu0 0.0
        %3520 = vmatprep.subr.mxu0 0.0
        %3521 = vmatpush2.xpose.msra.mxu0 0.0
        %3522 = vmatprep.subr.mxu0 0.0
        %3523 = vmatpush2.xpose.msra.mxu0 0.0
        %3524 = vmatprep.subr.mxu0 0.0
        %3525 = vmatpush2.xpose.msra.mxu0 0.0
        %3526 = vmatprep.subr.mxu0 0.0
        %3527 = vmatpush2.xpose.msra.mxu0 0.0
        %3528 = vmatprep.subr.mxu0 0.0
        %3529 = vmatpush2.xpose.msra.mxu0 0.0
        %3530 = vmatprep.subr.mxu0 0.0
        %3531 = vmatpush2.xpose.msra.mxu0 0.0
        %3532 = vmatprep.subr.mxu0 0.0
        %3533 = vmatpush2.xpose.msra.mxu0 0.0
        %3534 = vmatprep.subr.mxu0 0.0
        %3535 = vmatpush2.xpose.msra.mxu0 0.0
        %3536 = vmatprep.subr.mxu0 0.0
        %3537 = vmatpush2.xpose.msra.mxu0 0.0
        %3538 = vmatprep.subr.mxu0 0.0
        %3539 = vmatpush2.xpose.msra.mxu0 0.0
        %3540 = vmatprep.subr.mxu0 0.0
        %3541 = vmatpush2.xpose.msra.mxu0 0.0
        %3542 = vmatprep.subr.mxu0 0.0
        %3543 = vmatpush2.xpose.msra.mxu0 0.0
        %3544 = vmatprep.subr.mxu0 0.0
        %3545 = vmatpush2.xpose.msra.mxu0 0.0
        %3546 = vmatprep.mubr.f32.mxu0 0.0
        %3547 = vmatmul.mubr.f32.gmra.mxu0 %v3477
        %v3548 = vpop.f32.mrf.mxu0
        %v3549 = vadd.f32 %v841, %v3548
        %v3550 = vpop.f32.mrf.mxu0
        %3551 = vdwg.mxu0
        %v3552 = vsel %vm1091, %v3549, -inf
        %3553 = vmax.xlane.f32.xlu0 %v3552
        %v3554 = vpop.xlane.xlu0 %3553
        %v3555 = vsub.f32 %v3549, %v3554
        %v3556 = vmul.f32 %v3555, 1.442695
        %v3557 = vpow.pop %v3556
        %v3558 = vsel %vm1091, %v3557, 0.0
        %3559 = vadd.xlane.f32.xlu0 %v3558
        %v3560 = vpop.xlane.xlu0 %3559
        %v3561 = vrcp.pop %v3560
        %v3562 = vmul.f32 %v3557, %v3561
        %v3564 = vsel %vm1091, %v3562, 0
        %3566 = vmatprep.subr.mxu0 0.0
        %3567 = vmatpush1.msra.mxu0 0.0
        %3568 = vmatprep.subr.mxu0 0.0
        %3569 = vmatpush1.msra.mxu0 0.0
        %3570 = vmatprep.subr.mxu0 0.0
        %3571 = vmatpush1.msra.mxu0 0.0
        %3572 = vmatprep.subr.mxu0 0.0
        %3573 = vmatpush1.msra.mxu0 0.0
        %3574 = vmatprep.subr.mxu0 0.0
        %3575 = vmatpush1.msra.mxu0 0.0
        %3576 = vmatprep.subr.mxu0 0.0
        %3577 = vmatpush1.msra.mxu0 0.0
        %3578 = vmatprep.subr.mxu0 0.0
        %3579 = vmatpush1.msra.mxu0 0.0
        %3580 = vmatprep.subr.mxu0 0.0
        %3581 = vmatpush1.msra.mxu0 0.0
        %3582 = vmatprep.subr.mxu0 0.0
        %3583 = vmatpush1.msra.mxu0 0.0
        %3584 = vmatprep.subr.mxu0 0.0
        %3585 = vmatpush1.msra.mxu0 0.0
        %3586 = vmatprep.subr.mxu0 0.0
        %3587 = vmatpush1.msra.mxu0 0.0
        %3588 = vmatprep.subr.mxu0 0.0
        %3589 = vmatpush1.msra.mxu0 0.0
        %3590 = vmatprep.subr.mxu0 0.0
        %3591 = vmatpush1.msra.mxu0 0.0
        %3592 = vmatprep.subr.mxu0 0.0
        %3593 = vmatpush1.msra.mxu0 0.0
        %3594 = vmatprep.subr.mxu0 0.0
        %3595 = vmatpush1.msra.mxu0 0.0
        %3596 = vmatprep.subr.mxu0 0.0
        %3597 = vmatpush1.msra.mxu0 %v3473
        %3598 = vmatprep.subr.mxu0 0.0
        %3599 = vmatpush2.msra.mxu0 0.0
        %3600 = vmatprep.subr.mxu0 0.0
        %3601 = vmatpush2.msra.mxu0 0.0
        %3602 = vmatprep.subr.mxu0 0.0
        %3603 = vmatpush2.msra.mxu0 0.0
        %3604 = vmatprep.subr.mxu0 0.0
        %3605 = vmatpush2.msra.mxu0 0.0
        %3606 = vmatprep.subr.mxu0 0.0
        %3607 = vmatpush2.msra.mxu0 0.0
        %3608 = vmatprep.subr.mxu0 0.0
        %3609 = vmatpush2.msra.mxu0 0.0
        %3610 = vmatprep.subr.mxu0 0.0
        %3611 = vmatpush2.msra.mxu0 0.0
        %3612 = vmatprep.subr.mxu0 0.0
        %3613 = vmatpush2.msra.mxu0 0.0
        %3614 = vmatprep.subr.mxu0 0.0
        %3615 = vmatpush2.msra.mxu0 0.0
        %3616 = vmatprep.subr.mxu0 0.0
        %3617 = vmatpush2.msra.mxu0 0.0
        %3618 = vmatprep.subr.mxu0 0.0
        %3619 = vmatpush2.msra.mxu0 0.0
        %3620 = vmatprep.subr.mxu0 0.0
        %3621 = vmatpush2.msra.mxu0 0.0
        %3622 = vmatprep.subr.mxu0 0.0
        %3623 = vmatpush2.msra.mxu0 0.0
        %3624 = vmatprep.subr.mxu0 0.0
        %3625 = vmatpush2.msra.mxu0 0.0
        %3626 = vmatprep.subr.mxu0 0.0
        %3627 = vmatpush2.msra.mxu0 0.0
        %3628 = vmatprep.subr.mxu0 0.0
        %3629 = vmatpush2.msra.mxu0 0.0
        %3630 = vmatprep.mubr.f32.mxu0 0.0
        %3631 = vmatmul.mubr.f32.gmra.mxu0 %v3564
        %v3632 = vpop.f32.mrf.mxu0
        %v3633 = vadd.f32 0.0, %v3632
        %v3634 = vpop.f32.mrf.mxu0
        %3635 = vdwg.mxu0
        %s3636 = scalar_lea.vmem %s18, 8
        %v3637 = vld [vmem:[%s3636] sm:$0xff]
        %v3639 = vsel %vm1091, %v3633, 0
        %3641 = vmatprep.subr.mxu0 0.0
        %3642 = vmatpush1.msra.mxu0 0.0
        %3643 = vmatprep.subr.mxu0 0.0
        %3644 = vmatpush1.msra.mxu0 0.0
        %3645 = vmatprep.subr.mxu0 0.0
        %3646 = vmatpush1.msra.mxu0 0.0
        %3647 = vmatprep.subr.mxu0 0.0
        %3648 = vmatpush1.msra.mxu0 0.0
        %3649 = vmatprep.subr.mxu0 0.0
        %3650 = vmatpush1.msra.mxu0 0.0
        %3651 = vmatprep.subr.mxu0 0.0
        %3652 = vmatpush1.msra.mxu0 0.0
        %3653 = vmatprep.subr.mxu0 0.0
        %3654 = vmatpush1.msra.mxu0 0.0
        %3655 = vmatprep.subr.mxu0 0.0
        %3656 = vmatpush1.msra.mxu0 0.0
        %3657 = vmatprep.subr.mxu0 0.0
        %3658 = vmatpush1.msra.mxu0 0.0
        %3659 = vmatprep.subr.mxu0 0.0
        %3660 = vmatpush1.msra.mxu0 0.0
        %3661 = vmatprep.subr.mxu0 0.0
        %3662 = vmatpush1.msra.mxu0 0.0
        %3663 = vmatprep.subr.mxu0 0.0
        %3664 = vmatpush1.msra.mxu0 0.0
        %3665 = vmatprep.subr.mxu0 0.0
        %3666 = vmatpush1.msra.mxu0 0.0
        %3667 = vmatprep.subr.mxu0 0.0
        %3668 = vmatpush1.msra.mxu0 0.0
        %3669 = vmatprep.subr.mxu0 0.0
        %3670 = vmatpush1.msra.mxu0 0.0
        %3671 = vmatprep.subr.mxu0 0.0
        %3672 = vmatpush1.msra.mxu0 %v3637
        %3673 = vmatprep.subr.mxu0 0.0
        %3674 = vmatpush2.msra.mxu0 0.0
        %3675 = vmatprep.subr.mxu0 0.0
        %3676 = vmatpush2.msra.mxu0 0.0
        %3677 = vmatprep.subr.mxu0 0.0
        %3678 = vmatpush2.msra.mxu0 0.0
        %3679 = vmatprep.subr.mxu0 0.0
        %3680 = vmatpush2.msra.mxu0 0.0
        %3681 = vmatprep.subr.mxu0 0.0
        %3682 = vmatpush2.msra.mxu0 0.0
        %3683 = vmatprep.subr.mxu0 0.0
        %3684 = vmatpush2.msra.mxu0 0.0
        %3685 = vmatprep.subr.mxu0 0.0
        %3686 = vmatpush2.msra.mxu0 0.0
        %3687 = vmatprep.subr.mxu0 0.0
        %3688 = vmatpush2.msra.mxu0 0.0
        %3689 = vmatprep.subr.mxu0 0.0
        %3690 = vmatpush2.msra.mxu0 0.0
        %3691 = vmatprep.subr.mxu0 0.0
        %3692 = vmatpush2.msra.mxu0 0.0
        %3693 = vmatprep.subr.mxu0 0.0
        %3694 = vmatpush2.msra.mxu0 0.0
        %3695 = vmatprep.subr.mxu0 0.0
        %3696 = vmatpush2.msra.mxu0 0.0
        %3697 = vmatprep.subr.mxu0 0.0
        %3698 = vmatpush2.msra.mxu0 0.0
        %3699 = vmatprep.subr.mxu0 0.0
        %3700 = vmatpush2.msra.mxu0 0.0
        %3701 = vmatprep.subr.mxu0 0.0
        %3702 = vmatpush2.msra.mxu0 0.0
        %3703 = vmatprep.subr.mxu0 0.0
        %3704 = vmatpush2.msra.mxu0 0.0
        %3705 = vmatprep.mubr.f32.mxu0 0.0
        %3706 = vmatmul.mubr.f32.gmra.mxu0 %v3639
        %v3707 = vpop.f32.mrf.mxu0
        %v3708 = vadd.f32 0.0, %v3707
        %v3709 = vpop.f32.mrf.mxu0
        %3710 = vdwg.mxu0
        %v3712 = vsel %vm1091, %v3223, 0
        %3714 = vmatprep.subr.mxu0 0.0
        %3715 = vmatpush1.msra.mxu0 0.0
        %3716 = vmatprep.subr.mxu0 0.0
        %3717 = vmatpush1.msra.mxu0 0.0
        %3718 = vmatprep.subr.mxu0 0.0
        %3719 = vmatpush1.msra.mxu0 0.0
        %3720 = vmatprep.subr.mxu0 0.0
        %3721 = vmatpush1.msra.mxu0 0.0
        %3722 = vmatprep.subr.mxu0 0.0
        %3723 = vmatpush1.msra.mxu0 0.0
        %3724 = vmatprep.subr.mxu0 0.0
        %3725 = vmatpush1.msra.mxu0 0.0
        %3726 = vmatprep.subr.mxu0 0.0
        %3727 = vmatpush1.msra.mxu0 0.0
        %3728 = vmatprep.subr.mxu0 0.0
        %3729 = vmatpush1.msra.mxu0 0.0
        %3730 = vmatprep.subr.mxu0 0.0
        %3731 = vmatpush1.msra.mxu0 0.0
        %3732 = vmatprep.subr.mxu0 0.0
        %3733 = vmatpush1.msra.mxu0 0.0
        %3734 = vmatprep.subr.mxu0 0.0
        %3735 = vmatpush1.msra.mxu0 0.0
        %3736 = vmatprep.subr.mxu0 0.0
        %3737 = vmatpush1.msra.mxu0 0.0
        %3738 = vmatprep.subr.mxu0 0.0
        %3739 = vmatpush1.msra.mxu0 0.0
        %3740 = vmatprep.subr.mxu0 0.0
        %3741 = vmatpush1.msra.mxu0 0.0
        %3742 = vmatprep.subr.mxu0 0.0
        %3743 = vmatpush1.msra.mxu0 0.0
        %3744 = vmatprep.subr.mxu0 0.0
        %3745 = vmatpush1.msra.mxu0 %v3226
        %3746 = vmatprep.subr.mxu0 0.0
        %3747 = vmatpush2.msra.mxu0 0.0
        %3748 = vmatprep.subr.mxu0 0.0
        %3749 = vmatpush2.msra.mxu0 0.0
        %3750 = vmatprep.subr.mxu0 0.0
        %3751 = vmatpush2.msra.mxu0 0.0
        %3752 = vmatprep.subr.mxu0 0.0
        %3753 = vmatpush2.msra.mxu0 0.0
        %3754 = vmatprep.subr.mxu0 0.0
        %3755 = vmatpush2.msra.mxu0 0.0
        %3756 = vmatprep.subr.mxu0 0.0
        %3757 = vmatpush2.msra.mxu0 0.0
        %3758 = vmatprep.subr.mxu0 0.0
        %3759 = vmatpush2.msra.mxu0 0.0
        %3760 = vmatprep.subr.mxu0 0.0
        %3761 = vmatpush2.msra.mxu0 0.0
        %3762 = vmatprep.subr.mxu0 0.0
        %3763 = vmatpush2.msra.mxu0 0.0
        %3764 = vmatprep.subr.mxu0 0.0
        %3765 = vmatpush2.msra.mxu0 0.0
        %3766 = vmatprep.subr.mxu0 0.0
        %3767 = vmatpush2.msra.mxu0 0.0
        %3768 = vmatprep.subr.mxu0 0.0
        %3769 = vmatpush2.msra.mxu0 0.0
        %3770 = vmatprep.subr.mxu0 0.0
        %3771 = vmatpush2.msra.mxu0 0.0
        %3772 = vmatprep.subr.mxu0 0.0
        %3773 = vmatpush2.msra.mxu0 0.0
        %3774 = vmatprep.subr.mxu0 0.0
        %3775 = vmatpush2.msra.mxu0 0.0
        %3776 = vmatprep.subr.mxu0 0.0
        %3777 = vmatpush2.msra.mxu0 0.0
        %3778 = vmatprep.mubr.f32.mxu0 0.0
        %3779 = vmatmul.mubr.f32.gmra.mxu0 %v3712
        %v3780 = vpop.f32.mrf.mxu0
        %v3781 = vadd.f32 %v3708, %v3780
        %v3782 = vpop.f32.mrf.mxu0
        %3783 = vdwg.mxu0
        %s3784 = scalar_lea.vmem %s12, 64
        %v3785 = vld [vmem:[%s3784] sm:$0xff]
        %v3786 = vld [vmem:[%s3784 + $0x8] sm:$0xff]
        %v3787 = vld [vmem:[%s3784 + $0x10] sm:$0xff]
        %v3788 = vld [vmem:[%s3784 + $0x18] sm:$0xff]
        %s3789 = scalar_lea.vmem %s13, 2
        %v3790 = vld [vmem:[%s3789] sm:$0x1]
        %v3792 = vlaneseq
        %v3793 = vshrl.u32 %v3792, 7
        %v3794 = vsub.s32 0, %v3793
        %v3795 = vrot.slane %v3790, %v3794
        %3797 = vmatprep.subr.mxu0 0.0
        %3798 = vmatpush1.msra.mxu0 0.0
        %3799 = vmatprep.subr.mxu0 0.0
        %3800 = vmatpush1.msra.mxu0 0.0
        %3801 = vmatprep.subr.mxu0 0.0
        %3802 = vmatpush1.msra.mxu0 0.0
        %3803 = vmatprep.subr.mxu0 0.0
        %3804 = vmatpush1.msra.mxu0 0.0
        %3805 = vmatprep.subr.mxu0 0.0
        %3806 = vmatpush1.msra.mxu0 0.0
        %3807 = vmatprep.subr.mxu0 0.0
        %3808 = vmatpush1.msra.mxu0 0.0
        %3809 = vmatprep.subr.mxu0 0.0
        %3810 = vmatpush1.msra.mxu0 0.0
        %3811 = vmatprep.subr.mxu0 0.0
        %3812 = vmatpush1.msra.mxu0 0.0
        %3813 = vmatprep.subr.mxu0 0.0
        %3814 = vmatpush1.msra.mxu0 0.0
        %3815 = vmatprep.subr.mxu0 0.0
        %3816 = vmatpush1.msra.mxu0 0.0
        %3817 = vmatprep.subr.mxu0 0.0
        %3818 = vmatpush1.msra.mxu0 0.0
        %3819 = vmatprep.subr.mxu0 0.0
        %3820 = vmatpush1.msra.mxu0 0.0
        %3821 = vmatprep.subr.mxu0 0.0
        %3822 = vmatpush1.msra.mxu0 %v3788
        %3823 = vmatprep.subr.mxu0 0.0
        %3824 = vmatpush1.msra.mxu0 %v3787
        %3825 = vmatprep.subr.mxu0 0.0
        %3826 = vmatpush1.msra.mxu0 %v3786
        %3827 = vmatprep.subr.mxu0 0.0
        %3828 = vmatpush1.msra.mxu0 %v3785
        %3829 = vmatprep.subr.mxu0 0.0
        %3830 = vmatpush2.msra.mxu0 0.0
        %3831 = vmatprep.subr.mxu0 0.0
        %3832 = vmatpush2.msra.mxu0 0.0
        %3833 = vmatprep.subr.mxu0 0.0
        %3834 = vmatpush2.msra.mxu0 0.0
        %3835 = vmatprep.subr.mxu0 0.0
        %3836 = vmatpush2.msra.mxu0 0.0
        %3837 = vmatprep.subr.mxu0 0.0
        %3838 = vmatpush2.msra.mxu0 0.0
        %3839 = vmatprep.subr.mxu0 0.0
        %3840 = vmatpush2.msra.mxu0 0.0
        %3841 = vmatprep.subr.mxu0 0.0
        %3842 = vmatpush2.msra.mxu0 0.0
        %3843 = vmatprep.subr.mxu0 0.0
        %3844 = vmatpush2.msra.mxu0 0.0
        %3845 = vmatprep.subr.mxu0 0.0
        %3846 = vmatpush2.msra.mxu0 0.0
        %3847 = vmatprep.subr.mxu0 0.0
        %3848 = vmatpush2.msra.mxu0 0.0
        %3849 = vmatprep.subr.mxu0 0.0
        %3850 = vmatpush2.msra.mxu0 0.0
        %3851 = vmatprep.subr.mxu0 0.0
        %3852 = vmatpush2.msra.mxu0 0.0
        %3853 = vmatprep.subr.mxu0 0.0
        %3854 = vmatpush2.msra.mxu0 0.0
        %3855 = vmatprep.subr.mxu0 0.0
        %3856 = vmatpush2.msra.mxu0 0.0
        %3857 = vmatprep.subr.mxu0 0.0
        %3858 = vmatpush2.msra.mxu0 0.0
        %3859 = vmatprep.subr.mxu0 0.0
        %3860 = vmatpush2.msra.mxu0 0.0
        %3861 = vmatprep.mubr.f32.mxu0 0.0
        %3862 = vmatmul.mubr.f32.gmra.mxu0 %v2829
        %v3863 = vpop.f32.mrf.mxu0
        %v3864 = vadd.f32 %v3795, %v3863
        %v3865 = vpop.f32.mrf.mxu0
        %3866 = vdwg.mxu0
        %s3867 = scalar_lea.vmem %s14, 64
        %v3868 = vld [vmem:[%s3867] sm:$0xff]
        %v3869 = vld [vmem:[%s3867 + $0x8] sm:$0xff]
        %v3870 = vld [vmem:[%s3867 + $0x10] sm:$0xff]
        %v3871 = vld [vmem:[%s3867 + $0x18] sm:$0xff]
        %s3872 = scalar_lea.vmem %s15, 2
        %v3873 = vld [vmem:[%s3872] sm:$0x1]
        %v3875 = vlaneseq
        %v3876 = vshrl.u32 %v3875, 7
        %v3877 = vsub.s32 0, %v3876
        %v3878 = vrot.slane %v3873, %v3877
        %3880 = vmatprep.subr.mxu0 0.0
        %3881 = vmatpush1.msra.mxu0 0.0
        %3882 = vmatprep.subr.mxu0 0.0
        %3883 = vmatpush1.msra.mxu0 0.0
        %3884 = vmatprep.subr.mxu0 0.0
        %3885 = vmatpush1.msra.mxu0 0.0
        %3886 = vmatprep.subr.mxu0 0.0
        %3887 = vmatpush1.msra.mxu0 0.0
        %3888 = vmatprep.subr.mxu0 0.0
        %3889 = vmatpush1.msra.mxu0 0.0
        %3890 = vmatprep.subr.mxu0 0.0
        %3891 = vmatpush1.msra.mxu0 0.0
        %3892 = vmatprep.subr.mxu0 0.0
        %3893 = vmatpush1.msra.mxu0 0.0
        %3894 = vmatprep.subr.mxu0 0.0
        %3895 = vmatpush1.msra.mxu0 0.0
        %3896 = vmatprep.subr.mxu0 0.0
        %3897 = vmatpush1.msra.mxu0 0.0
        %3898 = vmatprep.subr.mxu0 0.0
        %3899 = vmatpush1.msra.mxu0 0.0
        %3900 = vmatprep.subr.mxu0 0.0
        %3901 = vmatpush1.msra.mxu0 0.0
        %3902 = vmatprep.subr.mxu0 0.0
        %3903 = vmatpush1.msra.mxu0 0.0
        %3904 = vmatprep.subr.mxu0 0.0
        %3905 = vmatpush1.msra.mxu0 %v3871
        %3906 = vmatprep.subr.mxu0 0.0
        %3907 = vmatpush1.msra.mxu0 %v3870
        %3908 = vmatprep.subr.mxu0 0.0
        %3909 = vmatpush1.msra.mxu0 %v3869
        %3910 = vmatprep.subr.mxu0 0.0
        %3911 = vmatpush1.msra.mxu0 %v3868
        %3912 = vmatprep.subr.mxu0 0.0
        %3913 = vmatpush2.msra.mxu0 0.0
        %3914 = vmatprep.subr.mxu0 0.0
        %3915 = vmatpush2.msra.mxu0 0.0
        %3916 = vmatprep.subr.mxu0 0.0
        %3917 = vmatpush2.msra.mxu0 0.0
        %3918 = vmatprep.subr.mxu0 0.0
        %3919 = vmatpush2.msra.mxu0 0.0
        %3920 = vmatprep.subr.mxu0 0.0
        %3921 = vmatpush2.msra.mxu0 0.0
        %3922 = vmatprep.subr.mxu0 0.0
        %3923 = vmatpush2.msra.mxu0 0.0
        %3924 = vmatprep.subr.mxu0 0.0
        %3925 = vmatpush2.msra.mxu0 0.0
        %3926 = vmatprep.subr.mxu0 0.0
        %3927 = vmatpush2.msra.mxu0 0.0
        %3928 = vmatprep.subr.mxu0 0.0
        %3929 = vmatpush2.msra.mxu0 0.0
        %3930 = vmatprep.subr.mxu0 0.0
        %3931 = vmatpush2.msra.mxu0 0.0
        %3932 = vmatprep.subr.mxu0 0.0
        %3933 = vmatpush2.msra.mxu0 0.0
        %3934 = vmatprep.subr.mxu0 0.0
        %3935 = vmatpush2.msra.mxu0 0.0
        %3936 = vmatprep.subr.mxu0 0.0
        %3937 = vmatpush2.msra.mxu0 0.0
        %3938 = vmatprep.subr.mxu0 0.0
        %3939 = vmatpush2.msra.mxu0 0.0
        %3940 = vmatprep.subr.mxu0 0.0
        %3941 = vmatpush2.msra.mxu0 0.0
        %3942 = vmatprep.subr.mxu0 0.0
        %3943 = vmatpush2.msra.mxu0 0.0
        %3944 = vmatprep.mubr.f32.mxu0 0.0
        %3945 = vmatmul.mubr.f32.gmra.mxu0 %v2913
        %v3946 = vpop.f32.mrf.mxu0
        %v3947 = vadd.f32 %v3878, %v3946
        %v3948 = vpop.f32.mrf.mxu0
        %3949 = vdwg.mxu0
        %s3950 = scalar_lea.vmem %s16, 64
        %v3951 = vld [vmem:[%s3950] sm:$0xff]
        %v3952 = vld [vmem:[%s3950 + $0x8] sm:$0xff]
        %v3953 = vld [vmem:[%s3950 + $0x10] sm:$0xff]
        %v3954 = vld [vmem:[%s3950 + $0x18] sm:$0xff]
        %s3955 = scalar_lea.vmem %s17, 2
        %v3956 = vld [vmem:[%s3955] sm:$0x1]
        %v3958 = vlaneseq
        %v3959 = vshrl.u32 %v3958, 7
        %v3960 = vsub.s32 0, %v3959
        %v3961 = vrot.slane %v3956, %v3960
        %3963 = vmatprep.subr.mxu0 0.0
        %3964 = vmatpush1.msra.mxu0 0.0
        %3965 = vmatprep.subr.mxu0 0.0
        %3966 = vmatpush1.msra.mxu0 0.0
        %3967 = vmatprep.subr.mxu0 0.0
        %3968 = vmatpush1.msra.mxu0 0.0
        %3969 = vmatprep.subr.mxu0 0.0
        %3970 = vmatpush1.msra.mxu0 0.0
        %3971 = vmatprep.subr.mxu0 0.0
        %3972 = vmatpush1.msra.mxu0 0.0
        %3973 = vmatprep.subr.mxu0 0.0
        %3974 = vmatpush1.msra.mxu0 0.0
        %3975 = vmatprep.subr.mxu0 0.0
        %3976 = vmatpush1.msra.mxu0 0.0
        %3977 = vmatprep.subr.mxu0 0.0
        %3978 = vmatpush1.msra.mxu0 0.0
        %3979 = vmatprep.subr.mxu0 0.0
        %3980 = vmatpush1.msra.mxu0 0.0
        %3981 = vmatprep.subr.mxu0 0.0
        %3982 = vmatpush1.msra.mxu0 0.0
        %3983 = vmatprep.subr.mxu0 0.0
        %3984 = vmatpush1.msra.mxu0 0.0
        %3985 = vmatprep.subr.mxu0 0.0
        %3986 = vmatpush1.msra.mxu0 0.0
        %3987 = vmatprep.subr.mxu0 0.0
        %3988 = vmatpush1.msra.mxu0 %v3954
        %3989 = vmatprep.subr.mxu0 0.0
        %3990 = vmatpush1.msra.mxu0 %v3953
        %3991 = vmatprep.subr.mxu0 0.0
        %3992 = vmatpush1.msra.mxu0 %v3952
        %3993 = vmatprep.subr.mxu0 0.0
        %3994 = vmatpush1.msra.mxu0 %v3951
        %3995 = vmatprep.subr.mxu0 0.0
        %3996 = vmatpush2.msra.mxu0 0.0
        %3997 = vmatprep.subr.mxu0 0.0
        %3998 = vmatpush2.msra.mxu0 0.0
        %3999 = vmatprep.subr.mxu0 0.0
        %4000 = vmatpush2.msra.mxu0 0.0
        %4001 = vmatprep.subr.mxu0 0.0
        %4002 = vmatpush2.msra.mxu0 0.0
        %4003 = vmatprep.subr.mxu0 0.0
        %4004 = vmatpush2.msra.mxu0 0.0
        %4005 = vmatprep.subr.mxu0 0.0
        %4006 = vmatpush2.msra.mxu0 0.0
        %4007 = vmatprep.subr.mxu0 0.0
        %4008 = vmatpush2.msra.mxu0 0.0
        %4009 = vmatprep.subr.mxu0 0.0
        %4010 = vmatpush2.msra.mxu0 0.0
        %4011 = vmatprep.subr.mxu0 0.0
        %4012 = vmatpush2.msra.mxu0 0.0
        %4013 = vmatprep.subr.mxu0 0.0
        %4014 = vmatpush2.msra.mxu0 0.0
        %4015 = vmatprep.subr.mxu0 0.0
        %4016 = vmatpush2.msra.mxu0 0.0
        %4017 = vmatprep.subr.mxu0 0.0
        %4018 = vmatpush2.msra.mxu0 0.0
        %4019 = vmatprep.subr.mxu0 0.0
        %4020 = vmatpush2.msra.mxu0 0.0
        %4021 = vmatprep.subr.mxu0 0.0
        %4022 = vmatpush2.msra.mxu0 0.0
        %4023 = vmatprep.subr.mxu0 0.0
        %4024 = vmatpush2.msra.mxu0 0.0
        %4025 = vmatprep.subr.mxu0 0.0
        %4026 = vmatpush2.msra.mxu0 0.0
        %4027 = vmatprep.mubr.f32.mxu0 0.0
        %4028 = vmatmul.mubr.f32.gmra.mxu0 %v2913
        %v4029 = vpop.f32.mrf.mxu0
        %v4030 = vadd.f32 %v3961, %v4029
        %v4031 = vpop.f32.mrf.mxu0
        %4032 = vdwg.mxu0
        %v4034 = vsel %vm1091, %v3864, 0
        %v4037 = vsel %vm1091, %v3947, 0
        %4039 = vmatprep.subr.mxu0 0.0
        %4040 = vmatpush1.xpose.msra.mxu0 0.0
        %4041 = vmatprep.subr.mxu0 0.0
        %4042 = vmatpush1.xpose.msra.mxu0 0.0
        %4043 = vmatprep.subr.mxu0 0.0
        %4044 = vmatpush1.xpose.msra.mxu0 0.0
        %4045 = vmatprep.subr.mxu0 0.0
        %4046 = vmatpush1.xpose.msra.mxu0 0.0
        %4047 = vmatprep.subr.mxu0 0.0
        %4048 = vmatpush1.xpose.msra.mxu0 0.0
        %4049 = vmatprep.subr.mxu0 0.0
        %4050 = vmatpush1.xpose.msra.mxu0 0.0
        %4051 = vmatprep.subr.mxu0 0.0
        %4052 = vmatpush1.xpose.msra.mxu0 0.0
        %4053 = vmatprep.subr.mxu0 0.0
        %4054 = vmatpush1.xpose.msra.mxu0 0.0
        %4055 = vmatprep.subr.mxu0 0.0
        %4056 = vmatpush1.xpose.msra.mxu0 0.0
        %4057 = vmatprep.subr.mxu0 0.0
        %4058 = vmatpush1.xpose.msra.mxu0 0.0
        %4059 = vmatprep.subr.mxu0 0.0
        %4060 = vmatpush1.xpose.msra.mxu0 0.0
        %4061 = vmatprep.subr.mxu0 0.0
        %4062 = vmatpush1.xpose.msra.mxu0 0.0
        %4063 = vmatprep.subr.mxu0 0.0
        %4064 = vmatpush1.xpose.msra.mxu0 0.0
        %4065 = vmatprep.subr.mxu0 0.0
        %4066 = vmatpush1.xpose.msra.mxu0 0.0
        %4067 = vmatprep.subr.mxu0 0.0
        %4068 = vmatpush1.xpose.msra.mxu0 0.0
        %4069 = vmatprep.subr.mxu0 0.0
        %4070 = vmatpush1.xpose.msra.mxu0 %v4037
        %4071 = vmatprep.subr.mxu0 0.0
        %4072 = vmatpush2.xpose.msra.mxu0 0.0
        %4073 = vmatprep.subr.mxu0 0.0
        %4074 = vmatpush2.xpose.msra.mxu0 0.0
        %4075 = vmatprep.subr.mxu0 0.0
        %4076 = vmatpush2.xpose.msra.mxu0 0.0
        %4077 = vmatprep.subr.mxu0 0.0
        %4078 = vmatpush2.xpose.msra.mxu0 0.0
        %4079 = vmatprep.subr.mxu0 0.0
        %4080 = vmatpush2.xpose.msra.mxu0 0.0
        %4081 = vmatprep.subr.mxu0 0.0
        %4082 = vmatpush2.xpose.msra.mxu0 0.0
        %4083 = vmatprep.subr.mxu0 0.0
        %4084 = vmatpush2.xpose.msra.mxu0 0.0
        %4085 = vmatprep.subr.mxu0 0.0
        %4086 = vmatpush2.xpose.msra.mxu0 0.0
        %4087 = vmatprep.subr.mxu0 0.0
        %4088 = vmatpush2.xpose.msra.mxu0 0.0
        %4089 = vmatprep.subr.mxu0 0.0
        %4090 = vmatpush2.xpose.msra.mxu0 0.0
        %4091 = vmatprep.subr.mxu0 0.0
        %4092 = vmatpush2.xpose.msra.mxu0 0.0
        %4093 = vmatprep.subr.mxu0 0.0
        %4094 = vmatpush2.xpose.msra.mxu0 0.0
        %4095 = vmatprep.subr.mxu0 0.0
        %4096 = vmatpush2.xpose.msra.mxu0 0.0
        %4097 = vmatprep.subr.mxu0 0.0
        %4098 = vmatpush2.xpose.msra.mxu0 0.0
        %4099 = vmatprep.subr.mxu0 0.0
        %4100 = vmatpush2.xpose.msra.mxu0 0.0
        %4101 = vmatprep.subr.mxu0 0.0
        %4102 = vmatpush2.xpose.msra.mxu0 0.0
        %4103 = vmatprep.mubr.f32.mxu0 0.0
        %4104 = vmatmul.mubr.f32.gmra.mxu0 %v4034
        %v4105 = vpop.f32.mrf.mxu0
        %v4106 = vadd.f32 %v841, %v4105
        %v4107 = vpop.f32.mrf.mxu0
        %4108 = vdwg.mxu0
        %v4109 = vsel %vm1091, %v4106, -inf
        %4110 = vmax.xlane.f32.xlu0 %v4109
        %v4111 = vpop.xlane.xlu0 %4110
        %v4112 = vsub.f32 %v4106, %v4111
        %v4113 = vmul.f32 %v4112, 1.442695
        %v4114 = vpow.pop %v4113
        %v4115 = vsel %vm1091, %v4114, 0.0
        %4116 = vadd.xlane.f32.xlu0 %v4115
        %v4117 = vpop.xlane.xlu0 %4116
        %v4118 = vrcp.pop %v4117
        %v4119 = vmul.f32 %v4114, %v4118
        %v4121 = vsel %vm1091, %v4119, 0
        %4123 = vmatprep.subr.mxu0 0.0
        %4124 = vmatpush1.msra.mxu0 0.0
        %4125 = vmatprep.subr.mxu0 0.0
        %4126 = vmatpush1.msra.mxu0 0.0
        %4127 = vmatprep.subr.mxu0 0.0
        %4128 = vmatpush1.msra.mxu0 0.0
        %4129 = vmatprep.subr.mxu0 0.0
        %4130 = vmatpush1.msra.mxu0 0.0
        %4131 = vmatprep.subr.mxu0 0.0
        %4132 = vmatpush1.msra.mxu0 0.0
        %4133 = vmatprep.subr.mxu0 0.0
        %4134 = vmatpush1.msra.mxu0 0.0
        %4135 = vmatprep.subr.mxu0 0.0
        %4136 = vmatpush1.msra.mxu0 0.0
        %4137 = vmatprep.subr.mxu0 0.0
        %4138 = vmatpush1.msra.mxu0 0.0
        %4139 = vmatprep.subr.mxu0 0.0
        %4140 = vmatpush1.msra.mxu0 0.0
        %4141 = vmatprep.subr.mxu0 0.0
        %4142 = vmatpush1.msra.mxu0 0.0
        %4143 = vmatprep.subr.mxu0 0.0
        %4144 = vmatpush1.msra.mxu0 0.0
        %4145 = vmatprep.subr.mxu0 0.0
        %4146 = vmatpush1.msra.mxu0 0.0
        %4147 = vmatprep.subr.mxu0 0.0
        %4148 = vmatpush1.msra.mxu0 0.0
        %4149 = vmatprep.subr.mxu0 0.0
        %4150 = vmatpush1.msra.mxu0 0.0
        %4151 = vmatprep.subr.mxu0 0.0
        %4152 = vmatpush1.msra.mxu0 0.0
        %4153 = vmatprep.subr.mxu0 0.0
        %4154 = vmatpush1.msra.mxu0 %v4030
        %4155 = vmatprep.subr.mxu0 0.0
        %4156 = vmatpush2.msra.mxu0 0.0
        %4157 = vmatprep.subr.mxu0 0.0
        %4158 = vmatpush2.msra.mxu0 0.0
        %4159 = vmatprep.subr.mxu0 0.0
        %4160 = vmatpush2.msra.mxu0 0.0
        %4161 = vmatprep.subr.mxu0 0.0
        %4162 = vmatpush2.msra.mxu0 0.0
        %4163 = vmatprep.subr.mxu0 0.0
        %4164 = vmatpush2.msra.mxu0 0.0
        %4165 = vmatprep.subr.mxu0 0.0
        %4166 = vmatpush2.msra.mxu0 0.0
        %4167 = vmatprep.subr.mxu0 0.0
        %4168 = vmatpush2.msra.mxu0 0.0
        %4169 = vmatprep.subr.mxu0 0.0
        %4170 = vmatpush2.msra.mxu0 0.0
        %4171 = vmatprep.subr.mxu0 0.0
        %4172 = vmatpush2.msra.mxu0 0.0
        %4173 = vmatprep.subr.mxu0 0.0
        %4174 = vmatpush2.msra.mxu0 0.0
        %4175 = vmatprep.subr.mxu0 0.0
        %4176 = vmatpush2.msra.mxu0 0.0
        %4177 = vmatprep.subr.mxu0 0.0
        %4178 = vmatpush2.msra.mxu0 0.0
        %4179 = vmatprep.subr.mxu0 0.0
        %4180 = vmatpush2.msra.mxu0 0.0
        %4181 = vmatprep.subr.mxu0 0.0
        %4182 = vmatpush2.msra.mxu0 0.0
        %4183 = vmatprep.subr.mxu0 0.0
        %4184 = vmatpush2.msra.mxu0 0.0
        %4185 = vmatprep.subr.mxu0 0.0
        %4186 = vmatpush2.msra.mxu0 0.0
        %4187 = vmatprep.mubr.f32.mxu0 0.0
        %4188 = vmatmul.mubr.f32.gmra.mxu0 %v4121
        %v4189 = vpop.f32.mrf.mxu0
        %v4190 = vadd.f32 0.0, %v4189
        %v4191 = vpop.f32.mrf.mxu0
        %4192 = vdwg.mxu0
        %s4193 = scalar_lea.vmem %s18, 16
        %v4194 = vld [vmem:[%s4193] sm:$0xff]
        %v4196 = vsel %vm1091, %v4190, 0
        %4198 = vmatprep.subr.mxu0 0.0
        %4199 = vmatpush1.msra.mxu0 0.0
        %4200 = vmatprep.subr.mxu0 0.0
        %4201 = vmatpush1.msra.mxu0 0.0
        %4202 = vmatprep.subr.mxu0 0.0
        %4203 = vmatpush1.msra.mxu0 0.0
        %4204 = vmatprep.subr.mxu0 0.0
        %4205 = vmatpush1.msra.mxu0 0.0
        %4206 = vmatprep.subr.mxu0 0.0
        %4207 = vmatpush1.msra.mxu0 0.0
        %4208 = vmatprep.subr.mxu0 0.0
        %4209 = vmatpush1.msra.mxu0 0.0
        %4210 = vmatprep.subr.mxu0 0.0
        %4211 = vmatpush1.msra.mxu0 0.0
        %4212 = vmatprep.subr.mxu0 0.0
        %4213 = vmatpush1.msra.mxu0 0.0
        %4214 = vmatprep.subr.mxu0 0.0
        %4215 = vmatpush1.msra.mxu0 0.0
        %4216 = vmatprep.subr.mxu0 0.0
        %4217 = vmatpush1.msra.mxu0 0.0
        %4218 = vmatprep.subr.mxu0 0.0
        %4219 = vmatpush1.msra.mxu0 0.0
        %4220 = vmatprep.subr.mxu0 0.0
        %4221 = vmatpush1.msra.mxu0 0.0
        %4222 = vmatprep.subr.mxu0 0.0
        %4223 = vmatpush1.msra.mxu0 0.0
        %4224 = vmatprep.subr.mxu0 0.0
        %4225 = vmatpush1.msra.mxu0 0.0
        %4226 = vmatprep.subr.mxu0 0.0
        %4227 = vmatpush1.msra.mxu0 0.0
        %4228 = vmatprep.subr.mxu0 0.0
        %4229 = vmatpush1.msra.mxu0 %v4194
        %4230 = vmatprep.subr.mxu0 0.0
        %4231 = vmatpush2.msra.mxu0 0.0
        %4232 = vmatprep.subr.mxu0 0.0
        %4233 = vmatpush2.msra.mxu0 0.0
        %4234 = vmatprep.subr.mxu0 0.0
        %4235 = vmatpush2.msra.mxu0 0.0
        %4236 = vmatprep.subr.mxu0 0.0
        %4237 = vmatpush2.msra.mxu0 0.0
        %4238 = vmatprep.subr.mxu0 0.0
        %4239 = vmatpush2.msra.mxu0 0.0
        %4240 = vmatprep.subr.mxu0 0.0
        %4241 = vmatpush2.msra.mxu0 0.0
        %4242 = vmatprep.subr.mxu0 0.0
        %4243 = vmatpush2.msra.mxu0 0.0
        %4244 = vmatprep.subr.mxu0 0.0
        %4245 = vmatpush2.msra.mxu0 0.0
        %4246 = vmatprep.subr.mxu0 0.0
        %4247 = vmatpush2.msra.mxu0 0.0
        %4248 = vmatprep.subr.mxu0 0.0
        %4249 = vmatpush2.msra.mxu0 0.0
        %4250 = vmatprep.subr.mxu0 0.0
        %4251 = vmatpush2.msra.mxu0 0.0
        %4252 = vmatprep.subr.mxu0 0.0
        %4253 = vmatpush2.msra.mxu0 0.0
        %4254 = vmatprep.subr.mxu0 0.0
        %4255 = vmatpush2.msra.mxu0 0.0
        %4256 = vmatprep.subr.mxu0 0.0
        %4257 = vmatpush2.msra.mxu0 0.0
        %4258 = vmatprep.subr.mxu0 0.0
        %4259 = vmatpush2.msra.mxu0 0.0
        %4260 = vmatprep.subr.mxu0 0.0
        %4261 = vmatpush2.msra.mxu0 0.0
        %4262 = vmatprep.mubr.f32.mxu0 0.0
        %4263 = vmatmul.mubr.f32.gmra.mxu0 %v4196
        %v4264 = vpop.f32.mrf.mxu0
        %v4265 = vadd.f32 0.0, %v4264
        %v4266 = vpop.f32.mrf.mxu0
        %4267 = vdwg.mxu0
        %v4268 = vadd.f32 %v3781, %v4265
        %s4269 = scalar_lea.vmem %s12, 96
        %v4270 = vld [vmem:[%s4269] sm:$0xff]
        %v4271 = vld [vmem:[%s4269 + $0x8] sm:$0xff]
        %v4272 = vld [vmem:[%s4269 + $0x10] sm:$0xff]
        %v4273 = vld [vmem:[%s4269 + $0x18] sm:$0xff]
        %s4274 = scalar_lea.vmem %s13, 3
        %v4275 = vld [vmem:[%s4274] sm:$0x1]
        %v4277 = vlaneseq
        %v4278 = vshrl.u32 %v4277, 7
        %v4279 = vsub.s32 0, %v4278
        %v4280 = vrot.slane %v4275, %v4279
        %4282 = vmatprep.subr.mxu0 0.0
        %4283 = vmatpush1.msra.mxu0 0.0
        %4284 = vmatprep.subr.mxu0 0.0
        %4285 = vmatpush1.msra.mxu0 0.0
        %4286 = vmatprep.subr.mxu0 0.0
        %4287 = vmatpush1.msra.mxu0 0.0
        %4288 = vmatprep.subr.mxu0 0.0
        %4289 = vmatpush1.msra.mxu0 0.0
        %4290 = vmatprep.subr.mxu0 0.0
        %4291 = vmatpush1.msra.mxu0 0.0
        %4292 = vmatprep.subr.mxu0 0.0
        %4293 = vmatpush1.msra.mxu0 0.0
        %4294 = vmatprep.subr.mxu0 0.0
        %4295 = vmatpush1.msra.mxu0 0.0
        %4296 = vmatprep.subr.mxu0 0.0
        %4297 = vmatpush1.msra.mxu0 0.0
        %4298 = vmatprep.subr.mxu0 0.0
        %4299 = vmatpush1.msra.mxu0 0.0
        %4300 = vmatprep.subr.mxu0 0.0
        %4301 = vmatpush1.msra.mxu0 0.0
        %4302 = vmatprep.subr.mxu0 0.0
        %4303 = vmatpush1.msra.mxu0 0.0
        %4304 = vmatprep.subr.mxu0 0.0
        %4305 = vmatpush1.msra.mxu0 0.0
        %4306 = vmatprep.subr.mxu0 0.0
        %4307 = vmatpush1.msra.mxu0 %v4273
        %4308 = vmatprep.subr.mxu0 0.0
        %4309 = vmatpush1.msra.mxu0 %v4272
        %4310 = vmatprep.subr.mxu0 0.0
        %4311 = vmatpush1.msra.mxu0 %v4271
        %4312 = vmatprep.subr.mxu0 0.0
        %4313 = vmatpush1.msra.mxu0 %v4270
        %4314 = vmatprep.subr.mxu0 0.0
        %4315 = vmatpush2.msra.mxu0 0.0
        %4316 = vmatprep.subr.mxu0 0.0
        %4317 = vmatpush2.msra.mxu0 0.0
        %4318 = vmatprep.subr.mxu0 0.0
        %4319 = vmatpush2.msra.mxu0 0.0
        %4320 = vmatprep.subr.mxu0 0.0
        %4321 = vmatpush2.msra.mxu0 0.0
        %4322 = vmatprep.subr.mxu0 0.0
        %4323 = vmatpush2.msra.mxu0 0.0
        %4324 = vmatprep.subr.mxu0 0.0
        %4325 = vmatpush2.msra.mxu0 0.0
        %4326 = vmatprep.subr.mxu0 0.0
        %4327 = vmatpush2.msra.mxu0 0.0
        %4328 = vmatprep.subr.mxu0 0.0
        %4329 = vmatpush2.msra.mxu0 0.0
        %4330 = vmatprep.subr.mxu0 0.0
        %4331 = vmatpush2.msra.mxu0 0.0
        %4332 = vmatprep.subr.mxu0 0.0
        %4333 = vmatpush2.msra.mxu0 0.0
        %4334 = vmatprep.subr.mxu0 0.0
        %4335 = vmatpush2.msra.mxu0 0.0
        %4336 = vmatprep.subr.mxu0 0.0
        %4337 = vmatpush2.msra.mxu0 0.0
        %4338 = vmatprep.subr.mxu0 0.0
        %4339 = vmatpush2.msra.mxu0 0.0
        %4340 = vmatprep.subr.mxu0 0.0
        %4341 = vmatpush2.msra.mxu0 0.0
        %4342 = vmatprep.subr.mxu0 0.0
        %4343 = vmatpush2.msra.mxu0 0.0
        %4344 = vmatprep.subr.mxu0 0.0
        %4345 = vmatpush2.msra.mxu0 0.0
        %4346 = vmatprep.mubr.f32.mxu0 0.0
        %4347 = vmatmul.mubr.f32.gmra.mxu0 %v2829
        %v4348 = vpop.f32.mrf.mxu0
        %v4349 = vadd.f32 %v4280, %v4348
        %v4350 = vpop.f32.mrf.mxu0
        %4351 = vdwg.mxu0
        %s4352 = scalar_lea.vmem %s14, 96
        %v4353 = vld [vmem:[%s4352] sm:$0xff]
        %v4354 = vld [vmem:[%s4352 + $0x8] sm:$0xff]
        %v4355 = vld [vmem:[%s4352 + $0x10] sm:$0xff]
        %v4356 = vld [vmem:[%s4352 + $0x18] sm:$0xff]
        %s4357 = scalar_lea.vmem %s15, 3
        %v4358 = vld [vmem:[%s4357] sm:$0x1]
        %v4360 = vlaneseq
        %v4361 = vshrl.u32 %v4360, 7
        %v4362 = vsub.s32 0, %v4361
        %v4363 = vrot.slane %v4358, %v4362
        %4365 = vmatprep.subr.mxu0 0.0
        %4366 = vmatpush1.msra.mxu0 0.0
        %4367 = vmatprep.subr.mxu0 0.0
        %4368 = vmatpush1.msra.mxu0 0.0
        %4369 = vmatprep.subr.mxu0 0.0
        %4370 = vmatpush1.msra.mxu0 0.0
        %4371 = vmatprep.subr.mxu0 0.0
        %4372 = vmatpush1.msra.mxu0 0.0
        %4373 = vmatprep.subr.mxu0 0.0
        %4374 = vmatpush1.msra.mxu0 0.0
        %4375 = vmatprep.subr.mxu0 0.0
        %4376 = vmatpush1.msra.mxu0 0.0
        %4377 = vmatprep.subr.mxu0 0.0
        %4378 = vmatpush1.msra.mxu0 0.0
        %4379 = vmatprep.subr.mxu0 0.0
        %4380 = vmatpush1.msra.mxu0 0.0
        %4381 = vmatprep.subr.mxu0 0.0
        %4382 = vmatpush1.msra.mxu0 0.0
        %4383 = vmatprep.subr.mxu0 0.0
        %4384 = vmatpush1.msra.mxu0 0.0
        %4385 = vmatprep.subr.mxu0 0.0
        %4386 = vmatpush1.msra.mxu0 0.0
        %4387 = vmatprep.subr.mxu0 0.0
        %4388 = vmatpush1.msra.mxu0 0.0
        %4389 = vmatprep.subr.mxu0 0.0
        %4390 = vmatpush1.msra.mxu0 %v4356
        %4391 = vmatprep.subr.mxu0 0.0
        %4392 = vmatpush1.msra.mxu0 %v4355
        %4393 = vmatprep.subr.mxu0 0.0
        %4394 = vmatpush1.msra.mxu0 %v4354
        %4395 = vmatprep.subr.mxu0 0.0
        %4396 = vmatpush1.msra.mxu0 %v4353
        %4397 = vmatprep.subr.mxu0 0.0
        %4398 = vmatpush2.msra.mxu0 0.0
        %4399 = vmatprep.subr.mxu0 0.0
        %4400 = vmatpush2.msra.mxu0 0.0
        %4401 = vmatprep.subr.mxu0 0.0
        %4402 = vmatpush2.msra.mxu0 0.0
        %4403 = vmatprep.subr.mxu0 0.0
        %4404 = vmatpush2.msra.mxu0 0.0
        %4405 = vmatprep.subr.mxu0 0.0
        %4406 = vmatpush2.msra.mxu0 0.0
        %4407 = vmatprep.subr.mxu0 0.0
        %4408 = vmatpush2.msra.mxu0 0.0
        %4409 = vmatprep.subr.mxu0 0.0
        %4410 = vmatpush2.msra.mxu0 0.0
        %4411 = vmatprep.subr.mxu0 0.0
        %4412 = vmatpush2.msra.mxu0 0.0
        %4413 = vmatprep.subr.mxu0 0.0
        %4414 = vmatpush2.msra.mxu0 0.0
        %4415 = vmatprep.subr.mxu0 0.0
        %4416 = vmatpush2.msra.mxu0 0.0
        %4417 = vmatprep.subr.mxu0 0.0
        %4418 = vmatpush2.msra.mxu0 0.0
        %4419 = vmatprep.subr.mxu0 0.0
        %4420 = vmatpush2.msra.mxu0 0.0
        %4421 = vmatprep.subr.mxu0 0.0
        %4422 = vmatpush2.msra.mxu0 0.0
        %4423 = vmatprep.subr.mxu0 0.0
        %4424 = vmatpush2.msra.mxu0 0.0
        %4425 = vmatprep.subr.mxu0 0.0
        %4426 = vmatpush2.msra.mxu0 0.0
        %4427 = vmatprep.subr.mxu0 0.0
        %4428 = vmatpush2.msra.mxu0 0.0
        %4429 = vmatprep.mubr.f32.mxu0 0.0
        %4430 = vmatmul.mubr.f32.gmra.mxu0 %v2913
        %v4431 = vpop.f32.mrf.mxu0
        %v4432 = vadd.f32 %v4363, %v4431
        %v4433 = vpop.f32.mrf.mxu0
        %4434 = vdwg.mxu0
        %s4435 = scalar_lea.vmem %s16, 96
        %v4436 = vld [vmem:[%s4435] sm:$0xff]
        %v4437 = vld [vmem:[%s4435 + $0x8] sm:$0xff]
        %v4438 = vld [vmem:[%s4435 + $0x10] sm:$0xff]
        %v4439 = vld [vmem:[%s4435 + $0x18] sm:$0xff]
        %s4440 = scalar_lea.vmem %s17, 3
        %v4441 = vld [vmem:[%s4440] sm:$0x1]
        %v4443 = vlaneseq
        %v4444 = vshrl.u32 %v4443, 7
        %v4445 = vsub.s32 0, %v4444
        %v4446 = vrot.slane %v4441, %v4445
        %4448 = vmatprep.subr.mxu0 0.0
        %4449 = vmatpush1.msra.mxu0 0.0
        %4450 = vmatprep.subr.mxu0 0.0
        %4451 = vmatpush1.msra.mxu0 0.0
        %4452 = vmatprep.subr.mxu0 0.0
        %4453 = vmatpush1.msra.mxu0 0.0
        %4454 = vmatprep.subr.mxu0 0.0
        %4455 = vmatpush1.msra.mxu0 0.0
        %4456 = vmatprep.subr.mxu0 0.0
        %4457 = vmatpush1.msra.mxu0 0.0
        %4458 = vmatprep.subr.mxu0 0.0
        %4459 = vmatpush1.msra.mxu0 0.0
        %4460 = vmatprep.subr.mxu0 0.0
        %4461 = vmatpush1.msra.mxu0 0.0
        %4462 = vmatprep.subr.mxu0 0.0
        %4463 = vmatpush1.msra.mxu0 0.0
        %4464 = vmatprep.subr.mxu0 0.0
        %4465 = vmatpush1.msra.mxu0 0.0
        %4466 = vmatprep.subr.mxu0 0.0
        %4467 = vmatpush1.msra.mxu0 0.0
        %4468 = vmatprep.subr.mxu0 0.0
        %4469 = vmatpush1.msra.mxu0 0.0
        %4470 = vmatprep.subr.mxu0 0.0
        %4471 = vmatpush1.msra.mxu0 0.0
        %4472 = vmatprep.subr.mxu0 0.0
        %4473 = vmatpush1.msra.mxu0 %v4439
        %4474 = vmatprep.subr.mxu0 0.0
        %4475 = vmatpush1.msra.mxu0 %v4438
        %4476 = vmatprep.subr.mxu0 0.0
        %4477 = vmatpush1.msra.mxu0 %v4437
        %4478 = vmatprep.subr.mxu0 0.0
        %4479 = vmatpush1.msra.mxu0 %v4436
        %4480 = vmatprep.subr.mxu0 0.0
        %4481 = vmatpush2.msra.mxu0 0.0
        %4482 = vmatprep.subr.mxu0 0.0
        %4483 = vmatpush2.msra.mxu0 0.0
        %4484 = vmatprep.subr.mxu0 0.0
        %4485 = vmatpush2.msra.mxu0 0.0
        %4486 = vmatprep.subr.mxu0 0.0
        %4487 = vmatpush2.msra.mxu0 0.0
        %4488 = vmatprep.subr.mxu0 0.0
        %4489 = vmatpush2.msra.mxu0 0.0
        %4490 = vmatprep.subr.mxu0 0.0
        %4491 = vmatpush2.msra.mxu0 0.0
        %4492 = vmatprep.subr.mxu0 0.0
        %4493 = vmatpush2.msra.mxu0 0.0
        %4494 = vmatprep.subr.mxu0 0.0
        %4495 = vmatpush2.msra.mxu0 0.0
        %4496 = vmatprep.subr.mxu0 0.0
        %4497 = vmatpush2.msra.mxu0 0.0
        %4498 = vmatprep.subr.mxu0 0.0
        %4499 = vmatpush2.msra.mxu0 0.0
        %4500 = vmatprep.subr.mxu0 0.0
        %4501 = vmatpush2.msra.mxu0 0.0
        %4502 = vmatprep.subr.mxu0 0.0
        %4503 = vmatpush2.msra.mxu0 0.0
        %4504 = vmatprep.subr.mxu0 0.0
        %4505 = vmatpush2.msra.mxu0 0.0
        %4506 = vmatprep.subr.mxu0 0.0
        %4507 = vmatpush2.msra.mxu0 0.0
        %4508 = vmatprep.subr.mxu0 0.0
        %4509 = vmatpush2.msra.mxu0 0.0
        %4510 = vmatprep.subr.mxu0 0.0
        %4511 = vmatpush2.msra.mxu0 0.0
        %4512 = vmatprep.mubr.f32.mxu0 0.0
        %4513 = vmatmul.mubr.f32.gmra.mxu0 %v2913
        %v4514 = vpop.f32.mrf.mxu0
        %v4515 = vadd.f32 %v4446, %v4514
        %v4516 = vpop.f32.mrf.mxu0
        %4517 = vdwg.mxu0
        %v4519 = vsel %vm1091, %v4349, 0
        %v4522 = vsel %vm1091, %v4432, 0
        %4524 = vmatprep.subr.mxu0 0.0
        %4525 = vmatpush1.xpose.msra.mxu0 0.0
        %4526 = vmatprep.subr.mxu0 0.0
        %4527 = vmatpush1.xpose.msra.mxu0 0.0
        %4528 = vmatprep.subr.mxu0 0.0
        %4529 = vmatpush1.xpose.msra.mxu0 0.0
        %4530 = vmatprep.subr.mxu0 0.0
        %4531 = vmatpush1.xpose.msra.mxu0 0.0
        %4532 = vmatprep.subr.mxu0 0.0
        %4533 = vmatpush1.xpose.msra.mxu0 0.0
        %4534 = vmatprep.subr.mxu0 0.0
        %4535 = vmatpush1.xpose.msra.mxu0 0.0
        %4536 = vmatprep.subr.mxu0 0.0
        %4537 = vmatpush1.xpose.msra.mxu0 0.0
        %4538 = vmatprep.subr.mxu0 0.0
        %4539 = vmatpush1.xpose.msra.mxu0 0.0
        %4540 = vmatprep.subr.mxu0 0.0
        %4541 = vmatpush1.xpose.msra.mxu0 0.0
        %4542 = vmatprep.subr.mxu0 0.0
        %4543 = vmatpush1.xpose.msra.mxu0 0.0
        %4544 = vmatprep.subr.mxu0 0.0
        %4545 = vmatpush1.xpose.msra.mxu0 0.0
        %4546 = vmatprep.subr.mxu0 0.0
        %4547 = vmatpush1.xpose.msra.mxu0 0.0
        %4548 = vmatprep.subr.mxu0 0.0
        %4549 = vmatpush1.xpose.msra.mxu0 0.0
        %4550 = vmatprep.subr.mxu0 0.0
        %4551 = vmatpush1.xpose.msra.mxu0 0.0
        %4552 = vmatprep.subr.mxu0 0.0
        %4553 = vmatpush1.xpose.msra.mxu0 0.0
        %4554 = vmatprep.subr.mxu0 0.0
        %4555 = vmatpush1.xpose.msra.mxu0 %v4522
        %4556 = vmatprep.subr.mxu0 0.0
        %4557 = vmatpush2.xpose.msra.mxu0 0.0
        %4558 = vmatprep.subr.mxu0 0.0
        %4559 = vmatpush2.xpose.msra.mxu0 0.0
        %4560 = vmatprep.subr.mxu0 0.0
        %4561 = vmatpush2.xpose.msra.mxu0 0.0
        %4562 = vmatprep.subr.mxu0 0.0
        %4563 = vmatpush2.xpose.msra.mxu0 0.0
        %4564 = vmatprep.subr.mxu0 0.0
        %4565 = vmatpush2.xpose.msra.mxu0 0.0
        %4566 = vmatprep.subr.mxu0 0.0
        %4567 = vmatpush2.xpose.msra.mxu0 0.0
        %4568 = vmatprep.subr.mxu0 0.0
        %4569 = vmatpush2.xpose.msra.mxu0 0.0
        %4570 = vmatprep.subr.mxu0 0.0
        %4571 = vmatpush2.xpose.msra.mxu0 0.0
        %4572 = vmatprep.subr.mxu0 0.0
        %4573 = vmatpush2.xpose.msra.mxu0 0.0
        %4574 = vmatprep.subr.mxu0 0.0
        %4575 = vmatpush2.xpose.msra.mxu0 0.0
        %4576 = vmatprep.subr.mxu0 0.0
        %4577 = vmatpush2.xpose.msra.mxu0 0.0
        %4578 = vmatprep.subr.mxu0 0.0
        %4579 = vmatpush2.xpose.msra.mxu0 0.0
        %4580 = vmatprep.subr.mxu0 0.0
        %4581 = vmatpush2.xpose.msra.mxu0 0.0
        %4582 = vmatprep.subr.mxu0 0.0
        %4583 = vmatpush2.xpose.msra.mxu0 0.0
        %4584 = vmatprep.subr.mxu0 0.0
        %4585 = vmatpush2.xpose.msra.mxu0 0.0
        %4586 = vmatprep.subr.mxu0 0.0
        %4587 = vmatpush2.xpose.msra.mxu0 0.0
        %4588 = vmatprep.mubr.f32.mxu0 0.0
        %4589 = vmatmul.mubr.f32.gmra.mxu0 %v4519
        %v4590 = vpop.f32.mrf.mxu0
        %v4591 = vadd.f32 %v841, %v4590
        %v4592 = vpop.f32.mrf.mxu0
        %4593 = vdwg.mxu0
        %v4594 = vsel %vm1091, %v4591, -inf
        %4595 = vmax.xlane.f32.xlu0 %v4594
        %v4596 = vpop.xlane.xlu0 %4595
        %v4597 = vsub.f32 %v4591, %v4596
        %v4598 = vmul.f32 %v4597, 1.442695
        %v4599 = vpow.pop %v4598
        %v4600 = vsel %vm1091, %v4599, 0.0
        %4601 = vadd.xlane.f32.xlu0 %v4600
        %v4602 = vpop.xlane.xlu0 %4601
        %v4603 = vrcp.pop %v4602
        %v4604 = vmul.f32 %v4599, %v4603
        %v4606 = vsel %vm1091, %v4604, 0
        %4608 = vmatprep.subr.mxu0 0.0
        %4609 = vmatpush1.msra.mxu0 0.0
        %4610 = vmatprep.subr.mxu0 0.0
        %4611 = vmatpush1.msra.mxu0 0.0
        %4612 = vmatprep.subr.mxu0 0.0
        %4613 = vmatpush1.msra.mxu0 0.0
        %4614 = vmatprep.subr.mxu0 0.0
        %4615 = vmatpush1.msra.mxu0 0.0
        %4616 = vmatprep.subr.mxu0 0.0
        %4617 = vmatpush1.msra.mxu0 0.0
        %4618 = vmatprep.subr.mxu0 0.0
        %4619 = vmatpush1.msra.mxu0 0.0
        %4620 = vmatprep.subr.mxu0 0.0
        %4621 = vmatpush1.msra.mxu0 0.0
        %4622 = vmatprep.subr.mxu0 0.0
        %4623 = vmatpush1.msra.mxu0 0.0
        %4624 = vmatprep.subr.mxu0 0.0
        %4625 = vmatpush1.msra.mxu0 0.0
        %4626 = vmatprep.subr.mxu0 0.0
        %4627 = vmatpush1.msra.mxu0 0.0
        %4628 = vmatprep.subr.mxu0 0.0
        %4629 = vmatpush1.msra.mxu0 0.0
        %4630 = vmatprep.subr.mxu0 0.0
        %4631 = vmatpush1.msra.mxu0 0.0
        %4632 = vmatprep.subr.mxu0 0.0
        %4633 = vmatpush1.msra.mxu0 0.0
        %4634 = vmatprep.subr.mxu0 0.0
        %4635 = vmatpush1.msra.mxu0 0.0
        %4636 = vmatprep.subr.mxu0 0.0
        %4637 = vmatpush1.msra.mxu0 0.0
        %4638 = vmatprep.subr.mxu0 0.0
        %4639 = vmatpush1.msra.mxu0 %v4515
        %4640 = vmatprep.subr.mxu0 0.0
        %4641 = vmatpush2.msra.mxu0 0.0
        %4642 = vmatprep.subr.mxu0 0.0
        %4643 = vmatpush2.msra.mxu0 0.0
        %4644 = vmatprep.subr.mxu0 0.0
        %4645 = vmatpush2.msra.mxu0 0.0
        %4646 = vmatprep.subr.mxu0 0.0
        %4647 = vmatpush2.msra.mxu0 0.0
        %4648 = vmatprep.subr.mxu0 0.0
        %4649 = vmatpush2.msra.mxu0 0.0
        %4650 = vmatprep.subr.mxu0 0.0
        %4651 = vmatpush2.msra.mxu0 0.0
        %4652 = vmatprep.subr.mxu0 0.0
        %4653 = vmatpush2.msra.mxu0 0.0
        %4654 = vmatprep.subr.mxu0 0.0
        %4655 = vmatpush2.msra.mxu0 0.0
        %4656 = vmatprep.subr.mxu0 0.0
        %4657 = vmatpush2.msra.mxu0 0.0
        %4658 = vmatprep.subr.mxu0 0.0
        %4659 = vmatpush2.msra.mxu0 0.0
        %4660 = vmatprep.subr.mxu0 0.0
        %4661 = vmatpush2.msra.mxu0 0.0
        %4662 = vmatprep.subr.mxu0 0.0
        %4663 = vmatpush2.msra.mxu0 0.0
        %4664 = vmatprep.subr.mxu0 0.0
        %4665 = vmatpush2.msra.mxu0 0.0
        %4666 = vmatprep.subr.mxu0 0.0
        %4667 = vmatpush2.msra.mxu0 0.0
        %4668 = vmatprep.subr.mxu0 0.0
        %4669 = vmatpush2.msra.mxu0 0.0
        %4670 = vmatprep.subr.mxu0 0.0
        %4671 = vmatpush2.msra.mxu0 0.0
        %4672 = vmatprep.mubr.f32.mxu0 0.0
        %4673 = vmatmul.mubr.f32.gmra.mxu0 %v4606
        %v4674 = vpop.f32.mrf.mxu0
        %v4675 = vadd.f32 0.0, %v4674
        %v4676 = vpop.f32.mrf.mxu0
        %4677 = vdwg.mxu0
        %s4678 = scalar_lea.vmem %s18, 24
        %v4679 = vld [vmem:[%s4678] sm:$0xff]
        %v4681 = vsel %vm1091, %v4675, 0
        %4683 = vmatprep.subr.mxu0 0.0
        %4684 = vmatpush1.msra.mxu0 0.0
        %4685 = vmatprep.subr.mxu0 0.0
        %4686 = vmatpush1.msra.mxu0 0.0
        %4687 = vmatprep.subr.mxu0 0.0
        %4688 = vmatpush1.msra.mxu0 0.0
        %4689 = vmatprep.subr.mxu0 0.0
        %4690 = vmatpush1.msra.mxu0 0.0
        %4691 = vmatprep.subr.mxu0 0.0
        %4692 = vmatpush1.msra.mxu0 0.0
        %4693 = vmatprep.subr.mxu0 0.0
        %4694 = vmatpush1.msra.mxu0 0.0
        %4695 = vmatprep.subr.mxu0 0.0
        %4696 = vmatpush1.msra.mxu0 0.0
        %4697 = vmatprep.subr.mxu0 0.0
        %4698 = vmatpush1.msra.mxu0 0.0
        %4699 = vmatprep.subr.mxu0 0.0
        %4700 = vmatpush1.msra.mxu0 0.0
        %4701 = vmatprep.subr.mxu0 0.0
        %4702 = vmatpush1.msra.mxu0 0.0
        %4703 = vmatprep.subr.mxu0 0.0
        %4704 = vmatpush1.msra.mxu0 0.0
        %4705 = vmatprep.subr.mxu0 0.0
        %4706 = vmatpush1.msra.mxu0 0.0
        %4707 = vmatprep.subr.mxu0 0.0
        %4708 = vmatpush1.msra.mxu0 0.0
        %4709 = vmatprep.subr.mxu0 0.0
        %4710 = vmatpush1.msra.mxu0 0.0
        %4711 = vmatprep.subr.mxu0 0.0
        %4712 = vmatpush1.msra.mxu0 0.0
        %4713 = vmatprep.subr.mxu0 0.0
        %4714 = vmatpush1.msra.mxu0 %v4679
        %4715 = vmatprep.subr.mxu0 0.0
        %4716 = vmatpush2.msra.mxu0 0.0
        %4717 = vmatprep.subr.mxu0 0.0
        %4718 = vmatpush2.msra.mxu0 0.0
        %4719 = vmatprep.subr.mxu0 0.0
        %4720 = vmatpush2.msra.mxu0 0.0
        %4721 = vmatprep.subr.mxu0 0.0
        %4722 = vmatpush2.msra.mxu0 0.0
        %4723 = vmatprep.subr.mxu0 0.0
        %4724 = vmatpush2.msra.mxu0 0.0
        %4725 = vmatprep.subr.mxu0 0.0
        %4726 = vmatpush2.msra.mxu0 0.0
        %4727 = vmatprep.subr.mxu0 0.0
        %4728 = vmatpush2.msra.mxu0 0.0
        %4729 = vmatprep.subr.mxu0 0.0
        %4730 = vmatpush2.msra.mxu0 0.0
        %4731 = vmatprep.subr.mxu0 0.0
        %4732 = vmatpush2.msra.mxu0 0.0
        %4733 = vmatprep.subr.mxu0 0.0
        %4734 = vmatpush2.msra.mxu0 0.0
        %4735 = vmatprep.subr.mxu0 0.0
        %4736 = vmatpush2.msra.mxu0 0.0
        %4737 = vmatprep.subr.mxu0 0.0
        %4738 = vmatpush2.msra.mxu0 0.0
        %4739 = vmatprep.subr.mxu0 0.0
        %4740 = vmatpush2.msra.mxu0 0.0
        %4741 = vmatprep.subr.mxu0 0.0
        %4742 = vmatpush2.msra.mxu0 0.0
        %4743 = vmatprep.subr.mxu0 0.0
        %4744 = vmatpush2.msra.mxu0 0.0
        %4745 = vmatprep.subr.mxu0 0.0
        %4746 = vmatpush2.msra.mxu0 0.0
        %4747 = vmatprep.mubr.f32.mxu0 0.0
        %4748 = vmatmul.mubr.f32.gmra.mxu0 %v4681
        %v4749 = vpop.f32.mrf.mxu0
        %v4750 = vadd.f32 0.0, %v4749
        %v4751 = vpop.f32.mrf.mxu0
        %4752 = vdwg.mxu0
        %v4753 = vadd.f32 %v4268, %v4750
        %v4754 = vld [vmem:[%s19] sm:$0x1]
        %v4756 = vlaneseq
        %v4757 = vshrl.u32 %v4756, 7
        %v4758 = vsub.s32 0, %v4757
        %v4759 = vrot.slane %v4754, %v4758
        %v4761 = vadd.f32 %v4753, %v4759
        %v4762 = vadd.f32 %v4761, %v2816
        %v4763 = vsel %vm855, %v4762, 0.0
        %4764 = vadd.xlane.f32.xlu0 %v4763
        %v4765 = vpop.xlane.xlu0 %4764
        %v4766 = vmul.f32 %v4765, %v2792
        %v4767 = vsub.f32 %v4762, %v4766
        %v4768 = vmul.f32 %v4767, %v4767
        %v4769 = vsel %vm855, %v4768, 0.0
        %4770 = vadd.xlane.f32.xlu0 %v4769
        %v4771 = vpop.xlane.xlu0 %4770
        %v4772 = vmul.f32 %v4771, %v2792
        %v4773 = vadd.f32 %v4772, 1e-05
        %v4774 = vrsqrt.pop %v4773
        %v4775 = vmul.f32 %v4767, %v4774
        %v4776 = vmul.f32 %v4775, %v2807
        %v4777 = vadd.f32 %v4776, %v2814
        %v4778 = vld [vmem:[%s20] sm:$0xff]
        %v4779 = vld [vmem:[%s20 + $0x8] sm:$0xff]
        %v4780 = vld [vmem:[%s20 + $0x10] sm:$0xff]
        %v4781 = vld [vmem:[%s20 + $0x18] sm:$0xff]
        %v4782 = vld [vmem:[%s21] sm:$0x1]
        %v4784 = vlaneseq
        %v4785 = vshrl.u32 %v4784, 7
        %v4786 = vsub.s32 0, %v4785
        %v4787 = vrot.slane %v4782, %v4786
        %v4790 = vsel %vm855, %v4777, 0
        %4792 = vmatprep.subr.mxu0 0.0
        %4793 = vmatpush1.msra.mxu0 0.0
        %4794 = vmatprep.subr.mxu0 0.0
        %4795 = vmatpush1.msra.mxu0 0.0
        %4796 = vmatprep.subr.mxu0 0.0
        %4797 = vmatpush1.msra.mxu0 0.0
        %4798 = vmatprep.subr.mxu0 0.0
        %4799 = vmatpush1.msra.mxu0 0.0
        %4800 = vmatprep.subr.mxu0 0.0
        %4801 = vmatpush1.msra.mxu0 0.0
        %4802 = vmatprep.subr.mxu0 0.0
        %4803 = vmatpush1.msra.mxu0 0.0
        %4804 = vmatprep.subr.mxu0 0.0
        %4805 = vmatpush1.msra.mxu0 0.0
        %4806 = vmatprep.subr.mxu0 0.0
        %4807 = vmatpush1.msra.mxu0 0.0
        %4808 = vmatprep.subr.mxu0 0.0
        %4809 = vmatpush1.msra.mxu0 0.0
        %4810 = vmatprep.subr.mxu0 0.0
        %4811 = vmatpush1.msra.mxu0 0.0
        %4812 = vmatprep.subr.mxu0 0.0
        %4813 = vmatpush1.msra.mxu0 0.0
        %4814 = vmatprep.subr.mxu0 0.0
        %4815 = vmatpush1.msra.mxu0 0.0
        %4816 = vmatprep.subr.mxu0 0.0
        %4817 = vmatpush1.msra.mxu0 %v4781
        %4818 = vmatprep.subr.mxu0 0.0
        %4819 = vmatpush1.msra.mxu0 %v4780
        %4820 = vmatprep.subr.mxu0 0.0
        %4821 = vmatpush1.msra.mxu0 %v4779
        %4822 = vmatprep.subr.mxu0 0.0
        %4823 = vmatpush1.msra.mxu0 %v4778
        %4824 = vmatprep.subr.mxu0 0.0
        %4825 = vmatpush2.msra.mxu0 0.0
        %4826 = vmatprep.subr.mxu0 0.0
        %4827 = vmatpush2.msra.mxu0 0.0
        %4828 = vmatprep.subr.mxu0 0.0
        %4829 = vmatpush2.msra.mxu0 0.0
        %4830 = vmatprep.subr.mxu0 0.0
        %4831 = vmatpush2.msra.mxu0 0.0
        %4832 = vmatprep.subr.mxu0 0.0
        %4833 = vmatpush2.msra.mxu0 0.0
        %4834 = vmatprep.subr.mxu0 0.0
        %4835 = vmatpush2.msra.mxu0 0.0
        %4836 = vmatprep.subr.mxu0 0.0
        %4837 = vmatpush2.msra.mxu0 0.0
        %4838 = vmatprep.subr.mxu0 0.0
        %4839 = vmatpush2.msra.mxu0 0.0
        %4840 = vmatprep.subr.mxu0 0.0
        %4841 = vmatpush2.msra.mxu0 0.0
        %4842 = vmatprep.subr.mxu0 0.0
        %4843 = vmatpush2.msra.mxu0 0.0
        %4844 = vmatprep.subr.mxu0 0.0
        %4845 = vmatpush2.msra.mxu0 0.0
        %4846 = vmatprep.subr.mxu0 0.0
        %4847 = vmatpush2.msra.mxu0 0.0
        %4848 = vmatprep.subr.mxu0 0.0
        %4849 = vmatpush2.msra.mxu0 0.0
        %4850 = vmatprep.subr.mxu0 0.0
        %4851 = vmatpush2.msra.mxu0 0.0
        %4852 = vmatprep.subr.mxu0 0.0
        %4853 = vmatpush2.msra.mxu0 0.0
        %4854 = vmatprep.subr.mxu0 0.0
        %4855 = vmatpush2.msra.mxu0 0.0
        %4856 = vmatprep.mubr.f32.mxu0 0.0
        %4857 = vmatmul.mubr.f32.gmra.mxu0 %v4790
        %v4858 = vpop.f32.mrf.mxu0
        %v4859 = vadd.f32 %v4787, %v4858
        %v4860 = vpop.f32.mrf.mxu0
        %4861 = vdwg.mxu0
        %v4862 = vmax.f32 %v4859, 0.0
        %v4863 = vld [vmem:[%s22] sm:$0xff]
        %v4864 = vld [vmem:[%s22 + $0x8] sm:$0xff]
        %v4865 = vld [vmem:[%s22 + $0x10] sm:$0xff]
        %v4866 = vld [vmem:[%s22 + $0x18] sm:$0xff]
        %v4867 = vld [vmem:[%s22 + $0x20] sm:$0xff]
        %v4868 = vld [vmem:[%s22 + $0x28] sm:$0xff]
        %v4869 = vld [vmem:[%s22 + $0x30] sm:$0xff]
        %v4870 = vld [vmem:[%s22 + $0x38] sm:$0xff]
        %v4871 = vld [vmem:[%s23] sm:$0x1]
        %v4873 = vlaneseq
        %v4874 = vshrl.u32 %v4873, 7
        %v4875 = vsub.s32 0, %v4874
        %v4876 = vrot.slane %v4871, %v4875
        %vm4878 = vcmask 523264
        %v4880 = vsel %vm4878, %v4862, 0
        %4882 = vmatprep.subr.mxu0 0.0
        %4883 = vmatpush1.msra.mxu0 0.0
        %4884 = vmatprep.subr.mxu0 0.0
        %4885 = vmatpush1.msra.mxu0 0.0
        %4886 = vmatprep.subr.mxu0 0.0
        %4887 = vmatpush1.msra.mxu0 0.0
        %4888 = vmatprep.subr.mxu0 0.0
        %4889 = vmatpush1.msra.mxu0 0.0
        %4890 = vmatprep.subr.mxu0 0.0
        %4891 = vmatpush1.msra.mxu0 0.0
        %4892 = vmatprep.subr.mxu0 0.0
        %4893 = vmatpush1.msra.mxu0 0.0
        %4894 = vmatprep.subr.mxu0 0.0
        %4895 = vmatpush1.msra.mxu0 0.0
        %4896 = vmatprep.subr.mxu0 0.0
        %4897 = vmatpush1.msra.mxu0 0.0
        %4898 = vmatprep.subr.mxu0 0.0
        %4899 = vmatpush1.msra.mxu0 %v4870
        %4900 = vmatprep.subr.mxu0 0.0
        %4901 = vmatpush1.msra.mxu0 %v4869
        %4902 = vmatprep.subr.mxu0 0.0
        %4903 = vmatpush1.msra.mxu0 %v4868
        %4904 = vmatprep.subr.mxu0 0.0
        %4905 = vmatpush1.msra.mxu0 %v4867
        %4906 = vmatprep.subr.mxu0 0.0
        %4907 = vmatpush1.msra.mxu0 %v4866
        %4908 = vmatprep.subr.mxu0 0.0
        %4909 = vmatpush1.msra.mxu0 %v4865
        %4910 = vmatprep.subr.mxu0 0.0
        %4911 = vmatpush1.msra.mxu0 %v4864
        %4912 = vmatprep.subr.mxu0 0.0
        %4913 = vmatpush1.msra.mxu0 %v4863
        %4914 = vmatprep.subr.mxu0 0.0
        %4915 = vmatpush2.msra.mxu0 0.0
        %4916 = vmatprep.subr.mxu0 0.0
        %4917 = vmatpush2.msra.mxu0 0.0
        %4918 = vmatprep.subr.mxu0 0.0
        %4919 = vmatpush2.msra.mxu0 0.0
        %4920 = vmatprep.subr.mxu0 0.0
        %4921 = vmatpush2.msra.mxu0 0.0
        %4922 = vmatprep.subr.mxu0 0.0
        %4923 = vmatpush2.msra.mxu0 0.0
        %4924 = vmatprep.subr.mxu0 0.0
        %4925 = vmatpush2.msra.mxu0 0.0
        %4926 = vmatprep.subr.mxu0 0.0
        %4927 = vmatpush2.msra.mxu0 0.0
        %4928 = vmatprep.subr.mxu0 0.0
        %4929 = vmatpush2.msra.mxu0 0.0
        %4930 = vmatprep.subr.mxu0 0.0
        %4931 = vmatpush2.msra.mxu0 0.0
        %4932 = vmatprep.subr.mxu0 0.0
        %4933 = vmatpush2.msra.mxu0 0.0
        %4934 = vmatprep.subr.mxu0 0.0
        %4935 = vmatpush2.msra.mxu0 0.0
        %4936 = vmatprep.subr.mxu0 0.0
        %4937 = vmatpush2.msra.mxu0 0.0
        %4938 = vmatprep.subr.mxu0 0.0
        %4939 = vmatpush2.msra.mxu0 0.0
        %4940 = vmatprep.subr.mxu0 0.0
        %4941 = vmatpush2.msra.mxu0 0.0
        %4942 = vmatprep.subr.mxu0 0.0
        %4943 = vmatpush2.msra.mxu0 0.0
        %4944 = vmatprep.subr.mxu0 0.0
        %4945 = vmatpush2.msra.mxu0 0.0
        %4946 = vmatprep.mubr.f32.mxu0 0.0
        %4947 = vmatmul.mubr.f32.gmra.mxu0 %v4880
        %v4948 = vpop.f32.mrf.mxu0
        %v4949 = vadd.f32 %v4876, %v4948
        %v4950 = vpop.f32.mrf.mxu0
        %4951 = vdwg.mxu0
        %v4952 = vadd.f32 %v4949, %v4777
        %v4953 = vsel %vm855, %v4952, 0.0
        %4954 = vadd.xlane.f32.xlu0 %v4953
        %v4955 = vpop.xlane.xlu0 %4954
        %v4956 = vmul.f32 %v4955, %v2792
        %v4957 = vsub.f32 %v4952, %v4956
        %v4958 = vmul.f32 %v4957, %v4957
        %v4959 = vsel %vm855, %v4958, 0.0
        %4960 = vadd.xlane.f32.xlu0 %v4959
        %v4961 = vpop.xlane.xlu0 %4960
        %v4962 = vmul.f32 %v4961, %v2792
        %v4963 = vadd.f32 %v4962, 1e-05
        %v4964 = vrsqrt.pop %v4963
        %v4965 = vmul.f32 %v4957, %v4964
        %v4966 = vmul.f32 %v4965, %v2807
        %v4967 = vadd.f32 %v4966, %v2814
        %4968 = vst.msk [vmem:[%s821] sm:$0xff] %vm855, %v4967
        %s4969 = sand.u32 %s614, 1
        %s4970 = scalar_lea.sflag [#allocation3], %s4969
        %s4971 = sand.u32 %s614, 1
        %s4972 = smul.addr %s4971, 8
        %s4973 = scalar_lea.vmem [#allocation2], %s4972
        // Predicated region
        $region125: #{tpu_custom_call.1} parent=123 // pred_check
          %p4974 = pneg %p624
        $region126: #{tpu_custom_call.1} parent=123 // pred_check_branch
          %4976 = sbr.rel (%p4974) target = $region128
        $region127: #{tpu_custom_call.1} parent=123 // pred_region
          %s4978 = ssub.s32 128, 128
          %4979 = vsyncadd %s4970, %s4978
          %s4980 = smul.addr %s40, 128
          %s4981 = scalar_lea.hbm %s26, %s4980
          %s4983 = sshll.u32 %s4973, 4
          %s4984 = int_to_ptr.vmem [resolvable:$true] %s4983
          %4986 = dma.vmem_to_hbm [thread:$0]  %s4984, 128, %s4981, %s4970
        $region128: #{tpu_custom_call.1} parent=123 // pred_fallthru
          _
      $region124: #{tpu_custom_call.1} parent=5 // pred_fallthru
        _
      %p4987 = scmp.le.s32.totalorder 2, %s35
      // Predicated region
      $region129: #{tpu_custom_call.1} parent=5 // pred_check
        %p4988 = pneg %p4987
      $region130: #{tpu_custom_call.1} parent=5 // pred_check_branch
        %4990 = sbr.rel (%p4988) target = $region132
      $region131: #{tpu_custom_call.1} parent=5 // pred_region
        %s4991 = ssub.s32 %s35, 2
        // Predicated region
        $region133: #{tpu_custom_call.1} parent=131 // pred_check
          %p4992 = pneg %p630
        $region134: #{tpu_custom_call.1} parent=131 // pred_check_branch
          %4994 = sbr.rel (%p4992) target = $region136
        $region135: #{tpu_custom_call.1} parent=131 // pred_region
          %s4995 = sand.u32 %s615, 1
          %s4996 = scalar_lea.sflag [#allocation3], %s4995
          %s4997 = sand.u32 %s615, 1
          %s4998 = smul.addr %s4997, 8
          %s4999 = scalar_lea.vmem [#allocation2], %s4998
          %5000 = dma.done %s4996, 128
        $region136: #{tpu_custom_call.1} parent=131 // pred_fallthru
          _
      $region132: #{tpu_custom_call.1} parent=5 // pred_fallthru
        _
    $region6: #{tpu_custom_call.1} parent=1 // loop_footer
      %s39 = sadd.s32 1, %s35
    $region7: #{tpu_custom_call.1} parent=1 // loop_footer_branch
      %34 = sbr.rel target = $region3
    $region8: #{tpu_custom_call.1} parent=1 // loop_exit
      _
    %5001 = vsyncpa [#allocation3], 1
    %s5002 = scalar_lea.sflag [#allocation3], 1
    %5003 = vsyncpa %s5002, 1

</llo_original>
